<compile_context>
chip_gen: v6e
topology: v6e:2x2x1
jax: 0.10.0
libtpu: 0.0.40
codegen_flags: <defaults>
</compile_context>

<pallas_src>
import functools

import jax
import jax.numpy as jnp
from jax.experimental import pallas as pl
from jax.experimental.pallas import tpu as pltpu

LEAKY_SLOPE = 0.2
BN_EPS = 1e-5
LANE = 128


def _round_up(n, m):
    return ((n + m - 1) // m) * m


# ----------------------------------------------------------------------------
# Fused conv kernel: stride-1 valid conv over a pre-padded NHWC image
# (one batch element per grid step) + per-channel affine + optional LeakyReLU.
# ----------------------------------------------------------------------------
def _conv_row_kernel(x_ref, w_ref, scale_ref, shift_ref, o_ref, *,
                     k, oh, ow, apply_act):
    # x_ref:     (1, Hp, Wp, Cin_p)   bf16, Cin_p % 128 == 0
    # w_ref:     (k*k*Cin_p, Cout_p)  bf16, taps flattened in (ky, kx, ci) order
    # scale_ref: (1, Cout_p)          f32
    # shift_ref: (1, Cout_p)          f32
    # o_ref:     (1, oh, ow, Cout_p)
    cin = x_ref.shape[-1]

    def row_body(oy, carry):
        # im2col for one output row: (ow, k*k*Cin_p), lane-dense pieces of 128.
        cols = []
        for ky in range(k):
            row = x_ref[0, oy + ky, :, :]          # (Wp, Cin_p)
            for kx in range(k):
                cols.append(jax.lax.slice(row, (kx, 0), (kx + ow, cin)))
        patch = jnp.concatenate(cols, axis=-1)     # (ow, k*k*Cin_p) bf16
        acc = jnp.dot(patch, w_ref[...],
                      preferred_element_type=jnp.float32)   # (ow, Cout_p) f32
        y = acc * scale_ref[...] + shift_ref[...]  # bias / folded BN, f32
        if apply_act:
            y = jnp.where(y >= 0.0, y, LEAKY_SLOPE * y)
        o_ref[0, oy, :, :] = y.astype(o_ref.dtype)
        return carry

    jax.lax.fori_loop(0, oh, row_body, 0)


def conv2d_fused(x_nhwc, w_hwio, scale, shift, *, stride, apply_act, out_dtype):
    """Conv2d(padding=1) + per-channel affine + optional LeakyReLU via Pallas.

    x_nhwc: (B, H, W, Cin_p) bf16, channels already padded to a 128 multiple
    w_hwio: (k, k, Cin_p, Cout_p) bf16 (padded)
    scale, shift: (Cout_p,) f32
    """
    B, H, W, Cin = x_nhwc.shape
    k = w_hwio.shape[0]
    Cout = w_hwio.shape[-1]

    xp = jnp.pad(x_nhwc, ((0, 0), (1, 1), (1, 1), (0, 0)))   # spatial pad = 1
    Hp, Wp = H + 2, W + 2
    oh, ow = Hp - k + 1, Wp - k + 1                           # stride-1 output

    w_flat = w_hwio.reshape(k * k * Cin, Cout)
    scale2 = scale.reshape(1, Cout).astype(jnp.float32)
    shift2 = shift.reshape(1, Cout).astype(jnp.float32)

    out = pl.pallas_call(
        functools.partial(_conv_row_kernel, k=k, oh=oh, ow=ow,
                          apply_act=apply_act),
        out_shape=jax.ShapeDtypeStruct((B, oh, ow, Cout), out_dtype),
        grid=(B,),
        in_specs=[
            pl.BlockSpec((1, Hp, Wp, Cin), lambda b: (b, 0, 0, 0)),
            # weight / affine panels: batch-independent index_map -> resident
            pl.BlockSpec((k * k * Cin, Cout), lambda b: (0, 0)),
            pl.BlockSpec((1, Cout), lambda b: (0, 0)),
            pl.BlockSpec((1, Cout), lambda b: (0, 0)),
        ],
        out_specs=pl.BlockSpec((1, oh, ow, Cout), lambda b: (b, 0, 0, 0)),
        compiler_params=pltpu.CompilerParams(
            dimension_semantics=("parallel",),
            vmem_limit_bytes=32 * 1024 * 1024,
        ),
    )(xp, w_flat, scale2, shift2)

    if stride > 1:
        out = out[:, ::stride, ::stride, :]
    return out


# ----------------------------------------------------------------------------
# Module config / parameters (mirrors the PyTorch NLayerDiscriminator)
# ----------------------------------------------------------------------------
def _config(output):
    if output == 128:
        return dict(k=4, strides=(2, 2, 2, 2), chans=(1, 64, 128, 256, 1),
                    has_bn=(False, True, True, False),
                    has_act=(True, True, True, False))
    if output == 64:
        return dict(k=4, strides=(1, 1, 2), chans=(1, 64, 128, 1),
                    has_bn=(False, True, False), has_act=(True, True, False))
    if output == 32:
        return dict(k=3, strides=(1, 2, 1), chans=(1, 64, 128, 1),
                    has_bn=(False, True, False), has_act=(True, True, False))
    raise ValueError(output)


def init_params(key, output=64):
    """Raw f32 HWIO parameters, PyTorch-default-style init."""
    cfg = _config(output)
    k = cfg["k"]
    layers = []
    for i, stride in enumerate(cfg["strides"]):
        cin, cout = cfg["chans"][i], cfg["chans"][i + 1]
        key, kw, kb, kg, kbe, km, kv = jax.random.split(key, 7)
        bound = 1.0 / float(cin * k * k) ** 0.5
        w = jax.random.uniform(kw, (k, k, cin, cout), jnp.float32, -bound, bound)
        b = jax.random.uniform(kb, (cout,), jnp.float32, -bound, bound)
        bn = None
        if cfg["has_bn"][i]:
            bn = dict(
                gamma=jax.random.uniform(kg, (cout,), jnp.float32, 0.5, 1.5),
                beta=0.1 * jax.random.normal(kbe, (cout,), jnp.float32),
                mean=0.1 * jax.random.normal(km, (cout,), jnp.float32),
                var=jax.random.uniform(kv, (cout,), jnp.float32, 0.5, 1.5),
            )
        layers.append(dict(w=w, b=b, bn=bn, stride=stride,
                           act=cfg["has_act"][i]))
    return layers


def prepare_kernel_layers(raw_layers):
    """Fold bias/BN into per-channel affine, pad channels to 128, cast bf16."""
    prepared = []
    for layer in raw_layers:
        w, b, bn = layer["w"], layer["b"], layer["bn"]
        k, _, cin, cout = w.shape
        if bn is not None:
            s = bn["gamma"] / jnp.sqrt(bn["var"] + BN_EPS)
            scale = s
            shift = bn["beta"] + s * (b - bn["mean"])
        else:
            scale = jnp.ones((cout,), jnp.float32)
            shift = b.astype(jnp.float32)
        cin_p, cout_p = _round_up(cin, LANE), _round_up(cout, LANE)
        w_p = jnp.pad(w, ((0, 0), (0, 0), (0, cin_p - cin), (0, cout_p - cout)))
        scale_p = jnp.pad(scale, (0, cout_p - cout), constant_values=1.0)
        shift_p = jnp.pad(shift, (0, cout_p - cout))
        prepared.append(dict(w=w_p.astype(jnp.bfloat16),
                             scale=scale_p.astype(jnp.float32),
                             shift=shift_p.astype(jnp.float32),
                             stride=layer["stride"], act=layer["act"]))
    return prepared


def nlayer_discriminator_forward(x_nchw, prepared):
    """x_nchw: (B, 1, H, W) f32 -> (B, 1, OH, OW) f32."""
    x = jnp.transpose(x_nchw, (0, 2, 3, 1)).astype(jnp.bfloat16)   # NHWC
    cin_p0 = prepared[0]["w"].shape[2]
    x = jnp.pad(x, ((0, 0), (0, 0), (0, 0), (0, cin_p0 - x.shape[-1])))
    n = len(prepared)
    for i, layer in enumerate(prepared):
        out_dtype = jnp.float32 if i == n - 1 else jnp.bfloat16
        x = conv2d_fused(x, layer["w"], layer["scale"], layer["shift"],
                         stride=layer["stride"], apply_act=layer["act"],
                         out_dtype=out_dtype)
    x = x[..., :1]                                   # real final Cout = 1
    return jnp.transpose(x, (0, 3, 1, 2))            # back to NCHW


# ----------------------------------------------------------------------------
# Pure-JAX reference (same dtype pipeline: bf16 MXU inputs, f32 accum/epilogue)
# ----------------------------------------------------------------------------
def reference_forward(x_nchw, raw_layers):
    x = jnp.transpose(x_nchw, (0, 2, 3, 1)).astype(jnp.bfloat16)
    n = len(raw_layers)
    for i, layer in enumerate(raw_layers):
        w, b, bn = layer["w"], layer["b"], layer["bn"]
        y = jax.lax.conv_general_dilated(
            x, w.astype(jnp.bfloat16),
            window_strides=(layer["stride"], layer["stride"]),
            padding=[(1, 1), (1, 1)],
            dimension_numbers=("NHWC", "HWIO", "NHWC"),
            preferred_element_type=jnp.float32)
        if bn is not None:
            s = bn["gamma"] / jnp.sqrt(bn["var"] + BN_EPS)
            y = y * s + (bn["beta"] + s * (b - bn["mean"]))
        else:
            y = y + b
        if layer["act"]:
            y = jnp.where(y >= 0.0, y, LEAKY_SLOPE * y)
        x = y.astype(jnp.float32 if i == n - 1 else jnp.bfloat16)
    return jnp.transpose(x, (0, 3, 1, 2))


if __name__ == "__main__":
    key = jax.random.PRNGKey(0)
    k_x, k_p = jax.random.split(key)

    output = 64                       # NLayerDiscriminator(output=64)
    B, H, W = 2, 16, 16               # small test shapes (fully-convolutional)
    x = jax.random.normal(k_x, (B, 1, H, W), jnp.float32)

    raw = init_params(k_p, output=output)
    prepared = prepare_kernel_layers(raw)

    fwd = jax.jit(lambda xx: nlayer_discriminator_forward(xx, prepared))
    out = fwd(x)
    jax.block_until_ready(out)

    ref = reference_forward(x, raw)
    assert out.shape == (B, 1, 7, 7), out.shape
    assert jnp.allclose(out, ref, atol=2e-2, rtol=2e-2), \
        float(jnp.max(jnp.abs(out - ref)))

    print("KERNEL_OK")
</pallas_src>

<mosaic_0001>
module attributes {stable_mosaic.version = 11 : i64} {
  func.func @_conv_row_kernel(%arg0: i32, %arg1: memref<1x18x18x128xbf16, #tpu.memory_space<vmem>>, %arg2: memref<2048x128xbf16, #tpu.memory_space<vmem>>, %arg3: memref<1x128xf32, #tpu.memory_space<vmem>>, %arg4: memref<1x128xf32, #tpu.memory_space<vmem>>, %arg5: memref<1x15x15x128xbf16, #tpu.memory_space<vmem>>) attributes {dimension_semantics = [#tpu.dimension_semantics<parallel>], iteration_bounds = array<i64: 2>, scalar_prefetch = 0 : i64, scratch_operands = 0 : i64, tpu.core_type = #tpu.core_type<tc>, window_params = [{transform_indices = @transform_0, window_bounds = array<i64: 1, 18, 18, 128>}, {pipeline_mode = #tpu.pipeline_mode<synchronous>, transform_indices = @transform_1, window_bounds = array<i64: 2048, 128>}, {pipeline_mode = #tpu.pipeline_mode<synchronous>, transform_indices = @transform_2, window_bounds = array<i64: 1, 128>}, {pipeline_mode = #tpu.pipeline_mode<synchronous>, transform_indices = @transform_3, window_bounds = array<i64: 1, 128>}, {transform_indices = @transform_4, window_bounds = array<i64: 1, 15, 15, 128>}]} {
    %c0_i32 = arith.constant 0 : i32
    %c15_i32 = arith.constant 15 : i32
    %0 = arith.addi %c0_i32, %c15_i32 : i32
    %c1_i32 = arith.constant 1 : i32
    scf.for %arg6 = %c0_i32 to %0 step %c1_i32  : i32 {
      %c0_i32_1 = arith.constant 0 : i32
      %1 = arith.addi %arg6, %c0_i32_1 : i32
      %c0 = arith.constant 0 : index
      %2 = arith.index_cast %1 : i32 to index
      %c0_2 = arith.constant 0 : index
      %c0_3 = arith.constant 0 : index
      %3 = vector.load %arg1[%c0, %2, %c0_2, %c0_3] : memref<1x18x18x128xbf16, #tpu.memory_space<vmem>>, vector<1x1x18x128xbf16>
      %4 = vector.shape_cast %3 : vector<1x1x18x128xbf16> to vector<18x128xbf16>
      %5 = vector.extract_strided_slice %4 {offsets = [0, 0], sizes = [15, 128], strides = [1, 1]} : vector<18x128xbf16> to vector<15x128xbf16>
      %6 = vector.extract_strided_slice %4 {offsets = [1, 0], sizes = [15, 128], strides = [1, 1]} : vector<18x128xbf16> to vector<15x128xbf16>
      %7 = vector.extract_strided_slice %4 {offsets = [2, 0], sizes = [15, 128], strides = [1, 1]} : vector<18x128xbf16> to vector<15x128xbf16>
      %8 = vector.extract_strided_slice %4 {offsets = [3, 0], sizes = [15, 128], strides = [1, 1]} : vector<18x128xbf16> to vector<15x128xbf16>
      %c1_i32_4 = arith.constant 1 : i32
      %9 = arith.addi %arg6, %c1_i32_4 : i32
      %c0_5 = arith.constant 0 : index
      %10 = arith.index_cast %9 : i32 to index
      %c0_6 = arith.constant 0 : index
      %c0_7 = arith.constant 0 : index
      %11 = vector.load %arg1[%c0_5, %10, %c0_6, %c0_7] : memref<1x18x18x128xbf16, #tpu.memory_space<vmem>>, vector<1x1x18x128xbf16>
      %12 = vector.shape_cast %11 : vector<1x1x18x128xbf16> to vector<18x128xbf16>
      %13 = vector.extract_strided_slice %12 {offsets = [0, 0], sizes = [15, 128], strides = [1, 1]} : vector<18x128xbf16> to vector<15x128xbf16>
      %14 = vector.extract_strided_slice %12 {offsets = [1, 0], sizes = [15, 128], strides = [1, 1]} : vector<18x128xbf16> to vector<15x128xbf16>
      %15 = vector.extract_strided_slice %12 {offsets = [2, 0], sizes = [15, 128], strides = [1, 1]} : vector<18x128xbf16> to vector<15x128xbf16>
      %16 = vector.extract_strided_slice %12 {offsets = [3, 0], sizes = [15, 128], strides = [1, 1]} : vector<18x128xbf16> to vector<15x128xbf16>
      %c2_i32 = arith.constant 2 : i32
      %17 = arith.addi %arg6, %c2_i32 : i32
      %c0_8 = arith.constant 0 : index
      %18 = arith.index_cast %17 : i32 to index
      %c0_9 = arith.constant 0 : index
      %c0_10 = arith.constant 0 : index
      %19 = vector.load %arg1[%c0_8, %18, %c0_9, %c0_10] : memref<1x18x18x128xbf16, #tpu.memory_space<vmem>>, vector<1x1x18x128xbf16>
      %20 = vector.shape_cast %19 : vector<1x1x18x128xbf16> to vector<18x128xbf16>
      %21 = vector.extract_strided_slice %20 {offsets = [0, 0], sizes = [15, 128], strides = [1, 1]} : vector<18x128xbf16> to vector<15x128xbf16>
      %22 = vector.extract_strided_slice %20 {offsets = [1, 0], sizes = [15, 128], strides = [1, 1]} : vector<18x128xbf16> to vector<15x128xbf16>
      %23 = vector.extract_strided_slice %20 {offsets = [2, 0], sizes = [15, 128], strides = [1, 1]} : vector<18x128xbf16> to vector<15x128xbf16>
      %24 = vector.extract_strided_slice %20 {offsets = [3, 0], sizes = [15, 128], strides = [1, 1]} : vector<18x128xbf16> to vector<15x128xbf16>
      %c3_i32 = arith.constant 3 : i32
      %25 = arith.addi %arg6, %c3_i32 : i32
      %c0_11 = arith.constant 0 : index
      %26 = arith.index_cast %25 : i32 to index
      %c0_12 = arith.constant 0 : index
      %c0_13 = arith.constant 0 : index
      %27 = vector.load %arg1[%c0_11, %26, %c0_12, %c0_13] : memref<1x18x18x128xbf16, #tpu.memory_space<vmem>>, vector<1x1x18x128xbf16>
      %28 = vector.shape_cast %27 : vector<1x1x18x128xbf16> to vector<18x128xbf16>
      %29 = vector.extract_strided_slice %28 {offsets = [0, 0], sizes = [15, 128], strides = [1, 1]} : vector<18x128xbf16> to vector<15x128xbf16>
      %30 = vector.extract_strided_slice %28 {offsets = [1, 0], sizes = [15, 128], strides = [1, 1]} : vector<18x128xbf16> to vector<15x128xbf16>
      %31 = vector.extract_strided_slice %28 {offsets = [2, 0], sizes = [15, 128], strides = [1, 1]} : vector<18x128xbf16> to vector<15x128xbf16>
      %32 = vector.extract_strided_slice %28 {offsets = [3, 0], sizes = [15, 128], strides = [1, 1]} : vector<18x128xbf16> to vector<15x128xbf16>
      %33 = tpu.concatenate %5, %6, %7, %8, %13, %14, %15, %16, %21, %22, %23, %24, %29, %30, %31, %32 in 1 : vector<15x128xbf16>, vector<15x128xbf16>, vector<15x128xbf16>, vector<15x128xbf16>, vector<15x128xbf16>, vector<15x128xbf16>, vector<15x128xbf16>, vector<15x128xbf16>, vector<15x128xbf16>, vector<15x128xbf16>, vector<15x128xbf16>, vector<15x128xbf16>, vector<15x128xbf16>, vector<15x128xbf16>, vector<15x128xbf16>, vector<15x128xbf16> -> vector<15x2048xbf16>
      %c0_14 = arith.constant 0 : index
      %c0_15 = arith.constant 0 : index
      %34 = vector.load %arg2[%c0_14, %c0_15] : memref<2048x128xbf16, #tpu.memory_space<vmem>>, vector<2048x128xbf16>
      %cst = arith.constant dense<0.000000e+00> : vector<15x128xf32>
      %35 = tpu.matmul %33, %34, %cst {dimension_numbers = #tpu.dot_dimension_numbers<[1], [0], [0], [1], [0, 0, 1, 1], [], []>} : vector<15x2048xbf16>, vector<2048x128xbf16>, vector<15x128xf32> -> vector<15x128xf32>
      %c0_16 = arith.constant 0 : index
      %c0_17 = arith.constant 0 : index
      %36 = vector.load %arg3[%c0_16, %c0_17] : memref<1x128xf32, #tpu.memory_space<vmem>>, vector<1x128xf32>
      %37 = vector.broadcast %36 : vector<1x128xf32> to vector<15x128xf32>
      %38 = arith.mulf %35, %37 : vector<15x128xf32>
      %c0_18 = arith.constant 0 : index
      %c0_19 = arith.constant 0 : index
      %39 = vector.load %arg4[%c0_18, %c0_19] : memref<1x128xf32, #tpu.memory_space<vmem>>, vector<1x128xf32>
      %40 = vector.broadcast %39 : vector<1x128xf32> to vector<15x128xf32>
      %41 = arith.addf %38, %40 : vector<15x128xf32>
      %cst_20 = arith.constant 0.000000e+00 : f32
      %42 = vector.broadcast %cst_20 : f32 to vector<15x128xf32>
      %43 = arith.cmpf oge, %41, %42 : vector<15x128xf32>
      %cst_21 = arith.constant 2.000000e-01 : f32
      %44 = vector.broadcast %cst_21 : f32 to vector<15x128xf32>
      %45 = arith.mulf %44, %41 : vector<15x128xf32>
      %46 = arith.select %43, %41, %45 : vector<15x128xi1>, vector<15x128xf32>
      %47 = arith.truncf %46 : vector<15x128xf32> to vector<15x128xbf16>
      %c0_22 = arith.constant 0 : index
      %48 = arith.index_cast %arg6 : i32 to index
      %c0_23 = arith.constant 0 : index
      %c0_24 = arith.constant 0 : index
      %49 = vector.load %arg5[%c0_22, %48, %c0_23, %c0_24] : memref<1x15x15x128xbf16, #tpu.memory_space<vmem>>, vector<1x1x15x128xbf16>
      %50 = vector.shape_cast %49 : vector<1x1x15x128xbf16> to vector<15x128xbf16>
      %51 = vector.shape_cast %47 : vector<15x128xbf16> to vector<1x1x15x128xbf16>
      tpu.vector_store %arg5[%c0_22, %48, %c0_23, %c0_24], %51 {strides = array<i32>} : memref<1x15x15x128xbf16, #tpu.memory_space<vmem>>, vector<1x1x15x128xbf16>,
    }
    %c15_i32_0 = arith.constant 15 : i32
    return
  }
  func.func @transform_0(%arg0: i32) -> (i32, i32, i32, i32) {
    %c0_i32 = arith.constant 0 : i32
    %c0_i32_0 = arith.constant 0 : i32
    %c0_i32_1 = arith.constant 0 : i32
    %c0_i32_2 = arith.constant 0 : i32
    return %arg0, %c0_i32, %c0_i32_0, %c0_i32_1 : i32, i32, i32, i32
  }
  func.func @transform_1(%arg0: i32) -> (i32, i32) {
    %c0_i32 = arith.constant 0 : i32
    %c0_i32_0 = arith.constant 0 : i32
    %c0_i32_1 = arith.constant 0 : i32
    return %c0_i32, %c0_i32_0 : i32, i32
  }
  func.func @transform_2(%arg0: i32) -> (i32, i32) {
    %c0_i32 = arith.constant 0 : i32
    %c0_i32_0 = arith.constant 0 : i32
    %c0_i32_1 = arith.constant 0 : i32
    return %c0_i32, %c0_i32_0 : i32, i32
  }
  func.func @transform_3(%arg0: i32) -> (i32, i32) {
    %c0_i32 = arith.constant 0 : i32
    %c0_i32_0 = arith.constant 0 : i32
    %c0_i32_1 = arith.constant 0 : i32
    return %c0_i32, %c0_i32_0 : i32, i32
  }
  func.func @transform_4(%arg0: i32) -> (i32, i32, i32, i32) {
    %c0_i32 = arith.constant 0 : i32
    %c0_i32_0 = arith.constant 0 : i32
    %c0_i32_1 = arith.constant 0 : i32
    %c0_i32_2 = arith.constant 0 : i32
    return %arg0, %c0_i32, %c0_i32_0, %c0_i32_1 : i32, i32, i32, i32
  }
}

module attributes {stable_mosaic.version = 11 : i64} {
  func.func @_conv_row_kernel(%arg0: i32, %arg1: memref<1x17x17x128xbf16, #tpu.memory_space<vmem>>, %arg2: memref<2048x128xbf16, #tpu.memory_space<vmem>>, %arg3: memref<1x128xf32, #tpu.memory_space<vmem>>, %arg4: memref<1x128xf32, #tpu.memory_space<vmem>>, %arg5: memref<1x14x14x128xbf16, #tpu.memory_space<vmem>>) attributes {dimension_semantics = [#tpu.dimension_semantics<parallel>], iteration_bounds = array<i64: 2>, scalar_prefetch = 0 : i64, scratch_operands = 0 : i64, tpu.core_type = #tpu.core_type<tc>, window_params = [{transform_indices = @transform_0, window_bounds = array<i64: 1, 17, 17, 128>}, {pipeline_mode = #tpu.pipeline_mode<synchronous>, transform_indices = @transform_1, window_bounds = array<i64: 2048, 128>}, {pipeline_mode = #tpu.pipeline_mode<synchronous>, transform_indices = @transform_2, window_bounds = array<i64: 1, 128>}, {pipeline_mode = #tpu.pipeline_mode<synchronous>, transform_indices = @transform_3, window_bounds = array<i64: 1, 128>}, {transform_indices = @transform_4, window_bounds = array<i64: 1, 14, 14, 128>}]} {
    %c0_i32 = arith.constant 0 : i32
    %c14_i32 = arith.constant 14 : i32
    %0 = arith.addi %c0_i32, %c14_i32 : i32
    %c1_i32 = arith.constant 1 : i32
    scf.for %arg6 = %c0_i32 to %0 step %c1_i32  : i32 {
      %c0_i32_1 = arith.constant 0 : i32
      %1 = arith.addi %arg6, %c0_i32_1 : i32
      %c0 = arith.constant 0 : index
      %2 = arith.index_cast %1 : i32 to index
      %c0_2 = arith.constant 0 : index
      %c0_3 = arith.constant 0 : index
      %3 = vector.load %arg1[%c0, %2, %c0_2, %c0_3] : memref<1x17x17x128xbf16, #tpu.memory_space<vmem>>, vector<1x1x17x128xbf16>
      %4 = vector.shape_cast %3 : vector<1x1x17x128xbf16> to vector<17x128xbf16>
      %5 = vector.extract_strided_slice %4 {offsets = [0, 0], sizes = [14, 128], strides = [1, 1]} : vector<17x128xbf16> to vector<14x128xbf16>
      %6 = vector.extract_strided_slice %4 {offsets = [1, 0], sizes = [14, 128], strides = [1, 1]} : vector<17x128xbf16> to vector<14x128xbf16>
      %7 = vector.extract_strided_slice %4 {offsets = [2, 0], sizes = [14, 128], strides = [1, 1]} : vector<17x128xbf16> to vector<14x128xbf16>
      %8 = vector.extract_strided_slice %4 {offsets = [3, 0], sizes = [14, 128], strides = [1, 1]} : vector<17x128xbf16> to vector<14x128xbf16>
      %c1_i32_4 = arith.constant 1 : i32
      %9 = arith.addi %arg6, %c1_i32_4 : i32
      %c0_5 = arith.constant 0 : index
      %10 = arith.index_cast %9 : i32 to index
      %c0_6 = arith.constant 0 : index
      %c0_7 = arith.constant 0 : index
      %11 = vector.load %arg1[%c0_5, %10, %c0_6, %c0_7] : memref<1x17x17x128xbf16, #tpu.memory_space<vmem>>, vector<1x1x17x128xbf16>
      %12 = vector.shape_cast %11 : vector<1x1x17x128xbf16> to vector<17x128xbf16>
      %13 = vector.extract_strided_slice %12 {offsets = [0, 0], sizes = [14, 128], strides = [1, 1]} : vector<17x128xbf16> to vector<14x128xbf16>
      %14 = vector.extract_strided_slice %12 {offsets = [1, 0], sizes = [14, 128], strides = [1, 1]} : vector<17x128xbf16> to vector<14x128xbf16>
      %15 = vector.extract_strided_slice %12 {offsets = [2, 0], sizes = [14, 128], strides = [1, 1]} : vector<17x128xbf16> to vector<14x128xbf16>
      %16 = vector.extract_strided_slice %12 {offsets = [3, 0], sizes = [14, 128], strides = [1, 1]} : vector<17x128xbf16> to vector<14x128xbf16>
      %c2_i32 = arith.constant 2 : i32
      %17 = arith.addi %arg6, %c2_i32 : i32
      %c0_8 = arith.constant 0 : index
      %18 = arith.index_cast %17 : i32 to index
      %c0_9 = arith.constant 0 : index
      %c0_10 = arith.constant 0 : index
      %19 = vector.load %arg1[%c0_8, %18, %c0_9, %c0_10] : memref<1x17x17x128xbf16, #tpu.memory_space<vmem>>, vector<1x1x17x128xbf16>
      %20 = vector.shape_cast %19 : vector<1x1x17x128xbf16> to vector<17x128xbf16>
      %21 = vector.extract_strided_slice %20 {offsets = [0, 0], sizes = [14, 128], strides = [1, 1]} : vector<17x128xbf16> to vector<14x128xbf16>
      %22 = vector.extract_strided_slice %20 {offsets = [1, 0], sizes = [14, 128], strides = [1, 1]} : vector<17x128xbf16> to vector<14x128xbf16>
      %23 = vector.extract_strided_slice %20 {offsets = [2, 0], sizes = [14, 128], strides = [1, 1]} : vector<17x128xbf16> to vector<14x128xbf16>
      %24 = vector.extract_strided_slice %20 {offsets = [3, 0], sizes = [14, 128], strides = [1, 1]} : vector<17x128xbf16> to vector<14x128xbf16>
      %c3_i32 = arith.constant 3 : i32
      %25 = arith.addi %arg6, %c3_i32 : i32
      %c0_11 = arith.constant 0 : index
      %26 = arith.index_cast %25 : i32 to index
      %c0_12 = arith.constant 0 : index
      %c0_13 = arith.constant 0 : index
      %27 = vector.load %arg1[%c0_11, %26, %c0_12, %c0_13] : memref<1x17x17x128xbf16, #tpu.memory_space<vmem>>, vector<1x1x17x128xbf16>
      %28 = vector.shape_cast %27 : vector<1x1x17x128xbf16> to vector<17x128xbf16>
      %29 = vector.extract_strided_slice %28 {offsets = [0, 0], sizes = [14, 128], strides = [1, 1]} : vector<17x128xbf16> to vector<14x128xbf16>
      %30 = vector.extract_strided_slice %28 {offsets = [1, 0], sizes = [14, 128], strides = [1, 1]} : vector<17x128xbf16> to vector<14x128xbf16>
      %31 = vector.extract_strided_slice %28 {offsets = [2, 0], sizes = [14, 128], strides = [1, 1]} : vector<17x128xbf16> to vector<14x128xbf16>
      %32 = vector.extract_strided_slice %28 {offsets = [3, 0], sizes = [14, 128], strides = [1, 1]} : vector<17x128xbf16> to vector<14x128xbf16>
      %33 = tpu.concatenate %5, %6, %7, %8, %13, %14, %15, %16, %21, %22, %23, %24, %29, %30, %31, %32 in 1 : vector<14x128xbf16>, vector<14x128xbf16>, vector<14x128xbf16>, vector<14x128xbf16>, vector<14x128xbf16>, vector<14x128xbf16>, vector<14x128xbf16>, vector<14x128xbf16>, vector<14x128xbf16>, vector<14x128xbf16>, vector<14x128xbf16>, vector<14x128xbf16>, vector<14x128xbf16>, vector<14x128xbf16>, vector<14x128xbf16>, vector<14x128xbf16> -> vector<14x2048xbf16>
      %c0_14 = arith.constant 0 : index
      %c0_15 = arith.constant 0 : index
      %34 = vector.load %arg2[%c0_14, %c0_15] : memref<2048x128xbf16, #tpu.memory_space<vmem>>, vector<2048x128xbf16>
      %cst = arith.constant dense<0.000000e+00> : vector<14x128xf32>
      %35 = tpu.matmul %33, %34, %cst {dimension_numbers = #tpu.dot_dimension_numbers<[1], [0], [0], [1], [0, 0, 1, 1], [], []>} : vector<14x2048xbf16>, vector<2048x128xbf16>, vector<14x128xf32> -> vector<14x128xf32>
      %c0_16 = arith.constant 0 : index
      %c0_17 = arith.constant 0 : index
      %36 = vector.load %arg3[%c0_16, %c0_17] : memref<1x128xf32, #tpu.memory_space<vmem>>, vector<1x128xf32>
      %37 = vector.broadcast %36 : vector<1x128xf32> to vector<14x128xf32>
      %38 = arith.mulf %35, %37 : vector<14x128xf32>
      %c0_18 = arith.constant 0 : index
      %c0_19 = arith.constant 0 : index
      %39 = vector.load %arg4[%c0_18, %c0_19] : memref<1x128xf32, #tpu.memory_space<vmem>>, vector<1x128xf32>
      %40 = vector.broadcast %39 : vector<1x128xf32> to vector<14x128xf32>
      %41 = arith.addf %38, %40 : vector<14x128xf32>
      %cst_20 = arith.constant 0.000000e+00 : f32
      %42 = vector.broadcast %cst_20 : f32 to vector<14x128xf32>
      %43 = arith.cmpf oge, %41, %42 : vector<14x128xf32>
      %cst_21 = arith.constant 2.000000e-01 : f32
      %44 = vector.broadcast %cst_21 : f32 to vector<14x128xf32>
      %45 = arith.mulf %44, %41 : vector<14x128xf32>
      %46 = arith.select %43, %41, %45 : vector<14x128xi1>, vector<14x128xf32>
      %47 = arith.truncf %46 : vector<14x128xf32> to vector<14x128xbf16>
      %c0_22 = arith.constant 0 : index
      %48 = arith.index_cast %arg6 : i32 to index
      %c0_23 = arith.constant 0 : index
      %c0_24 = arith.constant 0 : index
      %49 = vector.load %arg5[%c0_22, %48, %c0_23, %c0_24] : memref<1x14x14x128xbf16, #tpu.memory_space<vmem>>, vector<1x1x14x128xbf16>
      %50 = vector.shape_cast %49 : vector<1x1x14x128xbf16> to vector<14x128xbf16>
      %51 = vector.shape_cast %47 : vector<14x128xbf16> to vector<1x1x14x128xbf16>
      tpu.vector_store %arg5[%c0_22, %48, %c0_23, %c0_24], %51 {strides = array<i32>} : memref<1x14x14x128xbf16, #tpu.memory_space<vmem>>, vector<1x1x14x128xbf16>,
    }
    %c14_i32_0 = arith.constant 14 : i32
    return
  }
  func.func @transform_0(%arg0: i32) -> (i32, i32, i32, i32) {
    %c0_i32 = arith.constant 0 : i32
    %c0_i32_0 = arith.constant 0 : i32
    %c0_i32_1 = arith.constant 0 : i32
    %c0_i32_2 = arith.constant 0 : i32
    return %arg0, %c0_i32, %c0_i32_0, %c0_i32_1 : i32, i32, i32, i32
  }
  func.func @transform_1(%arg0: i32) -> (i32, i32) {
    %c0_i32 = arith.constant 0 : i32
    %c0_i32_0 = arith.constant 0 : i32
    %c0_i32_1 = arith.constant 0 : i32
    return %c0_i32, %c0_i32_0 : i32, i32
  }
  func.func @transform_2(%arg0: i32) -> (i32, i32) {
    %c0_i32 = arith.constant 0 : i32
    %c0_i32_0 = arith.constant 0 : i32
    %c0_i32_1 = arith.constant 0 : i32
    return %c0_i32, %c0_i32_0 : i32, i32
  }
  func.func @transform_3(%arg0: i32) -> (i32, i32) {
    %c0_i32 = arith.constant 0 : i32
    %c0_i32_0 = arith.constant 0 : i32
    %c0_i32_1 = arith.constant 0 : i32
    return %c0_i32, %c0_i32_0 : i32, i32
  }
  func.func @transform_4(%arg0: i32) -> (i32, i32, i32, i32) {
    %c0_i32 = arith.constant 0 : i32
    %c0_i32_0 = arith.constant 0 : i32
    %c0_i32_1 = arith.constant 0 : i32
    %c0_i32_2 = arith.constant 0 : i32
    return %arg0, %c0_i32, %c0_i32_0, %c0_i32_1 : i32, i32, i32, i32
  }
}

module attributes {stable_mosaic.version = 11 : i64} {
  func.func @_conv_row_kernel(%arg0: i32, %arg1: memref<1x16x16x128xbf16, #tpu.memory_space<vmem>>, %arg2: memref<2048x128xbf16, #tpu.memory_space<vmem>>, %arg3: memref<1x128xf32, #tpu.memory_space<vmem>>, %arg4: memref<1x128xf32, #tpu.memory_space<vmem>>, %arg5: memref<1x13x13x128xf32, #tpu.memory_space<vmem>>) attributes {dimension_semantics = [#tpu.dimension_semantics<parallel>], iteration_bounds = array<i64: 2>, scalar_prefetch = 0 : i64, scratch_operands = 0 : i64, tpu.core_type = #tpu.core_type<tc>, window_params = [{transform_indices = @transform_0, window_bounds = array<i64: 1, 16, 16, 128>}, {pipeline_mode = #tpu.pipeline_mode<synchronous>, transform_indices = @transform_1, window_bounds = array<i64: 2048, 128>}, {pipeline_mode = #tpu.pipeline_mode<synchronous>, transform_indices = @transform_2, window_bounds = array<i64: 1, 128>}, {pipeline_mode = #tpu.pipeline_mode<synchronous>, transform_indices = @transform_3, window_bounds = array<i64: 1, 128>}, {transform_indices = @transform_4, window_bounds = array<i64: 1, 13, 13, 128>}]} {
    %c0_i32 = arith.constant 0 : i32
    %c13_i32 = arith.constant 13 : i32
    %0 = arith.addi %c0_i32, %c13_i32 : i32
    %c1_i32 = arith.constant 1 : i32
    scf.for %arg6 = %c0_i32 to %0 step %c1_i32  : i32 {
      %c0_i32_1 = arith.constant 0 : i32
      %1 = arith.addi %arg6, %c0_i32_1 : i32
      %c0 = arith.constant 0 : index
      %2 = arith.index_cast %1 : i32 to index
      %c0_2 = arith.constant 0 : index
      %c0_3 = arith.constant 0 : index
      %3 = vector.load %arg1[%c0, %2, %c0_2, %c0_3] : memref<1x16x16x128xbf16, #tpu.memory_space<vmem>>, vector<1x1x16x128xbf16>
      %4 = vector.shape_cast %3 : vector<1x1x16x128xbf16> to vector<16x128xbf16>
      %5 = vector.extract_strided_slice %4 {offsets = [0, 0], sizes = [13, 128], strides = [1, 1]} : vector<16x128xbf16> to vector<13x128xbf16>
      %6 = vector.extract_strided_slice %4 {offsets = [1, 0], sizes = [13, 128], strides = [1, 1]} : vector<16x128xbf16> to vector<13x128xbf16>
      %7 = vector.extract_strided_slice %4 {offsets = [2, 0], sizes = [13, 128], strides = [1, 1]} : vector<16x128xbf16> to vector<13x128xbf16>
      %8 = vector.extract_strided_slice %4 {offsets = [3, 0], sizes = [13, 128], strides = [1, 1]} : vector<16x128xbf16> to vector<13x128xbf16>
      %c1_i32_4 = arith.constant 1 : i32
      %9 = arith.addi %arg6, %c1_i32_4 : i32
      %c0_5 = arith.constant 0 : index
      %10 = arith.index_cast %9 : i32 to index
      %c0_6 = arith.constant 0 : index
      %c0_7 = arith.constant 0 : index
      %11 = vector.load %arg1[%c0_5, %10, %c0_6, %c0_7] : memref<1x16x16x128xbf16, #tpu.memory_space<vmem>>, vector<1x1x16x128xbf16>
      %12 = vector.shape_cast %11 : vector<1x1x16x128xbf16> to vector<16x128xbf16>
      %13 = vector.extract_strided_slice %12 {offsets = [0, 0], sizes = [13, 128], strides = [1, 1]} : vector<16x128xbf16> to vector<13x128xbf16>
      %14 = vector.extract_strided_slice %12 {offsets = [1, 0], sizes = [13, 128], strides = [1, 1]} : vector<16x128xbf16> to vector<13x128xbf16>
      %15 = vector.extract_strided_slice %12 {offsets = [2, 0], sizes = [13, 128], strides = [1, 1]} : vector<16x128xbf16> to vector<13x128xbf16>
      %16 = vector.extract_strided_slice %12 {offsets = [3, 0], sizes = [13, 128], strides = [1, 1]} : vector<16x128xbf16> to vector<13x128xbf16>
      %c2_i32 = arith.constant 2 : i32
      %17 = arith.addi %arg6, %c2_i32 : i32
      %c0_8 = arith.constant 0 : index
      %18 = arith.index_cast %17 : i32 to index
      %c0_9 = arith.constant 0 : index
      %c0_10 = arith.constant 0 : index
      %19 = vector.load %arg1[%c0_8, %18, %c0_9, %c0_10] : memref<1x16x16x128xbf16, #tpu.memory_space<vmem>>, vector<1x1x16x128xbf16>
      %20 = vector.shape_cast %19 : vector<1x1x16x128xbf16> to vector<16x128xbf16>
      %21 = vector.extract_strided_slice %20 {offsets = [0, 0], sizes = [13, 128], strides = [1, 1]} : vector<16x128xbf16> to vector<13x128xbf16>
      %22 = vector.extract_strided_slice %20 {offsets = [1, 0], sizes = [13, 128], strides = [1, 1]} : vector<16x128xbf16> to vector<13x128xbf16>
      %23 = vector.extract_strided_slice %20 {offsets = [2, 0], sizes = [13, 128], strides = [1, 1]} : vector<16x128xbf16> to vector<13x128xbf16>
      %24 = vector.extract_strided_slice %20 {offsets = [3, 0], sizes = [13, 128], strides = [1, 1]} : vector<16x128xbf16> to vector<13x128xbf16>
      %c3_i32 = arith.constant 3 : i32
      %25 = arith.addi %arg6, %c3_i32 : i32
      %c0_11 = arith.constant 0 : index
      %26 = arith.index_cast %25 : i32 to index
      %c0_12 = arith.constant 0 : index
      %c0_13 = arith.constant 0 : index
      %27 = vector.load %arg1[%c0_11, %26, %c0_12, %c0_13] : memref<1x16x16x128xbf16, #tpu.memory_space<vmem>>, vector<1x1x16x128xbf16>
      %28 = vector.shape_cast %27 : vector<1x1x16x128xbf16> to vector<16x128xbf16>
      %29 = vector.extract_strided_slice %28 {offsets = [0, 0], sizes = [13, 128], strides = [1, 1]} : vector<16x128xbf16> to vector<13x128xbf16>
      %30 = vector.extract_strided_slice %28 {offsets = [1, 0], sizes = [13, 128], strides = [1, 1]} : vector<16x128xbf16> to vector<13x128xbf16>
      %31 = vector.extract_strided_slice %28 {offsets = [2, 0], sizes = [13, 128], strides = [1, 1]} : vector<16x128xbf16> to vector<13x128xbf16>
      %32 = vector.extract_strided_slice %28 {offsets = [3, 0], sizes = [13, 128], strides = [1, 1]} : vector<16x128xbf16> to vector<13x128xbf16>
      %33 = tpu.concatenate %5, %6, %7, %8, %13, %14, %15, %16, %21, %22, %23, %24, %29, %30, %31, %32 in 1 : vector<13x128xbf16>, vector<13x128xbf16>, vector<13x128xbf16>, vector<13x128xbf16>, vector<13x128xbf16>, vector<13x128xbf16>, vector<13x128xbf16>, vector<13x128xbf16>, vector<13x128xbf16>, vector<13x128xbf16>, vector<13x128xbf16>, vector<13x128xbf16>, vector<13x128xbf16>, vector<13x128xbf16>, vector<13x128xbf16>, vector<13x128xbf16> -> vector<13x2048xbf16>
      %c0_14 = arith.constant 0 : index
      %c0_15 = arith.constant 0 : index
      %34 = vector.load %arg2[%c0_14, %c0_15] : memref<2048x128xbf16, #tpu.memory_space<vmem>>, vector<2048x128xbf16>
      %cst = arith.constant dense<0.000000e+00> : vector<13x128xf32>
      %35 = tpu.matmul %33, %34, %cst {dimension_numbers = #tpu.dot_dimension_numbers<[1], [0], [0], [1], [0, 0, 1, 1], [], []>} : vector<13x2048xbf16>, vector<2048x128xbf16>, vector<13x128xf32> -> vector<13x128xf32>
      %c0_16 = arith.constant 0 : index
      %c0_17 = arith.constant 0 : index
      %36 = vector.load %arg3[%c0_16, %c0_17] : memref<1x128xf32, #tpu.memory_space<vmem>>, vector<1x128xf32>
      %37 = vector.broadcast %36 : vector<1x128xf32> to vector<13x128xf32>
      %38 = arith.mulf %35, %37 : vector<13x128xf32>
      %c0_18 = arith.constant 0 : index
      %c0_19 = arith.constant 0 : index
      %39 = vector.load %arg4[%c0_18, %c0_19] : memref<1x128xf32, #tpu.memory_space<vmem>>, vector<1x128xf32>
      %40 = vector.broadcast %39 : vector<1x128xf32> to vector<13x128xf32>
      %41 = arith.addf %38, %40 : vector<13x128xf32>
      %c0_20 = arith.constant 0 : index
      %42 = arith.index_cast %arg6 : i32 to index
      %c0_21 = arith.constant 0 : index
      %c0_22 = arith.constant 0 : index
      %43 = vector.load %arg5[%c0_20, %42, %c0_21, %c0_22] : memref<1x13x13x128xf32, #tpu.memory_space<vmem>>, vector<1x1x13x128xf32>
      %44 = vector.shape_cast %43 : vector<1x1x13x128xf32> to vector<13x128xf32>
      %45 = vector.shape_cast %41 : vector<13x128xf32> to vector<1x1x13x128xf32>
      tpu.vector_store %arg5[%c0_20, %42, %c0_21, %c0_22], %45 {strides = array<i32>} : memref<1x13x13x128xf32, #tpu.memory_space<vmem>>, vector<1x1x13x128xf32>,
    }
    %c13_i32_0 = arith.constant 13 : i32
    return
  }
  func.func @transform_0(%arg0: i32) -> (i32, i32, i32, i32) {
    %c0_i32 = arith.constant 0 : i32
    %c0_i32_0 = arith.constant 0 : i32
    %c0_i32_1 = arith.constant 0 : i32
    %c0_i32_2 = arith.constant 0 : i32
    return %arg0, %c0_i32, %c0_i32_0, %c0_i32_1 : i32, i32, i32, i32
  }
  func.func @transform_1(%arg0: i32) -> (i32, i32) {
    %c0_i32 = arith.constant 0 : i32
    %c0_i32_0 = arith.constant 0 : i32
    %c0_i32_1 = arith.constant 0 : i32
    return %c0_i32, %c0_i32_0 : i32, i32
  }
  func.func @transform_2(%arg0: i32) -> (i32, i32) {
    %c0_i32 = arith.constant 0 : i32
    %c0_i32_0 = arith.constant 0 : i32
    %c0_i32_1 = arith.constant 0 : i32
    return %c0_i32, %c0_i32_0 : i32, i32
  }
  func.func @transform_3(%arg0: i32) -> (i32, i32) {
    %c0_i32 = arith.constant 0 : i32
    %c0_i32_0 = arith.constant 0 : i32
    %c0_i32_1 = arith.constant 0 : i32
    return %c0_i32, %c0_i32_0 : i32, i32
  }
  func.func @transform_4(%arg0: i32) -> (i32, i32, i32, i32) {
    %c0_i32 = arith.constant 0 : i32
    %c0_i32_0 = arith.constant 0 : i32
    %c0_i32_1 = arith.constant 0 : i32
    %c0_i32_2 = arith.constant 0 : i32
    return %arg0, %c0_i32, %c0_i32_0, %c0_i32_1 : i32, i32, i32, i32
  }
}

</mosaic_0001>

<llo_original>
// kernel: _lambda_.4
$region0: #{_lambda_.4}
  #allocation0 [shape = 'u32[]', space=smem, size = 0x4, offset = 0x4, fixed_abs, tag = 'smem constant byte address 0x4 - core index']
  #allocation1 [shape = 'u32[144,128]{1,0:T(1,128)}', space=vmem, size = 0x12000, scoped, tag = 'internal scratch']
  %s0 = inlined_call_operand.vmem [shape: bf16[2,17,17,128], index: 0, kind: input, shape index: {}]
  %s1 = inlined_call_operand.vmem [shape: bf16[2048,128], index: 1, kind: input, shape index: {}]
  %s2 = inlined_call_operand.vmem [shape: f32[1,128], index: 2, kind: input, shape index: {}]
  %s3 = inlined_call_operand.vmem [shape: f32[1,128], index: 3, kind: input, shape index: {}]
  %s4 = inlined_call_operand.vmem [shape: bf16[2,14,14,128], index: 4, kind: output, shape index: {}]
  %s5 = sld [smem:[#allocation0]]
  $region56: #{_lambda_.4} parent=0
    _
  %s7 = ssub.s32 1, %s5
  %s8 = scalar_select 0, %s7, %s5
  loop: start=0, step=1, limit=4
  $region2: #{_lambda_.4} parent=0 // loop_pre_header
    _
  $region3: #{_lambda_.4} parent=0 // loop_header
    %s10 = sphi 0, %s14
    %p11 = scmp.ge.s32.totalorder %s10, 4
    %s20 = sphi 0, %s22
    %s23 = sphi 0, %s20
    %s24 = sphi 0, %s23
    %s40 = sphi 0, %s24
    %s44 = sphi 0, %s44
    %s46 = sphi 0, %s44
    %s47 = sphi 0, %s46
    %s61 = sphi 0, %s47
    %s65 = sphi 0, %s65
    %s67 = sphi 0, %s65
    %s68 = sphi 0, %s67
    %s82 = sphi 0, %s68
    %s86 = sphi 0, %s86
    %s88 = sphi 0, %s86
    %s89 = sphi 0, %s88
    %s103 = sphi 0, %s89
    %s109 = sphi 0, %s111
    %s112 = sphi 0, %s109
    %s113 = sphi 0, %s112
    %s129 = sphi 0, %s113
  $region4: #{_lambda_.4} parent=0 // loop_header_branch
    %13 = sbr.rel (%p11) target = $region8
  $region5: #{_lambda_.4} parent=0 // loop_body
    %s15 = ssub.s32 %s10, 1
    %s16 = ssub.s32 %s10, 2
    %s17 = sadd.s32 %s10, 1
    %s18 = ssub.s32 %s10, %s17
    %p19 = scmp.eq.s32.totalorder %s18, 0
    %s21 = sadd.s32 %s20, 1
    %s22 = scalar_select %p19, %s20, %s21
    %p25 = pneg %p19
    %p26 = scmp.eq.s32.totalorder %s10, 1
    %p27 = por %p25, %p26
    %p28 = scmp.ne.s32.totalorder %s20, %s23
    %p29 = scmp.eq.s32.totalorder %s10, 0
    %p30 = por %p28, %p29
    %p31 = scmp.ne.s32.totalorder %s20, %s23
    %p32 = scmp.eq.s32.totalorder %s15, 1
    %p33 = por %p31, %p32
    %p34 = scmp.ne.s32.totalorder %s23, %s24
    %p35 = scmp.eq.s32.totalorder %s15, 0
    %p36 = por %p34, %p35
    %p37 = scmp.ne.s32.totalorder %s23, %s24
    %p38 = scmp.eq.s32.totalorder %s16, 1
    %p39 = por %p37, %p38
    %p41 = scmp.ne.s32.totalorder %s24, %s40
    %p42 = scmp.eq.s32.totalorder %s16, 0
    %p43 = por %p41, %p42
    %s45 = sadd.s32 %s44, 1
    %p48 = scmp.eq.s32.totalorder %s10, 1
    %p49 = scmp.ne.s32.totalorder %s44, %s46
    %p50 = scmp.eq.s32.totalorder %s10, 0
    %p51 = por %p49, %p50
    %p52 = scmp.ne.s32.totalorder %s44, %s46
    %p53 = scmp.eq.s32.totalorder %s15, 1
    %p54 = por %p52, %p53
    %p55 = scmp.ne.s32.totalorder %s46, %s47
    %p56 = scmp.eq.s32.totalorder %s15, 0
    %p57 = por %p55, %p56
    %p58 = scmp.ne.s32.totalorder %s46, %s47
    %p59 = scmp.eq.s32.totalorder %s16, 1
    %p60 = por %p58, %p59
    %p62 = scmp.ne.s32.totalorder %s47, %s61
    %p63 = scmp.eq.s32.totalorder %s16, 0
    %p64 = por %p62, %p63
    %s66 = sadd.s32 %s65, 1
    %p69 = scmp.eq.s32.totalorder %s10, 1
    %p70 = scmp.ne.s32.totalorder %s65, %s67
    %p71 = scmp.eq.s32.totalorder %s10, 0
    %p72 = por %p70, %p71
    %p73 = scmp.ne.s32.totalorder %s65, %s67
    %p74 = scmp.eq.s32.totalorder %s15, 1
    %p75 = por %p73, %p74
    %p76 = scmp.ne.s32.totalorder %s67, %s68
    %p77 = scmp.eq.s32.totalorder %s15, 0
    %p78 = por %p76, %p77
    %p79 = scmp.ne.s32.totalorder %s67, %s68
    %p80 = scmp.eq.s32.totalorder %s16, 1
    %p81 = por %p79, %p80
    %p83 = scmp.ne.s32.totalorder %s68, %s82
    %p84 = scmp.eq.s32.totalorder %s16, 0
    %p85 = por %p83, %p84
    %s87 = sadd.s32 %s86, 1
    %p90 = scmp.eq.s32.totalorder %s10, 1
    %p91 = scmp.ne.s32.totalorder %s86, %s88
    %p92 = scmp.eq.s32.totalorder %s10, 0
    %p93 = por %p91, %p92
    %p94 = scmp.ne.s32.totalorder %s86, %s88
    %p95 = scmp.eq.s32.totalorder %s15, 1
    %p96 = por %p94, %p95
    %p97 = scmp.ne.s32.totalorder %s88, %s89
    %p98 = scmp.eq.s32.totalorder %s15, 0
    %p99 = por %p97, %p98
    %p100 = scmp.ne.s32.totalorder %s88, %s89
    %p101 = scmp.eq.s32.totalorder %s16, 1
    %p102 = por %p100, %p101
    %p104 = scmp.ne.s32.totalorder %s89, %s103
    %p105 = scmp.eq.s32.totalorder %s16, 0
    %p106 = por %p104, %p105
    %s107 = ssub.s32 %s10, %s17
    %p108 = scmp.eq.s32.totalorder %s107, 0
    %s110 = sadd.s32 %s109, 1
    %s111 = scalar_select %p108, %s109, %s110
    %p114 = pneg %p108
    %p115 = scmp.eq.s32.totalorder %s10, 1
    %p116 = por %p114, %p115
    %p117 = scmp.ne.s32.totalorder %s109, %s112
    %p118 = scmp.eq.s32.totalorder %s10, 0
    %p119 = por %p117, %p118
    %p120 = scmp.ne.s32.totalorder %s109, %s112
    %p121 = scmp.eq.s32.totalorder %s15, 1
    %p122 = por %p120, %p121
    %p123 = scmp.ne.s32.totalorder %s112, %s113
    %p124 = scmp.eq.s32.totalorder %s15, 0
    %p125 = por %p123, %p124
    %p126 = scmp.ne.s32.totalorder %s112, %s113
    %p127 = scmp.eq.s32.totalorder %s16, 1
    %p128 = por %p126, %p127
    %p130 = scmp.ne.s32.totalorder %s113, %s129
    %p131 = scmp.eq.s32.totalorder %s16, 0
    %p132 = por %p130, %p131
    %p133 = scmp.le.s32.totalorder 1, %s10
    %p134 = scmp.lt.s32.totalorder %s10, 3
    %p135 = pnand %p133, %p134
    %p136 = pneg %p135
    // Predicated region
    $region9: #{_lambda_.4} parent=5 // pred_check
      _
    $region10: #{_lambda_.4} parent=5 // pred_check_branch
      %138 = sbr.rel (%p135) target = $region12
    $region11: #{_lambda_.4} parent=5 // pred_region
      %s139 = ssub.s32 %s10, 1
      // Predicated region
      $region13: #{_lambda_.4} parent=11 // pred_check
        %p140 = pneg %p57
      $region14: #{_lambda_.4} parent=11 // pred_check_branch
        %142 = sbr.rel (%p140) target = $region16
      $region15: #{_lambda_.4} parent=11 // pred_region
        _
      $region16: #{_lambda_.4} parent=11 // pred_fallthru
        _
      // Predicated region
      $region17: #{_lambda_.4} parent=11 // pred_check
        %p143 = pneg %p78
      $region18: #{_lambda_.4} parent=11 // pred_check_branch
        %145 = sbr.rel (%p143) target = $region20
      $region19: #{_lambda_.4} parent=11 // pred_region
        _
      $region20: #{_lambda_.4} parent=11 // pred_fallthru
        _
      // Predicated region
      $region21: #{_lambda_.4} parent=11 // pred_check
        %p146 = pneg %p99
      $region22: #{_lambda_.4} parent=11 // pred_check_branch
        %148 = sbr.rel (%p146) target = $region24
      $region23: #{_lambda_.4} parent=11 // pred_region
        _
      $region24: #{_lambda_.4} parent=11 // pred_fallthru
        _
    $region12: #{_lambda_.4} parent=5 // pred_fallthru
      _
    %p149 = scmp.lt.s32.totalorder %s10, 2
    // Predicated region
    $region25: #{_lambda_.4} parent=5 // pred_check
      %p150 = pneg %p149
    $region26: #{_lambda_.4} parent=5 // pred_check_branch
      %152 = sbr.rel (%p150) target = $region28
    $region27: #{_lambda_.4} parent=5 // pred_region
      // Predicated region
      $region29: #{_lambda_.4} parent=27 // pred_check
        %p153 = pneg %p30
      $region30: #{_lambda_.4} parent=27 // pred_check_branch
        %155 = sbr.rel (%p153) target = $region32
      $region31: #{_lambda_.4} parent=27 // pred_region
        %p156 = scmp.lt.s32.totalorder %s10, 1
        %s157 = scalar_select %p156, %s10, 1
        %s158 = smul.addr %s157, 51
        %s159 = smul.addr %s158, 4
        %s160 = scalar_lea.vmem %s0, %s159
      $region32: #{_lambda_.4} parent=27 // pred_fallthru
        _
    $region28: #{_lambda_.4} parent=5 // pred_fallthru
      _
    %p161 = scmp.le.s32.totalorder 1, %s10
    %p162 = scmp.lt.s32.totalorder %s10, 3
    %p163 = pnand %p161, %p162
    %p164 = pneg %p163
    // Predicated region
    $region33: #{_lambda_.4} parent=5 // pred_check
      _
    $region34: #{_lambda_.4} parent=5 // pred_check_branch
      %166 = sbr.rel (%p163) target = $region36
    $region35: #{_lambda_.4} parent=5 // pred_region
      %s167 = ssub.s32 %s10, 1
      %p168 = scmp.lt.s32.totalorder %s15, 1
      %s169 = scalar_select %p168, %s15, 1
      %s170 = smul.addr %s169, 51
      %s171 = smul.addr %s170, 4
      %s172 = scalar_lea.vmem %s0, %s171
      %p173 = pneg %p36
      %p174 = pneg %p33
      %p175 = pneg %p57
      %p176 = pneg %p54
      %p177 = pneg %p78
      %p178 = pneg %p75
      %p179 = pneg %p99
      %p180 = pneg %p96
      %p181 = pneg %p125
      %p182 = pneg %p122
      %p183 = scmp.lt.s32.totalorder %s15, 1
      %s184 = scalar_select %p183, %s15, 1
      %s185 = smul.addr %s184, 28
      %s186 = smul.addr %s185, 4
      %s187 = scalar_lea.vmem %s4, %s186
      %p188 = scmp.lt.s32.totalorder %s15, 1
      %s189 = scalar_select %p188, %s15, 1
      %s190 = smul.addr %s189, 51
      %s191 = smul.addr %s190, 4
      %s192 = scalar_lea.vmem %s0, %s191
      %p193 = scmp.lt.s32.totalorder %s15, 1
      %s194 = scalar_select %p193, %s15, 1
      %s195 = smul.addr %s194, 28
      %s196 = smul.addr %s195, 4
      %s197 = scalar_lea.vmem %s4, %s196
      loop: start=0, step=1, limit=14
      $region37: #{_lambda_.4} parent=35 // loop_pre_header
        _
      $region38: #{_lambda_.4} parent=35 // loop_header
        %s200 = sphi 0, %s204
        %p201 = scmp.ge.s32.totalorder %s200, 14
      $region39: #{_lambda_.4} parent=35 // loop_header_branch
        %203 = sbr.rel (%p201) target = $region43
      $region40: #{_lambda_.4} parent=35 // loop_body
        %s205 = smul.u32 %s200, 3
        %s206 = smul.addr %s205, 4
        %s207 = scalar_lea.vmem %s192, %s206
        %v208 = vld [vmem:[%s207] sm:$0xf]
        %v209 = vld [vmem:[%s207 + $0x4] sm:$0xf]
        %v210 = vld [vmem:[%s207 + $0x8] sm:$0x1]
        %s211 = sadd.s32 %s200, 1
        %s212 = smul.u32 %s211, 3
        %s213 = smul.addr %s212, 4
        %s214 = scalar_lea.vmem %s192, %s213
        %v215 = vld [vmem:[%s214] sm:$0xf]
        %v216 = vld [vmem:[%s214 + $0x4] sm:$0xf]
        %v217 = vld [vmem:[%s214 + $0x8] sm:$0x1]
        %s218 = sadd.s32 %s200, 2
        %s219 = smul.u32 %s218, 3
        %s220 = smul.addr %s219, 4
        %s221 = scalar_lea.vmem %s192, %s220
        %v222 = vld [vmem:[%s221] sm:$0xf]
        %v223 = vld [vmem:[%s221 + $0x4] sm:$0xf]
        %v224 = vld [vmem:[%s221 + $0x8] sm:$0x1]
        %s225 = sadd.s32 %s200, 3
        %s226 = smul.u32 %s225, 3
        %s227 = smul.addr %s226, 4
        %s228 = scalar_lea.vmem %s192, %s227
        %v229 = vld [vmem:[%s228] sm:$0xf]
        %v230 = vld [vmem:[%s228 + $0x4] sm:$0xf]
        %v231 = vld [vmem:[%s228 + $0x8] sm:$0x1]
        %v234 = vunpack.c.l.b16 %v208
        %v235 = vunpack.c.l.b16 %v209
        %v236 = vpack.c.b16 %v235, %v234
        %v239 = vshrl.u32 %v236, 16
        %v241 = vshll.u32 %v236, 16
        %v243 = vrot.slane %v241, 1
        %v244 = vor.u32 %v239, %v243
        %v246 = vrot.slane %v236, 1
        %v249 = vunpack.c.l.b16 %v210
        %v250 = vpack.c.b16 %v249, %v249
        %vm251 = vsmask.f32 6400
        %v252 = vrot.slane %v239, 1
        %v253 = vrot.slane %v241, 2
        %v254 = vor.u32 %v252, %v253
        %v256 = vshll.u32 %v250, 16
        %v258 = vrot.slane %v256, 2
        %v259 = vsel %vm251, %v254, %v258
        %v263 = vunpack.c.l.b16 %v215
        %v264 = vunpack.c.l.b16 %v216
        %v265 = vpack.c.b16 %v264, %v263
        %v268 = vshrl.u32 %v265, 16
        %v270 = vshll.u32 %v265, 16
        %v272 = vrot.slane %v270, 1
        %v273 = vor.u32 %v268, %v272
        %v275 = vrot.slane %v265, 1
        %v278 = vunpack.c.l.b16 %v217
        %v279 = vpack.c.b16 %v278, %v278
        %v280 = vrot.slane %v268, 1
        %v281 = vrot.slane %v270, 2
        %v282 = vor.u32 %v280, %v281
        %v284 = vshll.u32 %v279, 16
        %v286 = vrot.slane %v284, 2
        %v287 = vsel %vm251, %v282, %v286
        %v291 = vunpack.c.l.b16 %v222
        %v292 = vunpack.c.l.b16 %v223
        %v293 = vpack.c.b16 %v292, %v291
        %v296 = vshrl.u32 %v293, 16
        %v298 = vshll.u32 %v293, 16
        %v300 = vrot.slane %v298, 1
        %v301 = vor.u32 %v296, %v300
        %v303 = vrot.slane %v293, 1
        %v306 = vunpack.c.l.b16 %v224
        %v307 = vpack.c.b16 %v306, %v306
        %v308 = vrot.slane %v296, 1
        %v309 = vrot.slane %v298, 2
        %v310 = vor.u32 %v308, %v309
        %v312 = vshll.u32 %v307, 16
        %v314 = vrot.slane %v312, 2
        %v315 = vsel %vm251, %v310, %v314
        %v319 = vunpack.c.l.b16 %v229
        %v320 = vunpack.c.l.b16 %v230
        %v321 = vpack.c.b16 %v320, %v319
        %v324 = vshrl.u32 %v321, 16
        %v326 = vshll.u32 %v321, 16
        %v328 = vrot.slane %v326, 1
        %v329 = vor.u32 %v324, %v328
        %v331 = vrot.slane %v321, 1
        %v334 = vunpack.c.l.b16 %v231
        %v335 = vpack.c.b16 %v334, %v334
        %v336 = vrot.slane %v324, 1
        %v337 = vrot.slane %v326, 2
        %v338 = vor.u32 %v336, %v337
        %v340 = vshll.u32 %v335, 16
        %v342 = vrot.slane %v340, 2
        %v343 = vsel %vm251, %v338, %v342
        %v345 = vld [vmem:[%s1] sm:$0xf]
        %v346 = vld [vmem:[%s1 + $0x4] sm:$0xf]
        %v347 = vld [vmem:[%s1 + $0x8] sm:$0xf]
        %v348 = vld [vmem:[%s1 + $0xc] sm:$0xf]
        %v349 = vld [vmem:[%s1 + $0x10] sm:$0xf]
        %v350 = vld [vmem:[%s1 + $0x14] sm:$0xf]
        %v351 = vld [vmem:[%s1 + $0x18] sm:$0xf]
        %v352 = vld [vmem:[%s1 + $0x1c] sm:$0xf]
        %v353 = vld [vmem:[%s1 + $0x20] sm:$0xf]
        %v354 = vld [vmem:[%s1 + $0x24] sm:$0xf]
        %v355 = vld [vmem:[%s1 + $0x28] sm:$0xf]
        %v356 = vld [vmem:[%s1 + $0x2c] sm:$0xf]
        %v357 = vld [vmem:[%s1 + $0x30] sm:$0xf]
        %v358 = vld [vmem:[%s1 + $0x34] sm:$0xf]
        %v359 = vld [vmem:[%s1 + $0x38] sm:$0xf]
        %v360 = vld [vmem:[%s1 + $0x3c] sm:$0xf]
        %v361 = vld [vmem:[%s1 + $0x40] sm:$0xf]
        %v362 = vld [vmem:[%s1 + $0x44] sm:$0xf]
        %v363 = vld [vmem:[%s1 + $0x48] sm:$0xf]
        %v364 = vld [vmem:[%s1 + $0x4c] sm:$0xf]
        %v365 = vld [vmem:[%s1 + $0x50] sm:$0xf]
        %v366 = vld [vmem:[%s1 + $0x54] sm:$0xf]
        %v367 = vld [vmem:[%s1 + $0x58] sm:$0xf]
        %v368 = vld [vmem:[%s1 + $0x5c] sm:$0xf]
        %v369 = vld [vmem:[%s1 + $0x60] sm:$0xf]
        %v370 = vld [vmem:[%s1 + $0x64] sm:$0xf]
        %v371 = vld [vmem:[%s1 + $0x68] sm:$0xf]
        %v372 = vld [vmem:[%s1 + $0x6c] sm:$0xf]
        %v373 = vld [vmem:[%s1 + $0x70] sm:$0xf]
        %v374 = vld [vmem:[%s1 + $0x74] sm:$0xf]
        %v375 = vld [vmem:[%s1 + $0x78] sm:$0xf]
        %v376 = vld [vmem:[%s1 + $0x7c] sm:$0xf]
        %v377 = vld [vmem:[%s1 + $0x80] sm:$0xf]
        %v378 = vld [vmem:[%s1 + $0x84] sm:$0xf]
        %v379 = vld [vmem:[%s1 + $0x88] sm:$0xf]
        %v380 = vld [vmem:[%s1 + $0x8c] sm:$0xf]
        %v381 = vld [vmem:[%s1 + $0x90] sm:$0xf]
        %v382 = vld [vmem:[%s1 + $0x94] sm:$0xf]
        %v383 = vld [vmem:[%s1 + $0x98] sm:$0xf]
        %v384 = vld [vmem:[%s1 + $0x9c] sm:$0xf]
        %v385 = vld [vmem:[%s1 + $0xa0] sm:$0xf]
        %v386 = vld [vmem:[%s1 + $0xa4] sm:$0xf]
        %v387 = vld [vmem:[%s1 + $0xa8] sm:$0xf]
        %v388 = vld [vmem:[%s1 + $0xac] sm:$0xf]
        %v389 = vld [vmem:[%s1 + $0xb0] sm:$0xf]
        %v390 = vld [vmem:[%s1 + $0xb4] sm:$0xf]
        %v391 = vld [vmem:[%s1 + $0xb8] sm:$0xf]
        %v392 = vld [vmem:[%s1 + $0xbc] sm:$0xf]
        %v393 = vld [vmem:[%s1 + $0xc0] sm:$0xf]
        %v394 = vld [vmem:[%s1 + $0xc4] sm:$0xf]
        %v395 = vld [vmem:[%s1 + $0xc8] sm:$0xf]
        %v396 = vld [vmem:[%s1 + $0xcc] sm:$0xf]
        %v397 = vld [vmem:[%s1 + $0xd0] sm:$0xf]
        %v398 = vld [vmem:[%s1 + $0xd4] sm:$0xf]
        %v399 = vld [vmem:[%s1 + $0xd8] sm:$0xf]
        %v400 = vld [vmem:[%s1 + $0xdc] sm:$0xf]
        %v401 = vld [vmem:[%s1 + $0xe0] sm:$0xf]
        %v402 = vld [vmem:[%s1 + $0xe4] sm:$0xf]
        %v403 = vld [vmem:[%s1 + $0xe8] sm:$0xf]
        %v404 = vld [vmem:[%s1 + $0xec] sm:$0xf]
        %v405 = vld [vmem:[%s1 + $0xf0] sm:$0xf]
        %v406 = vld [vmem:[%s1 + $0xf4] sm:$0xf]
        %v407 = vld [vmem:[%s1 + $0xf8] sm:$0xf]
        %v408 = vld [vmem:[%s1 + $0xfc] sm:$0xf]
        %v409 = vld [vmem:[%s1 + $0x100] sm:$0xf]
        %v410 = vld [vmem:[%s1 + $0x104] sm:$0xf]
        %v411 = vld [vmem:[%s1 + $0x108] sm:$0xf]
        %v412 = vld [vmem:[%s1 + $0x10c] sm:$0xf]
        %v413 = vld [vmem:[%s1 + $0x110] sm:$0xf]
        %v414 = vld [vmem:[%s1 + $0x114] sm:$0xf]
        %v415 = vld [vmem:[%s1 + $0x118] sm:$0xf]
        %v416 = vld [vmem:[%s1 + $0x11c] sm:$0xf]
        %v417 = vld [vmem:[%s1 + $0x120] sm:$0xf]
        %v418 = vld [vmem:[%s1 + $0x124] sm:$0xf]
        %v419 = vld [vmem:[%s1 + $0x128] sm:$0xf]
        %v420 = vld [vmem:[%s1 + $0x12c] sm:$0xf]
        %v421 = vld [vmem:[%s1 + $0x130] sm:$0xf]
        %v422 = vld [vmem:[%s1 + $0x134] sm:$0xf]
        %v423 = vld [vmem:[%s1 + $0x138] sm:$0xf]
        %v424 = vld [vmem:[%s1 + $0x13c] sm:$0xf]
        %v425 = vld [vmem:[%s1 + $0x140] sm:$0xf]
        %v426 = vld [vmem:[%s1 + $0x144] sm:$0xf]
        %v427 = vld [vmem:[%s1 + $0x148] sm:$0xf]
        %v428 = vld [vmem:[%s1 + $0x14c] sm:$0xf]
        %v429 = vld [vmem:[%s1 + $0x150] sm:$0xf]
        %v430 = vld [vmem:[%s1 + $0x154] sm:$0xf]
        %v431 = vld [vmem:[%s1 + $0x158] sm:$0xf]
        %v432 = vld [vmem:[%s1 + $0x15c] sm:$0xf]
        %v433 = vld [vmem:[%s1 + $0x160] sm:$0xf]
        %v434 = vld [vmem:[%s1 + $0x164] sm:$0xf]
        %v435 = vld [vmem:[%s1 + $0x168] sm:$0xf]
        %v436 = vld [vmem:[%s1 + $0x16c] sm:$0xf]
        %v437 = vld [vmem:[%s1 + $0x170] sm:$0xf]
        %v438 = vld [vmem:[%s1 + $0x174] sm:$0xf]
        %v439 = vld [vmem:[%s1 + $0x178] sm:$0xf]
        %v440 = vld [vmem:[%s1 + $0x17c] sm:$0xf]
        %v441 = vld [vmem:[%s1 + $0x180] sm:$0xf]
        %v442 = vld [vmem:[%s1 + $0x184] sm:$0xf]
        %v443 = vld [vmem:[%s1 + $0x188] sm:$0xf]
        %v444 = vld [vmem:[%s1 + $0x18c] sm:$0xf]
        %v445 = vld [vmem:[%s1 + $0x190] sm:$0xf]
        %v446 = vld [vmem:[%s1 + $0x194] sm:$0xf]
        %v447 = vld [vmem:[%s1 + $0x198] sm:$0xf]
        %v448 = vld [vmem:[%s1 + $0x19c] sm:$0xf]
        %v449 = vld [vmem:[%s1 + $0x1a0] sm:$0xf]
        %v450 = vld [vmem:[%s1 + $0x1a4] sm:$0xf]
        %v451 = vld [vmem:[%s1 + $0x1a8] sm:$0xf]
        %v452 = vld [vmem:[%s1 + $0x1ac] sm:$0xf]
        %v453 = vld [vmem:[%s1 + $0x1b0] sm:$0xf]
        %v454 = vld [vmem:[%s1 + $0x1b4] sm:$0xf]
        %v455 = vld [vmem:[%s1 + $0x1b8] sm:$0xf]
        %v456 = vld [vmem:[%s1 + $0x1bc] sm:$0xf]
        %v457 = vld [vmem:[%s1 + $0x1c0] sm:$0xf]
        %v458 = vld [vmem:[%s1 + $0x1c4] sm:$0xf]
        %v459 = vld [vmem:[%s1 + $0x1c8] sm:$0xf]
        %v460 = vld [vmem:[%s1 + $0x1cc] sm:$0xf]
        %v461 = vld [vmem:[%s1 + $0x1d0] sm:$0xf]
        %v462 = vld [vmem:[%s1 + $0x1d4] sm:$0xf]
        %v463 = vld [vmem:[%s1 + $0x1d8] sm:$0xf]
        %v464 = vld [vmem:[%s1 + $0x1dc] sm:$0xf]
        %v465 = vld [vmem:[%s1 + $0x1e0] sm:$0xf]
        %v466 = vld [vmem:[%s1 + $0x1e4] sm:$0xf]
        %v467 = vld [vmem:[%s1 + $0x1e8] sm:$0xf]
        %v468 = vld [vmem:[%s1 + $0x1ec] sm:$0xf]
        %v469 = vld [vmem:[%s1 + $0x1f0] sm:$0xf]
        %v470 = vld [vmem:[%s1 + $0x1f4] sm:$0xf]
        %v471 = vld [vmem:[%s1 + $0x1f8] sm:$0xf]
        %v472 = vld [vmem:[%s1 + $0x1fc] sm:$0xf]
        %v473 = vld [vmem:[%s1 + $0x200] sm:$0xf]
        %v474 = vld [vmem:[%s1 + $0x204] sm:$0xf]
        %v475 = vld [vmem:[%s1 + $0x208] sm:$0xf]
        %v476 = vld [vmem:[%s1 + $0x20c] sm:$0xf]
        %v477 = vld [vmem:[%s1 + $0x210] sm:$0xf]
        %v478 = vld [vmem:[%s1 + $0x214] sm:$0xf]
        %v479 = vld [vmem:[%s1 + $0x218] sm:$0xf]
        %v480 = vld [vmem:[%s1 + $0x21c] sm:$0xf]
        %v481 = vld [vmem:[%s1 + $0x220] sm:$0xf]
        %v482 = vld [vmem:[%s1 + $0x224] sm:$0xf]
        %v483 = vld [vmem:[%s1 + $0x228] sm:$0xf]
        %v484 = vld [vmem:[%s1 + $0x22c] sm:$0xf]
        %v485 = vld [vmem:[%s1 + $0x230] sm:$0xf]
        %v486 = vld [vmem:[%s1 + $0x234] sm:$0xf]
        %v487 = vld [vmem:[%s1 + $0x238] sm:$0xf]
        %v488 = vld [vmem:[%s1 + $0x23c] sm:$0xf]
        %v489 = vld [vmem:[%s1 + $0x240] sm:$0xf]
        %v490 = vld [vmem:[%s1 + $0x244] sm:$0xf]
        %v491 = vld [vmem:[%s1 + $0x248] sm:$0xf]
        %v492 = vld [vmem:[%s1 + $0x24c] sm:$0xf]
        %v493 = vld [vmem:[%s1 + $0x250] sm:$0xf]
        %v494 = vld [vmem:[%s1 + $0x254] sm:$0xf]
        %v495 = vld [vmem:[%s1 + $0x258] sm:$0xf]
        %v496 = vld [vmem:[%s1 + $0x25c] sm:$0xf]
        %v497 = vld [vmem:[%s1 + $0x260] sm:$0xf]
        %v498 = vld [vmem:[%s1 + $0x264] sm:$0xf]
        %v499 = vld [vmem:[%s1 + $0x268] sm:$0xf]
        %v500 = vld [vmem:[%s1 + $0x26c] sm:$0xf]
        %v501 = vld [vmem:[%s1 + $0x270] sm:$0xf]
        %v502 = vld [vmem:[%s1 + $0x274] sm:$0xf]
        %v503 = vld [vmem:[%s1 + $0x278] sm:$0xf]
        %v504 = vld [vmem:[%s1 + $0x27c] sm:$0xf]
        %v505 = vld [vmem:[%s1 + $0x280] sm:$0xf]
        %v506 = vld [vmem:[%s1 + $0x284] sm:$0xf]
        %v507 = vld [vmem:[%s1 + $0x288] sm:$0xf]
        %v508 = vld [vmem:[%s1 + $0x28c] sm:$0xf]
        %v509 = vld [vmem:[%s1 + $0x290] sm:$0xf]
        %v510 = vld [vmem:[%s1 + $0x294] sm:$0xf]
        %v511 = vld [vmem:[%s1 + $0x298] sm:$0xf]
        %v512 = vld [vmem:[%s1 + $0x29c] sm:$0xf]
        %v513 = vld [vmem:[%s1 + $0x2a0] sm:$0xf]
        %v514 = vld [vmem:[%s1 + $0x2a4] sm:$0xf]
        %v515 = vld [vmem:[%s1 + $0x2a8] sm:$0xf]
        %v516 = vld [vmem:[%s1 + $0x2ac] sm:$0xf]
        %v517 = vld [vmem:[%s1 + $0x2b0] sm:$0xf]
        %v518 = vld [vmem:[%s1 + $0x2b4] sm:$0xf]
        %v519 = vld [vmem:[%s1 + $0x2b8] sm:$0xf]
        %v520 = vld [vmem:[%s1 + $0x2bc] sm:$0xf]
        %v521 = vld [vmem:[%s1 + $0x2c0] sm:$0xf]
        %v522 = vld [vmem:[%s1 + $0x2c4] sm:$0xf]
        %v523 = vld [vmem:[%s1 + $0x2c8] sm:$0xf]
        %v524 = vld [vmem:[%s1 + $0x2cc] sm:$0xf]
        %v525 = vld [vmem:[%s1 + $0x2d0] sm:$0xf]
        %v526 = vld [vmem:[%s1 + $0x2d4] sm:$0xf]
        %v527 = vld [vmem:[%s1 + $0x2d8] sm:$0xf]
        %v528 = vld [vmem:[%s1 + $0x2dc] sm:$0xf]
        %v529 = vld [vmem:[%s1 + $0x2e0] sm:$0xf]
        %v530 = vld [vmem:[%s1 + $0x2e4] sm:$0xf]
        %v531 = vld [vmem:[%s1 + $0x2e8] sm:$0xf]
        %v532 = vld [vmem:[%s1 + $0x2ec] sm:$0xf]
        %v533 = vld [vmem:[%s1 + $0x2f0] sm:$0xf]
        %v534 = vld [vmem:[%s1 + $0x2f4] sm:$0xf]
        %v535 = vld [vmem:[%s1 + $0x2f8] sm:$0xf]
        %v536 = vld [vmem:[%s1 + $0x2fc] sm:$0xf]
        %v537 = vld [vmem:[%s1 + $0x300] sm:$0xf]
        %v538 = vld [vmem:[%s1 + $0x304] sm:$0xf]
        %v539 = vld [vmem:[%s1 + $0x308] sm:$0xf]
        %v540 = vld [vmem:[%s1 + $0x30c] sm:$0xf]
        %v541 = vld [vmem:[%s1 + $0x310] sm:$0xf]
        %v542 = vld [vmem:[%s1 + $0x314] sm:$0xf]
        %v543 = vld [vmem:[%s1 + $0x318] sm:$0xf]
        %v544 = vld [vmem:[%s1 + $0x31c] sm:$0xf]
        %v545 = vld [vmem:[%s1 + $0x320] sm:$0xf]
        %v546 = vld [vmem:[%s1 + $0x324] sm:$0xf]
        %v547 = vld [vmem:[%s1 + $0x328] sm:$0xf]
        %v548 = vld [vmem:[%s1 + $0x32c] sm:$0xf]
        %v549 = vld [vmem:[%s1 + $0x330] sm:$0xf]
        %v550 = vld [vmem:[%s1 + $0x334] sm:$0xf]
        %v551 = vld [vmem:[%s1 + $0x338] sm:$0xf]
        %v552 = vld [vmem:[%s1 + $0x33c] sm:$0xf]
        %v553 = vld [vmem:[%s1 + $0x340] sm:$0xf]
        %v554 = vld [vmem:[%s1 + $0x344] sm:$0xf]
        %v555 = vld [vmem:[%s1 + $0x348] sm:$0xf]
        %v556 = vld [vmem:[%s1 + $0x34c] sm:$0xf]
        %v557 = vld [vmem:[%s1 + $0x350] sm:$0xf]
        %v558 = vld [vmem:[%s1 + $0x354] sm:$0xf]
        %v559 = vld [vmem:[%s1 + $0x358] sm:$0xf]
        %v560 = vld [vmem:[%s1 + $0x35c] sm:$0xf]
        %v561 = vld [vmem:[%s1 + $0x360] sm:$0xf]
        %v562 = vld [vmem:[%s1 + $0x364] sm:$0xf]
        %v563 = vld [vmem:[%s1 + $0x368] sm:$0xf]
        %v564 = vld [vmem:[%s1 + $0x36c] sm:$0xf]
        %v565 = vld [vmem:[%s1 + $0x370] sm:$0xf]
        %v566 = vld [vmem:[%s1 + $0x374] sm:$0xf]
        %v567 = vld [vmem:[%s1 + $0x378] sm:$0xf]
        %v568 = vld [vmem:[%s1 + $0x37c] sm:$0xf]
        %v569 = vld [vmem:[%s1 + $0x380] sm:$0xf]
        %v570 = vld [vmem:[%s1 + $0x384] sm:$0xf]
        %v571 = vld [vmem:[%s1 + $0x388] sm:$0xf]
        %v572 = vld [vmem:[%s1 + $0x38c] sm:$0xf]
        %v573 = vld [vmem:[%s1 + $0x390] sm:$0xf]
        %v574 = vld [vmem:[%s1 + $0x394] sm:$0xf]
        %v575 = vld [vmem:[%s1 + $0x398] sm:$0xf]
        %v576 = vld [vmem:[%s1 + $0x39c] sm:$0xf]
        %v577 = vld [vmem:[%s1 + $0x3a0] sm:$0xf]
        %v578 = vld [vmem:[%s1 + $0x3a4] sm:$0xf]
        %v579 = vld [vmem:[%s1 + $0x3a8] sm:$0xf]
        %v580 = vld [vmem:[%s1 + $0x3ac] sm:$0xf]
        %v581 = vld [vmem:[%s1 + $0x3b0] sm:$0xf]
        %v582 = vld [vmem:[%s1 + $0x3b4] sm:$0xf]
        %v583 = vld [vmem:[%s1 + $0x3b8] sm:$0xf]
        %v584 = vld [vmem:[%s1 + $0x3bc] sm:$0xf]
        %v585 = vld [vmem:[%s1 + $0x3c0] sm:$0xf]
        %v586 = vld [vmem:[%s1 + $0x3c4] sm:$0xf]
        %v587 = vld [vmem:[%s1 + $0x3c8] sm:$0xf]
        %v588 = vld [vmem:[%s1 + $0x3cc] sm:$0xf]
        %v589 = vld [vmem:[%s1 + $0x3d0] sm:$0xf]
        %v590 = vld [vmem:[%s1 + $0x3d4] sm:$0xf]
        %v591 = vld [vmem:[%s1 + $0x3d8] sm:$0xf]
        %v592 = vld [vmem:[%s1 + $0x3dc] sm:$0xf]
        %v593 = vld [vmem:[%s1 + $0x3e0] sm:$0xf]
        %v594 = vld [vmem:[%s1 + $0x3e4] sm:$0xf]
        %v595 = vld [vmem:[%s1 + $0x3e8] sm:$0xf]
        %v596 = vld [vmem:[%s1 + $0x3ec] sm:$0xf]
        %v597 = vld [vmem:[%s1 + $0x3f0] sm:$0xf]
        %v598 = vld [vmem:[%s1 + $0x3f4] sm:$0xf]
        %v599 = vld [vmem:[%s1 + $0x3f8] sm:$0xf]
        %v600 = vld [vmem:[%s1 + $0x3fc] sm:$0xf]
        %v857 = vunpack.c.l.b16 %v345
        %v858 = vunpack.c.l.b16 %v346
        %v859 = vunpack.c.l.b16 %v347
        %v860 = vunpack.c.l.b16 %v348
        %v861 = vunpack.c.l.b16 %v349
        %v862 = vunpack.c.l.b16 %v350
        %v863 = vunpack.c.l.b16 %v351
        %v864 = vunpack.c.l.b16 %v352
        %v865 = vunpack.c.l.b16 %v353
        %v866 = vunpack.c.l.b16 %v354
        %v867 = vunpack.c.l.b16 %v355
        %v868 = vunpack.c.l.b16 %v356
        %v869 = vunpack.c.l.b16 %v357
        %v870 = vunpack.c.l.b16 %v358
        %v871 = vunpack.c.l.b16 %v359
        %v872 = vunpack.c.l.b16 %v360
        %v873 = vunpack.c.l.b16 %v361
        %v874 = vunpack.c.l.b16 %v362
        %v875 = vunpack.c.l.b16 %v363
        %v876 = vunpack.c.l.b16 %v364
        %v877 = vunpack.c.l.b16 %v365
        %v878 = vunpack.c.l.b16 %v366
        %v879 = vunpack.c.l.b16 %v367
        %v880 = vunpack.c.l.b16 %v368
        %v881 = vunpack.c.l.b16 %v369
        %v882 = vunpack.c.l.b16 %v370
        %v883 = vunpack.c.l.b16 %v371
        %v884 = vunpack.c.l.b16 %v372
        %v885 = vunpack.c.l.b16 %v373
        %v886 = vunpack.c.l.b16 %v374
        %v887 = vunpack.c.l.b16 %v375
        %v888 = vunpack.c.l.b16 %v376
        %v889 = vunpack.c.l.b16 %v377
        %v890 = vunpack.c.l.b16 %v378
        %v891 = vunpack.c.l.b16 %v379
        %v892 = vunpack.c.l.b16 %v380
        %v893 = vunpack.c.l.b16 %v381
        %v894 = vunpack.c.l.b16 %v382
        %v895 = vunpack.c.l.b16 %v383
        %v896 = vunpack.c.l.b16 %v384
        %v897 = vunpack.c.l.b16 %v385
        %v898 = vunpack.c.l.b16 %v386
        %v899 = vunpack.c.l.b16 %v387
        %v900 = vunpack.c.l.b16 %v388
        %v901 = vunpack.c.l.b16 %v389
        %v902 = vunpack.c.l.b16 %v390
        %v903 = vunpack.c.l.b16 %v391
        %v904 = vunpack.c.l.b16 %v392
        %v905 = vunpack.c.l.b16 %v393
        %v906 = vunpack.c.l.b16 %v394
        %v907 = vunpack.c.l.b16 %v395
        %v908 = vunpack.c.l.b16 %v396
        %v909 = vunpack.c.l.b16 %v397
        %v910 = vunpack.c.l.b16 %v398
        %v911 = vunpack.c.l.b16 %v399
        %v912 = vunpack.c.l.b16 %v400
        %v913 = vunpack.c.l.b16 %v401
        %v914 = vunpack.c.l.b16 %v402
        %v915 = vunpack.c.l.b16 %v403
        %v916 = vunpack.c.l.b16 %v404
        %v917 = vunpack.c.l.b16 %v405
        %v918 = vunpack.c.l.b16 %v406
        %v919 = vunpack.c.l.b16 %v407
        %v920 = vunpack.c.l.b16 %v408
        %v921 = vunpack.c.l.b16 %v409
        %v922 = vunpack.c.l.b16 %v410
        %v923 = vunpack.c.l.b16 %v411
        %v924 = vunpack.c.l.b16 %v412
        %v925 = vunpack.c.l.b16 %v413
        %v926 = vunpack.c.l.b16 %v414
        %v927 = vunpack.c.l.b16 %v415
        %v928 = vunpack.c.l.b16 %v416
        %v929 = vunpack.c.l.b16 %v417
        %v930 = vunpack.c.l.b16 %v418
        %v931 = vunpack.c.l.b16 %v419
        %v932 = vunpack.c.l.b16 %v420
        %v933 = vunpack.c.l.b16 %v421
        %v934 = vunpack.c.l.b16 %v422
        %v935 = vunpack.c.l.b16 %v423
        %v936 = vunpack.c.l.b16 %v424
        %v937 = vunpack.c.l.b16 %v425
        %v938 = vunpack.c.l.b16 %v426
        %v939 = vunpack.c.l.b16 %v427
        %v940 = vunpack.c.l.b16 %v428
        %v941 = vunpack.c.l.b16 %v429
        %v942 = vunpack.c.l.b16 %v430
        %v943 = vunpack.c.l.b16 %v431
        %v944 = vunpack.c.l.b16 %v432
        %v945 = vunpack.c.l.b16 %v433
        %v946 = vunpack.c.l.b16 %v434
        %v947 = vunpack.c.l.b16 %v435
        %v948 = vunpack.c.l.b16 %v436
        %v949 = vunpack.c.l.b16 %v437
        %v950 = vunpack.c.l.b16 %v438
        %v951 = vunpack.c.l.b16 %v439
        %v952 = vunpack.c.l.b16 %v440
        %v953 = vunpack.c.l.b16 %v441
        %v954 = vunpack.c.l.b16 %v442
        %v955 = vunpack.c.l.b16 %v443
        %v956 = vunpack.c.l.b16 %v444
        %v957 = vunpack.c.l.b16 %v445
        %v958 = vunpack.c.l.b16 %v446
        %v959 = vunpack.c.l.b16 %v447
        %v960 = vunpack.c.l.b16 %v448
        %v961 = vunpack.c.l.b16 %v449
        %v962 = vunpack.c.l.b16 %v450
        %v963 = vunpack.c.l.b16 %v451
        %v964 = vunpack.c.l.b16 %v452
        %v965 = vunpack.c.l.b16 %v453
        %v966 = vunpack.c.l.b16 %v454
        %v967 = vunpack.c.l.b16 %v455
        %v968 = vunpack.c.l.b16 %v456
        %v969 = vunpack.c.l.b16 %v457
        %v970 = vunpack.c.l.b16 %v458
        %v971 = vunpack.c.l.b16 %v459
        %v972 = vunpack.c.l.b16 %v460
        %v973 = vunpack.c.l.b16 %v461
        %v974 = vunpack.c.l.b16 %v462
        %v975 = vunpack.c.l.b16 %v463
        %v976 = vunpack.c.l.b16 %v464
        %v977 = vunpack.c.l.b16 %v465
        %v978 = vunpack.c.l.b16 %v466
        %v979 = vunpack.c.l.b16 %v467
        %v980 = vunpack.c.l.b16 %v468
        %v981 = vunpack.c.l.b16 %v469
        %v982 = vunpack.c.l.b16 %v470
        %v983 = vunpack.c.l.b16 %v471
        %v984 = vunpack.c.l.b16 %v472
        %v985 = vunpack.c.l.b16 %v473
        %v986 = vunpack.c.l.b16 %v474
        %v987 = vunpack.c.l.b16 %v475
        %v988 = vunpack.c.l.b16 %v476
        %v989 = vunpack.c.l.b16 %v477
        %v990 = vunpack.c.l.b16 %v478
        %v991 = vunpack.c.l.b16 %v479
        %v992 = vunpack.c.l.b16 %v480
        %v993 = vunpack.c.l.b16 %v481
        %v994 = vunpack.c.l.b16 %v482
        %v995 = vunpack.c.l.b16 %v483
        %v996 = vunpack.c.l.b16 %v484
        %v997 = vunpack.c.l.b16 %v485
        %v998 = vunpack.c.l.b16 %v486
        %v999 = vunpack.c.l.b16 %v487
        %v1000 = vunpack.c.l.b16 %v488
        %v1001 = vunpack.c.l.b16 %v489
        %v1002 = vunpack.c.l.b16 %v490
        %v1003 = vunpack.c.l.b16 %v491
        %v1004 = vunpack.c.l.b16 %v492
        %v1005 = vunpack.c.l.b16 %v493
        %v1006 = vunpack.c.l.b16 %v494
        %v1007 = vunpack.c.l.b16 %v495
        %v1008 = vunpack.c.l.b16 %v496
        %v1009 = vunpack.c.l.b16 %v497
        %v1010 = vunpack.c.l.b16 %v498
        %v1011 = vunpack.c.l.b16 %v499
        %v1012 = vunpack.c.l.b16 %v500
        %v1013 = vunpack.c.l.b16 %v501
        %v1014 = vunpack.c.l.b16 %v502
        %v1015 = vunpack.c.l.b16 %v503
        %v1016 = vunpack.c.l.b16 %v504
        %v1017 = vunpack.c.l.b16 %v505
        %v1018 = vunpack.c.l.b16 %v506
        %v1019 = vunpack.c.l.b16 %v507
        %v1020 = vunpack.c.l.b16 %v508
        %v1021 = vunpack.c.l.b16 %v509
        %v1022 = vunpack.c.l.b16 %v510
        %v1023 = vunpack.c.l.b16 %v511
        %v1024 = vunpack.c.l.b16 %v512
        %v1025 = vunpack.c.l.b16 %v513
        %v1026 = vunpack.c.l.b16 %v514
        %v1027 = vunpack.c.l.b16 %v515
        %v1028 = vunpack.c.l.b16 %v516
        %v1029 = vunpack.c.l.b16 %v517
        %v1030 = vunpack.c.l.b16 %v518
        %v1031 = vunpack.c.l.b16 %v519
        %v1032 = vunpack.c.l.b16 %v520
        %v1033 = vunpack.c.l.b16 %v521
        %v1034 = vunpack.c.l.b16 %v522
        %v1035 = vunpack.c.l.b16 %v523
        %v1036 = vunpack.c.l.b16 %v524
        %v1037 = vunpack.c.l.b16 %v525
        %v1038 = vunpack.c.l.b16 %v526
        %v1039 = vunpack.c.l.b16 %v527
        %v1040 = vunpack.c.l.b16 %v528
        %v1041 = vunpack.c.l.b16 %v529
        %v1042 = vunpack.c.l.b16 %v530
        %v1043 = vunpack.c.l.b16 %v531
        %v1044 = vunpack.c.l.b16 %v532
        %v1045 = vunpack.c.l.b16 %v533
        %v1046 = vunpack.c.l.b16 %v534
        %v1047 = vunpack.c.l.b16 %v535
        %v1048 = vunpack.c.l.b16 %v536
        %v1049 = vunpack.c.l.b16 %v537
        %v1050 = vunpack.c.l.b16 %v538
        %v1051 = vunpack.c.l.b16 %v539
        %v1052 = vunpack.c.l.b16 %v540
        %v1053 = vunpack.c.l.b16 %v541
        %v1054 = vunpack.c.l.b16 %v542
        %v1055 = vunpack.c.l.b16 %v543
        %v1056 = vunpack.c.l.b16 %v544
        %v1057 = vunpack.c.l.b16 %v545
        %v1058 = vunpack.c.l.b16 %v546
        %v1059 = vunpack.c.l.b16 %v547
        %v1060 = vunpack.c.l.b16 %v548
        %v1061 = vunpack.c.l.b16 %v549
        %v1062 = vunpack.c.l.b16 %v550
        %v1063 = vunpack.c.l.b16 %v551
        %v1064 = vunpack.c.l.b16 %v552
        %v1065 = vunpack.c.l.b16 %v553
        %v1066 = vunpack.c.l.b16 %v554
        %v1067 = vunpack.c.l.b16 %v555
        %v1068 = vunpack.c.l.b16 %v556
        %v1069 = vunpack.c.l.b16 %v557
        %v1070 = vunpack.c.l.b16 %v558
        %v1071 = vunpack.c.l.b16 %v559
        %v1072 = vunpack.c.l.b16 %v560
        %v1073 = vunpack.c.l.b16 %v561
        %v1074 = vunpack.c.l.b16 %v562
        %v1075 = vunpack.c.l.b16 %v563
        %v1076 = vunpack.c.l.b16 %v564
        %v1077 = vunpack.c.l.b16 %v565
        %v1078 = vunpack.c.l.b16 %v566
        %v1079 = vunpack.c.l.b16 %v567
        %v1080 = vunpack.c.l.b16 %v568
        %v1081 = vunpack.c.l.b16 %v569
        %v1082 = vunpack.c.l.b16 %v570
        %v1083 = vunpack.c.l.b16 %v571
        %v1084 = vunpack.c.l.b16 %v572
        %v1085 = vunpack.c.l.b16 %v573
        %v1086 = vunpack.c.l.b16 %v574
        %v1087 = vunpack.c.l.b16 %v575
        %v1088 = vunpack.c.l.b16 %v576
        %v1089 = vunpack.c.l.b16 %v577
        %v1090 = vunpack.c.l.b16 %v578
        %v1091 = vunpack.c.l.b16 %v579
        %v1092 = vunpack.c.l.b16 %v580
        %v1093 = vunpack.c.l.b16 %v581
        %v1094 = vunpack.c.l.b16 %v582
        %v1095 = vunpack.c.l.b16 %v583
        %v1096 = vunpack.c.l.b16 %v584
        %v1097 = vunpack.c.l.b16 %v585
        %v1098 = vunpack.c.l.b16 %v586
        %v1099 = vunpack.c.l.b16 %v587
        %v1100 = vunpack.c.l.b16 %v588
        %v1101 = vunpack.c.l.b16 %v589
        %v1102 = vunpack.c.l.b16 %v590
        %v1103 = vunpack.c.l.b16 %v591
        %v1104 = vunpack.c.l.b16 %v592
        %v1105 = vunpack.c.l.b16 %v593
        %v1106 = vunpack.c.l.b16 %v594
        %v1107 = vunpack.c.l.b16 %v595
        %v1108 = vunpack.c.l.b16 %v596
        %v1109 = vunpack.c.l.b16 %v597
        %v1110 = vunpack.c.l.b16 %v598
        %v1111 = vunpack.c.l.b16 %v599
        %v1112 = vunpack.c.l.b16 %v600
        %v1113 = vpack.c.b16 %v858, %v857
        %v1114 = vpack.c.b16 %v860, %v859
        %v1115 = vpack.c.b16 %v862, %v861
        %v1116 = vpack.c.b16 %v864, %v863
        %v1117 = vpack.c.b16 %v866, %v865
        %v1118 = vpack.c.b16 %v868, %v867
        %v1119 = vpack.c.b16 %v870, %v869
        %v1120 = vpack.c.b16 %v872, %v871
        %v1121 = vpack.c.b16 %v874, %v873
        %v1122 = vpack.c.b16 %v876, %v875
        %v1123 = vpack.c.b16 %v878, %v877
        %v1124 = vpack.c.b16 %v880, %v879
        %v1125 = vpack.c.b16 %v882, %v881
        %v1126 = vpack.c.b16 %v884, %v883
        %v1127 = vpack.c.b16 %v886, %v885
        %v1128 = vpack.c.b16 %v888, %v887
        %v1129 = vpack.c.b16 %v890, %v889
        %v1130 = vpack.c.b16 %v892, %v891
        %v1131 = vpack.c.b16 %v894, %v893
        %v1132 = vpack.c.b16 %v896, %v895
        %v1133 = vpack.c.b16 %v898, %v897
        %v1134 = vpack.c.b16 %v900, %v899
        %v1135 = vpack.c.b16 %v902, %v901
        %v1136 = vpack.c.b16 %v904, %v903
        %v1137 = vpack.c.b16 %v906, %v905
        %v1138 = vpack.c.b16 %v908, %v907
        %v1139 = vpack.c.b16 %v910, %v909
        %v1140 = vpack.c.b16 %v912, %v911
        %v1141 = vpack.c.b16 %v914, %v913
        %v1142 = vpack.c.b16 %v916, %v915
        %v1143 = vpack.c.b16 %v918, %v917
        %v1144 = vpack.c.b16 %v920, %v919
        %v1145 = vpack.c.b16 %v922, %v921
        %v1146 = vpack.c.b16 %v924, %v923
        %v1147 = vpack.c.b16 %v926, %v925
        %v1148 = vpack.c.b16 %v928, %v927
        %v1149 = vpack.c.b16 %v930, %v929
        %v1150 = vpack.c.b16 %v932, %v931
        %v1151 = vpack.c.b16 %v934, %v933
        %v1152 = vpack.c.b16 %v936, %v935
        %v1153 = vpack.c.b16 %v938, %v937
        %v1154 = vpack.c.b16 %v940, %v939
        %v1155 = vpack.c.b16 %v942, %v941
        %v1156 = vpack.c.b16 %v944, %v943
        %v1157 = vpack.c.b16 %v946, %v945
        %v1158 = vpack.c.b16 %v948, %v947
        %v1159 = vpack.c.b16 %v950, %v949
        %v1160 = vpack.c.b16 %v952, %v951
        %v1161 = vpack.c.b16 %v954, %v953
        %v1162 = vpack.c.b16 %v956, %v955
        %v1163 = vpack.c.b16 %v958, %v957
        %v1164 = vpack.c.b16 %v960, %v959
        %v1165 = vpack.c.b16 %v962, %v961
        %v1166 = vpack.c.b16 %v964, %v963
        %v1167 = vpack.c.b16 %v966, %v965
        %v1168 = vpack.c.b16 %v968, %v967
        %v1169 = vpack.c.b16 %v970, %v969
        %v1170 = vpack.c.b16 %v972, %v971
        %v1171 = vpack.c.b16 %v974, %v973
        %v1172 = vpack.c.b16 %v976, %v975
        %v1173 = vpack.c.b16 %v978, %v977
        %v1174 = vpack.c.b16 %v980, %v979
        %v1175 = vpack.c.b16 %v982, %v981
        %v1176 = vpack.c.b16 %v984, %v983
        %v1177 = vpack.c.b16 %v986, %v985
        %v1178 = vpack.c.b16 %v988, %v987
        %v1179 = vpack.c.b16 %v990, %v989
        %v1180 = vpack.c.b16 %v992, %v991
        %v1181 = vpack.c.b16 %v994, %v993
        %v1182 = vpack.c.b16 %v996, %v995
        %v1183 = vpack.c.b16 %v998, %v997
        %v1184 = vpack.c.b16 %v1000, %v999
        %v1185 = vpack.c.b16 %v1002, %v1001
        %v1186 = vpack.c.b16 %v1004, %v1003
        %v1187 = vpack.c.b16 %v1006, %v1005
        %v1188 = vpack.c.b16 %v1008, %v1007
        %v1189 = vpack.c.b16 %v1010, %v1009
        %v1190 = vpack.c.b16 %v1012, %v1011
        %v1191 = vpack.c.b16 %v1014, %v1013
        %v1192 = vpack.c.b16 %v1016, %v1015
        %v1193 = vpack.c.b16 %v1018, %v1017
        %v1194 = vpack.c.b16 %v1020, %v1019
        %v1195 = vpack.c.b16 %v1022, %v1021
        %v1196 = vpack.c.b16 %v1024, %v1023
        %v1197 = vpack.c.b16 %v1026, %v1025
        %v1198 = vpack.c.b16 %v1028, %v1027
        %v1199 = vpack.c.b16 %v1030, %v1029
        %v1200 = vpack.c.b16 %v1032, %v1031
        %v1201 = vpack.c.b16 %v1034, %v1033
        %v1202 = vpack.c.b16 %v1036, %v1035
        %v1203 = vpack.c.b16 %v1038, %v1037
        %v1204 = vpack.c.b16 %v1040, %v1039
        %v1205 = vpack.c.b16 %v1042, %v1041
        %v1206 = vpack.c.b16 %v1044, %v1043
        %v1207 = vpack.c.b16 %v1046, %v1045
        %v1208 = vpack.c.b16 %v1048, %v1047
        %v1209 = vpack.c.b16 %v1050, %v1049
        %v1210 = vpack.c.b16 %v1052, %v1051
        %v1211 = vpack.c.b16 %v1054, %v1053
        %v1212 = vpack.c.b16 %v1056, %v1055
        %v1213 = vpack.c.b16 %v1058, %v1057
        %v1214 = vpack.c.b16 %v1060, %v1059
        %v1215 = vpack.c.b16 %v1062, %v1061
        %v1216 = vpack.c.b16 %v1064, %v1063
        %v1217 = vpack.c.b16 %v1066, %v1065
        %v1218 = vpack.c.b16 %v1068, %v1067
        %v1219 = vpack.c.b16 %v1070, %v1069
        %v1220 = vpack.c.b16 %v1072, %v1071
        %v1221 = vpack.c.b16 %v1074, %v1073
        %v1222 = vpack.c.b16 %v1076, %v1075
        %v1223 = vpack.c.b16 %v1078, %v1077
        %v1224 = vpack.c.b16 %v1080, %v1079
        %v1225 = vpack.c.b16 %v1082, %v1081
        %v1226 = vpack.c.b16 %v1084, %v1083
        %v1227 = vpack.c.b16 %v1086, %v1085
        %v1228 = vpack.c.b16 %v1088, %v1087
        %v1229 = vpack.c.b16 %v1090, %v1089
        %v1230 = vpack.c.b16 %v1092, %v1091
        %v1231 = vpack.c.b16 %v1094, %v1093
        %v1232 = vpack.c.b16 %v1096, %v1095
        %v1233 = vpack.c.b16 %v1098, %v1097
        %v1234 = vpack.c.b16 %v1100, %v1099
        %v1235 = vpack.c.b16 %v1102, %v1101
        %v1236 = vpack.c.b16 %v1104, %v1103
        %v1237 = vpack.c.b16 %v1106, %v1105
        %v1238 = vpack.c.b16 %v1108, %v1107
        %v1239 = vpack.c.b16 %v1110, %v1109
        %v1240 = vpack.c.b16 %v1112, %v1111
        %1369 = vmatprep.subr.bf16.mxu0 0
        %1370 = vmatpush1.bf16.msra.mxu0 %v1120
        %1371 = vmatprep.subr.bf16.mxu0 0
        %1372 = vmatpush1.bf16.msra.mxu0 %v1119
        %1373 = vmatprep.subr.bf16.mxu0 0
        %1374 = vmatpush1.bf16.msra.mxu0 %v1118
        %1375 = vmatprep.subr.bf16.mxu0 0
        %1376 = vmatpush1.bf16.msra.mxu0 %v1117
        %1377 = vmatprep.subr.bf16.mxu0 0
        %1378 = vmatpush1.bf16.msra.mxu0 %v1116
        %1379 = vmatprep.subr.bf16.mxu0 0
        %1380 = vmatpush1.bf16.msra.mxu0 %v1115
        %1381 = vmatprep.subr.bf16.mxu0 0
        %1382 = vmatpush1.bf16.msra.mxu0 %v1114
        %1383 = vmatprep.subr.bf16.mxu0 0
        %1384 = vmatpush1.bf16.msra.mxu0 %v1113
        %1385 = vmatprep.subr.bf16.mxu0 0
        %1386 = vmatpush2.bf16.msra.mxu0 %v1128
        %1387 = vmatprep.subr.bf16.mxu0 0
        %1388 = vmatpush2.bf16.msra.mxu0 %v1127
        %1389 = vmatprep.subr.bf16.mxu0 0
        %1390 = vmatpush2.bf16.msra.mxu0 %v1126
        %1391 = vmatprep.subr.bf16.mxu0 0
        %1392 = vmatpush2.bf16.msra.mxu0 %v1125
        %1393 = vmatprep.subr.bf16.mxu0 0
        %1394 = vmatpush2.bf16.msra.mxu0 %v1124
        %1395 = vmatprep.subr.bf16.mxu0 0
        %1396 = vmatpush2.bf16.msra.mxu0 %v1123
        %1397 = vmatprep.subr.bf16.mxu0 0
        %1398 = vmatpush2.bf16.msra.mxu0 %v1122
        %1399 = vmatprep.subr.bf16.mxu0 0
        %1400 = vmatpush2.bf16.msra.mxu0 %v1121
        %1401 = vmatprep.mubr.bf16.mxu0 %v244
        %1402 = vmatmul.mubr.bf16.gmra.mxu0 %v236
        %v1403 = vpop.f32.mrf.mxu0
        %v1404 = vadd.f32 0.0, %v1403
        %v1405 = vpop.f32.mrf.mxu0
        %v1406 = vpop.f32.mrf.mxu0
        %v1407 = vadd.f32 0.0, %v1406
        %v1408 = vpop.f32.mrf.mxu0
        %1409 = vdwg.mxu0
        %1410 = vmatprep.subr.bf16.mxu0 0
        %1411 = vmatpush1.bf16.msra.mxu0 %v1136
        %1412 = vmatprep.subr.bf16.mxu0 0
        %1413 = vmatpush1.bf16.msra.mxu0 %v1135
        %1414 = vmatprep.subr.bf16.mxu0 0
        %1415 = vmatpush1.bf16.msra.mxu0 %v1134
        %1416 = vmatprep.subr.bf16.mxu0 0
        %1417 = vmatpush1.bf16.msra.mxu0 %v1133
        %1418 = vmatprep.subr.bf16.mxu0 0
        %1419 = vmatpush1.bf16.msra.mxu0 %v1132
        %1420 = vmatprep.subr.bf16.mxu0 0
        %1421 = vmatpush1.bf16.msra.mxu0 %v1131
        %1422 = vmatprep.subr.bf16.mxu0 0
        %1423 = vmatpush1.bf16.msra.mxu0 %v1130
        %1424 = vmatprep.subr.bf16.mxu0 0
        %1425 = vmatpush1.bf16.msra.mxu0 %v1129
        %1426 = vmatprep.subr.bf16.mxu0 0
        %1427 = vmatpush2.bf16.msra.mxu0 %v1144
        %1428 = vmatprep.subr.bf16.mxu0 0
        %1429 = vmatpush2.bf16.msra.mxu0 %v1143
        %1430 = vmatprep.subr.bf16.mxu0 0
        %1431 = vmatpush2.bf16.msra.mxu0 %v1142
        %1432 = vmatprep.subr.bf16.mxu0 0
        %1433 = vmatpush2.bf16.msra.mxu0 %v1141
        %1434 = vmatprep.subr.bf16.mxu0 0
        %1435 = vmatpush2.bf16.msra.mxu0 %v1140
        %1436 = vmatprep.subr.bf16.mxu0 0
        %1437 = vmatpush2.bf16.msra.mxu0 %v1139
        %1438 = vmatprep.subr.bf16.mxu0 0
        %1439 = vmatpush2.bf16.msra.mxu0 %v1138
        %1440 = vmatprep.subr.bf16.mxu0 0
        %1441 = vmatpush2.bf16.msra.mxu0 %v1137
        %1442 = vmatprep.mubr.bf16.mxu0 %v259
        %1443 = vmatmul.mubr.bf16.gmra.mxu0 %v246
        %v1444 = vpop.f32.mrf.mxu0
        %v1445 = vadd.f32 %v1404, %v1444
        %v1446 = vpop.f32.mrf.mxu0
        %v1447 = vpop.f32.mrf.mxu0
        %v1448 = vadd.f32 %v1407, %v1447
        %v1449 = vpop.f32.mrf.mxu0
        %1450 = vdwg.mxu0
        %1451 = vmatprep.subr.bf16.mxu0 0
        %1452 = vmatpush1.bf16.msra.mxu0 %v1152
        %1453 = vmatprep.subr.bf16.mxu0 0
        %1454 = vmatpush1.bf16.msra.mxu0 %v1151
        %1455 = vmatprep.subr.bf16.mxu0 0
        %1456 = vmatpush1.bf16.msra.mxu0 %v1150
        %1457 = vmatprep.subr.bf16.mxu0 0
        %1458 = vmatpush1.bf16.msra.mxu0 %v1149
        %1459 = vmatprep.subr.bf16.mxu0 0
        %1460 = vmatpush1.bf16.msra.mxu0 %v1148
        %1461 = vmatprep.subr.bf16.mxu0 0
        %1462 = vmatpush1.bf16.msra.mxu0 %v1147
        %1463 = vmatprep.subr.bf16.mxu0 0
        %1464 = vmatpush1.bf16.msra.mxu0 %v1146
        %1465 = vmatprep.subr.bf16.mxu0 0
        %1466 = vmatpush1.bf16.msra.mxu0 %v1145
        %1467 = vmatprep.subr.bf16.mxu0 0
        %1468 = vmatpush2.bf16.msra.mxu0 %v1160
        %1469 = vmatprep.subr.bf16.mxu0 0
        %1470 = vmatpush2.bf16.msra.mxu0 %v1159
        %1471 = vmatprep.subr.bf16.mxu0 0
        %1472 = vmatpush2.bf16.msra.mxu0 %v1158
        %1473 = vmatprep.subr.bf16.mxu0 0
        %1474 = vmatpush2.bf16.msra.mxu0 %v1157
        %1475 = vmatprep.subr.bf16.mxu0 0
        %1476 = vmatpush2.bf16.msra.mxu0 %v1156
        %1477 = vmatprep.subr.bf16.mxu0 0
        %1478 = vmatpush2.bf16.msra.mxu0 %v1155
        %1479 = vmatprep.subr.bf16.mxu0 0
        %1480 = vmatpush2.bf16.msra.mxu0 %v1154
        %1481 = vmatprep.subr.bf16.mxu0 0
        %1482 = vmatpush2.bf16.msra.mxu0 %v1153
        %1483 = vmatprep.mubr.bf16.mxu0 %v273
        %1484 = vmatmul.mubr.bf16.gmra.mxu0 %v265
        %v1485 = vpop.f32.mrf.mxu0
        %v1486 = vadd.f32 %v1445, %v1485
        %v1487 = vpop.f32.mrf.mxu0
        %v1488 = vpop.f32.mrf.mxu0
        %v1489 = vadd.f32 %v1448, %v1488
        %v1490 = vpop.f32.mrf.mxu0
        %1491 = vdwg.mxu0
        %1492 = vmatprep.subr.bf16.mxu0 0
        %1493 = vmatpush1.bf16.msra.mxu0 %v1168
        %1494 = vmatprep.subr.bf16.mxu0 0
        %1495 = vmatpush1.bf16.msra.mxu0 %v1167
        %1496 = vmatprep.subr.bf16.mxu0 0
        %1497 = vmatpush1.bf16.msra.mxu0 %v1166
        %1498 = vmatprep.subr.bf16.mxu0 0
        %1499 = vmatpush1.bf16.msra.mxu0 %v1165
        %1500 = vmatprep.subr.bf16.mxu0 0
        %1501 = vmatpush1.bf16.msra.mxu0 %v1164
        %1502 = vmatprep.subr.bf16.mxu0 0
        %1503 = vmatpush1.bf16.msra.mxu0 %v1163
        %1504 = vmatprep.subr.bf16.mxu0 0
        %1505 = vmatpush1.bf16.msra.mxu0 %v1162
        %1506 = vmatprep.subr.bf16.mxu0 0
        %1507 = vmatpush1.bf16.msra.mxu0 %v1161
        %1508 = vmatprep.subr.bf16.mxu0 0
        %1509 = vmatpush2.bf16.msra.mxu0 %v1176
        %1510 = vmatprep.subr.bf16.mxu0 0
        %1511 = vmatpush2.bf16.msra.mxu0 %v1175
        %1512 = vmatprep.subr.bf16.mxu0 0
        %1513 = vmatpush2.bf16.msra.mxu0 %v1174
        %1514 = vmatprep.subr.bf16.mxu0 0
        %1515 = vmatpush2.bf16.msra.mxu0 %v1173
        %1516 = vmatprep.subr.bf16.mxu0 0
        %1517 = vmatpush2.bf16.msra.mxu0 %v1172
        %1518 = vmatprep.subr.bf16.mxu0 0
        %1519 = vmatpush2.bf16.msra.mxu0 %v1171
        %1520 = vmatprep.subr.bf16.mxu0 0
        %1521 = vmatpush2.bf16.msra.mxu0 %v1170
        %1522 = vmatprep.subr.bf16.mxu0 0
        %1523 = vmatpush2.bf16.msra.mxu0 %v1169
        %1524 = vmatprep.mubr.bf16.mxu0 %v287
        %1525 = vmatmul.mubr.bf16.gmra.mxu0 %v275
        %v1526 = vpop.f32.mrf.mxu0
        %v1527 = vadd.f32 %v1486, %v1526
        %v1528 = vpop.f32.mrf.mxu0
        %v1529 = vpop.f32.mrf.mxu0
        %v1530 = vadd.f32 %v1489, %v1529
        %v1531 = vpop.f32.mrf.mxu0
        %1532 = vdwg.mxu0
        %1533 = vmatprep.subr.bf16.mxu0 0
        %1534 = vmatpush1.bf16.msra.mxu0 %v1184
        %1535 = vmatprep.subr.bf16.mxu0 0
        %1536 = vmatpush1.bf16.msra.mxu0 %v1183
        %1537 = vmatprep.subr.bf16.mxu0 0
        %1538 = vmatpush1.bf16.msra.mxu0 %v1182
        %1539 = vmatprep.subr.bf16.mxu0 0
        %1540 = vmatpush1.bf16.msra.mxu0 %v1181
        %1541 = vmatprep.subr.bf16.mxu0 0
        %1542 = vmatpush1.bf16.msra.mxu0 %v1180
        %1543 = vmatprep.subr.bf16.mxu0 0
        %1544 = vmatpush1.bf16.msra.mxu0 %v1179
        %1545 = vmatprep.subr.bf16.mxu0 0
        %1546 = vmatpush1.bf16.msra.mxu0 %v1178
        %1547 = vmatprep.subr.bf16.mxu0 0
        %1548 = vmatpush1.bf16.msra.mxu0 %v1177
        %1549 = vmatprep.subr.bf16.mxu0 0
        %1550 = vmatpush2.bf16.msra.mxu0 %v1192
        %1551 = vmatprep.subr.bf16.mxu0 0
        %1552 = vmatpush2.bf16.msra.mxu0 %v1191
        %1553 = vmatprep.subr.bf16.mxu0 0
        %1554 = vmatpush2.bf16.msra.mxu0 %v1190
        %1555 = vmatprep.subr.bf16.mxu0 0
        %1556 = vmatpush2.bf16.msra.mxu0 %v1189
        %1557 = vmatprep.subr.bf16.mxu0 0
        %1558 = vmatpush2.bf16.msra.mxu0 %v1188
        %1559 = vmatprep.subr.bf16.mxu0 0
        %1560 = vmatpush2.bf16.msra.mxu0 %v1187
        %1561 = vmatprep.subr.bf16.mxu0 0
        %1562 = vmatpush2.bf16.msra.mxu0 %v1186
        %1563 = vmatprep.subr.bf16.mxu0 0
        %1564 = vmatpush2.bf16.msra.mxu0 %v1185
        %1565 = vmatprep.mubr.bf16.mxu0 %v301
        %1566 = vmatmul.mubr.bf16.gmra.mxu0 %v293
        %v1567 = vpop.f32.mrf.mxu0
        %v1568 = vadd.f32 %v1527, %v1567
        %v1569 = vpop.f32.mrf.mxu0
        %v1570 = vpop.f32.mrf.mxu0
        %v1571 = vadd.f32 %v1530, %v1570
        %v1572 = vpop.f32.mrf.mxu0
        %1573 = vdwg.mxu0
        %1574 = vmatprep.subr.bf16.mxu0 0
        %1575 = vmatpush1.bf16.msra.mxu0 %v1200
        %1576 = vmatprep.subr.bf16.mxu0 0
        %1577 = vmatpush1.bf16.msra.mxu0 %v1199
        %1578 = vmatprep.subr.bf16.mxu0 0
        %1579 = vmatpush1.bf16.msra.mxu0 %v1198
        %1580 = vmatprep.subr.bf16.mxu0 0
        %1581 = vmatpush1.bf16.msra.mxu0 %v1197
        %1582 = vmatprep.subr.bf16.mxu0 0
        %1583 = vmatpush1.bf16.msra.mxu0 %v1196
        %1584 = vmatprep.subr.bf16.mxu0 0
        %1585 = vmatpush1.bf16.msra.mxu0 %v1195
        %1586 = vmatprep.subr.bf16.mxu0 0
        %1587 = vmatpush1.bf16.msra.mxu0 %v1194
        %1588 = vmatprep.subr.bf16.mxu0 0
        %1589 = vmatpush1.bf16.msra.mxu0 %v1193
        %1590 = vmatprep.subr.bf16.mxu0 0
        %1591 = vmatpush2.bf16.msra.mxu0 %v1208
        %1592 = vmatprep.subr.bf16.mxu0 0
        %1593 = vmatpush2.bf16.msra.mxu0 %v1207
        %1594 = vmatprep.subr.bf16.mxu0 0
        %1595 = vmatpush2.bf16.msra.mxu0 %v1206
        %1596 = vmatprep.subr.bf16.mxu0 0
        %1597 = vmatpush2.bf16.msra.mxu0 %v1205
        %1598 = vmatprep.subr.bf16.mxu0 0
        %1599 = vmatpush2.bf16.msra.mxu0 %v1204
        %1600 = vmatprep.subr.bf16.mxu0 0
        %1601 = vmatpush2.bf16.msra.mxu0 %v1203
        %1602 = vmatprep.subr.bf16.mxu0 0
        %1603 = vmatpush2.bf16.msra.mxu0 %v1202
        %1604 = vmatprep.subr.bf16.mxu0 0
        %1605 = vmatpush2.bf16.msra.mxu0 %v1201
        %1606 = vmatprep.mubr.bf16.mxu0 %v315
        %1607 = vmatmul.mubr.bf16.gmra.mxu0 %v303
        %v1608 = vpop.f32.mrf.mxu0
        %v1609 = vadd.f32 %v1568, %v1608
        %v1610 = vpop.f32.mrf.mxu0
        %v1611 = vpop.f32.mrf.mxu0
        %v1612 = vadd.f32 %v1571, %v1611
        %v1613 = vpop.f32.mrf.mxu0
        %1614 = vdwg.mxu0
        %1615 = vmatprep.subr.bf16.mxu0 0
        %1616 = vmatpush1.bf16.msra.mxu0 %v1216
        %1617 = vmatprep.subr.bf16.mxu0 0
        %1618 = vmatpush1.bf16.msra.mxu0 %v1215
        %1619 = vmatprep.subr.bf16.mxu0 0
        %1620 = vmatpush1.bf16.msra.mxu0 %v1214
        %1621 = vmatprep.subr.bf16.mxu0 0
        %1622 = vmatpush1.bf16.msra.mxu0 %v1213
        %1623 = vmatprep.subr.bf16.mxu0 0
        %1624 = vmatpush1.bf16.msra.mxu0 %v1212
        %1625 = vmatprep.subr.bf16.mxu0 0
        %1626 = vmatpush1.bf16.msra.mxu0 %v1211
        %1627 = vmatprep.subr.bf16.mxu0 0
        %1628 = vmatpush1.bf16.msra.mxu0 %v1210
        %1629 = vmatprep.subr.bf16.mxu0 0
        %1630 = vmatpush1.bf16.msra.mxu0 %v1209
        %1631 = vmatprep.subr.bf16.mxu0 0
        %1632 = vmatpush2.bf16.msra.mxu0 %v1224
        %1633 = vmatprep.subr.bf16.mxu0 0
        %1634 = vmatpush2.bf16.msra.mxu0 %v1223
        %1635 = vmatprep.subr.bf16.mxu0 0
        %1636 = vmatpush2.bf16.msra.mxu0 %v1222
        %1637 = vmatprep.subr.bf16.mxu0 0
        %1638 = vmatpush2.bf16.msra.mxu0 %v1221
        %1639 = vmatprep.subr.bf16.mxu0 0
        %1640 = vmatpush2.bf16.msra.mxu0 %v1220
        %1641 = vmatprep.subr.bf16.mxu0 0
        %1642 = vmatpush2.bf16.msra.mxu0 %v1219
        %1643 = vmatprep.subr.bf16.mxu0 0
        %1644 = vmatpush2.bf16.msra.mxu0 %v1218
        %1645 = vmatprep.subr.bf16.mxu0 0
        %1646 = vmatpush2.bf16.msra.mxu0 %v1217
        %1647 = vmatprep.mubr.bf16.mxu0 %v329
        %1648 = vmatmul.mubr.bf16.gmra.mxu0 %v321
        %v1649 = vpop.f32.mrf.mxu0
        %v1650 = vadd.f32 %v1609, %v1649
        %v1651 = vpop.f32.mrf.mxu0
        %v1652 = vpop.f32.mrf.mxu0
        %v1653 = vadd.f32 %v1612, %v1652
        %v1654 = vpop.f32.mrf.mxu0
        %1655 = vdwg.mxu0
        %1656 = vmatprep.subr.bf16.mxu0 0
        %1657 = vmatpush1.bf16.msra.mxu0 %v1232
        %1658 = vmatprep.subr.bf16.mxu0 0
        %1659 = vmatpush1.bf16.msra.mxu0 %v1231
        %1660 = vmatprep.subr.bf16.mxu0 0
        %1661 = vmatpush1.bf16.msra.mxu0 %v1230
        %1662 = vmatprep.subr.bf16.mxu0 0
        %1663 = vmatpush1.bf16.msra.mxu0 %v1229
        %1664 = vmatprep.subr.bf16.mxu0 0
        %1665 = vmatpush1.bf16.msra.mxu0 %v1228
        %1666 = vmatprep.subr.bf16.mxu0 0
        %1667 = vmatpush1.bf16.msra.mxu0 %v1227
        %1668 = vmatprep.subr.bf16.mxu0 0
        %1669 = vmatpush1.bf16.msra.mxu0 %v1226
        %1670 = vmatprep.subr.bf16.mxu0 0
        %1671 = vmatpush1.bf16.msra.mxu0 %v1225
        %1672 = vmatprep.subr.bf16.mxu0 0
        %1673 = vmatpush2.bf16.msra.mxu0 %v1240
        %1674 = vmatprep.subr.bf16.mxu0 0
        %1675 = vmatpush2.bf16.msra.mxu0 %v1239
        %1676 = vmatprep.subr.bf16.mxu0 0
        %1677 = vmatpush2.bf16.msra.mxu0 %v1238
        %1678 = vmatprep.subr.bf16.mxu0 0
        %1679 = vmatpush2.bf16.msra.mxu0 %v1237
        %1680 = vmatprep.subr.bf16.mxu0 0
        %1681 = vmatpush2.bf16.msra.mxu0 %v1236
        %1682 = vmatprep.subr.bf16.mxu0 0
        %1683 = vmatpush2.bf16.msra.mxu0 %v1235
        %1684 = vmatprep.subr.bf16.mxu0 0
        %1685 = vmatpush2.bf16.msra.mxu0 %v1234
        %1686 = vmatprep.subr.bf16.mxu0 0
        %1687 = vmatpush2.bf16.msra.mxu0 %v1233
        %1688 = vmatprep.mubr.bf16.mxu0 %v343
        %1689 = vmatmul.mubr.bf16.gmra.mxu0 %v331
        %v1690 = vpop.f32.mrf.mxu0
        %v1691 = vadd.f32 %v1650, %v1690
        %v1692 = vpop.f32.mrf.mxu0
        %v1693 = vpop.f32.mrf.mxu0
        %v1694 = vadd.f32 %v1653, %v1693
        %v1695 = vpop.f32.mrf.mxu0
        %1696 = vdwg.mxu0
        %v1697 = vld [vmem:[%s2] sm:$0x1]
        %v1699 = vlaneseq
        %v1700 = vshrl.u32 %v1699, 7
        %v1701 = vsub.s32 0, %v1700
        %v1702 = vrot.slane %v1697, %v1701
        %v1704 = vmul.f32 %v1691, %v1702
        %v1705 = vmul.f32 %v1694, %v1702
        %v1706 = vld [vmem:[%s3] sm:$0x1]
        %v1708 = vlaneseq
        %v1709 = vshrl.u32 %v1708, 7
        %v1710 = vsub.s32 0, %v1709
        %v1711 = vrot.slane %v1706, %v1710
        %v1713 = vadd.f32 %v1704, %v1711
        %v1714 = vadd.f32 %v1705, %v1711
        %vm1715 = vcmp.ge.f32.partialorder %v1713, 0.0
        %vm1716 = vcmp.ge.f32.partialorder %v1714, 0.0
        %v1717 = vmul.f32 %v1713, 0.2
        %v1718 = vmul.f32 %v1714, 0.2
        %v1719 = vsel %vm1715, %v1713, %v1717
        %v1720 = vsel %vm1716, %v1714, %v1718
        %v1721 = vpack.c.bf16 %v1720, %v1719
        %v1723 = vunpack.c.l.b16 %v1721
        %v1724 = vunpack.c.h.b16 %v1721
        %v1725 = vpack.c.b16 %v1723, %v1723
        %v1726 = vpack.c.b16 %v1724, %v1724
        %s1729 = smul.u32 %s200, 2
        %s1730 = smul.addr %s1729, 4
        %s1731 = scalar_lea.vmem %s197, %s1730
        %1732 = vst [vmem:[%s1731] sm:$0xf] %v1725
        %1733 = vst [vmem:[%s1731 + $0x4] sm:$0x7] %v1726
      $region41: #{_lambda_.4} parent=35 // loop_footer
        %s204 = sadd.s32 1, %s200
      $region42: #{_lambda_.4} parent=35 // loop_footer_branch
        %199 = sbr.rel target = $region38
      $region43: #{_lambda_.4} parent=35 // loop_exit
        _
      %p1734 = scmp.lt.s32.totalorder %s15, 1
      %s1735 = scalar_select %p1734, %s15, 1
      %s1736 = smul.addr %s1735, 28
      %s1737 = smul.addr %s1736, 4
      %s1738 = scalar_lea.vmem %s4, %s1737
      // Predicated region
      $region44: #{_lambda_.4} parent=35 // pred_check
        %p1739 = pneg %p122
      $region45: #{_lambda_.4} parent=35 // pred_check_branch
        %1741 = sbr.rel (%p1739) target = $region47
      $region46: #{_lambda_.4} parent=35 // pred_region
        _
      $region47: #{_lambda_.4} parent=35 // pred_fallthru
        _
    $region36: #{_lambda_.4} parent=5 // pred_fallthru
      _
    %p1742 = scmp.le.s32.totalorder 2, %s10
    // Predicated region
    $region48: #{_lambda_.4} parent=5 // pred_check
      %p1743 = pneg %p1742
    $region49: #{_lambda_.4} parent=5 // pred_check_branch
      %1745 = sbr.rel (%p1743) target = $region51
    $region50: #{_lambda_.4} parent=5 // pred_region
      %s1746 = ssub.s32 %s10, 2
      // Predicated region
      $region52: #{_lambda_.4} parent=50 // pred_check
        %p1747 = pneg %p128
      $region53: #{_lambda_.4} parent=50 // pred_check_branch
        %1749 = sbr.rel (%p1747) target = $region55
      $region54: #{_lambda_.4} parent=50 // pred_region
        %p1750 = scmp.lt.s32.totalorder %s16, 1
        %s1751 = scalar_select %p1750, %s16, 1
        %s1752 = smul.addr %s1751, 28
        %s1753 = smul.addr %s1752, 4
        %s1754 = scalar_lea.vmem %s4, %s1753
      $region55: #{_lambda_.4} parent=50 // pred_fallthru
        _
    $region51: #{_lambda_.4} parent=5 // pred_fallthru
      _
  $region6: #{_lambda_.4} parent=0 // loop_footer
    %s14 = sadd.s32 1, %s10
  $region7: #{_lambda_.4} parent=0 // loop_footer_branch
    %9 = sbr.rel target = $region3
  $region8: #{_lambda_.4} parent=0 // loop_exit
    _

// kernel: _lambda_.3
$region0: #{_lambda_.3}
  #allocation0 [shape = 'u32[]', space=smem, size = 0x4, offset = 0x4, fixed_abs, tag = 'smem constant byte address 0x4 - core index']
  #allocation1 [shape = 'u32[144,128]{1,0:T(1,128)}', space=vmem, size = 0x12000, scoped, tag = 'internal scratch']
  %s0 = inlined_call_operand.vmem [shape: bf16[2,18,18,128], index: 0, kind: input, shape index: {}]
  %s1 = inlined_call_operand.vmem [shape: bf16[2048,128], index: 1, kind: input, shape index: {}]
  %s2 = inlined_call_operand.vmem [shape: f32[1,128], index: 2, kind: input, shape index: {}]
  %s3 = inlined_call_operand.vmem [shape: f32[1,128], index: 3, kind: input, shape index: {}]
  %s4 = inlined_call_operand.vmem [shape: bf16[2,15,15,128], index: 4, kind: output, shape index: {}]
  %s5 = sld [smem:[#allocation0]]
  $region56: #{_lambda_.3} parent=0
    _
  %s7 = ssub.s32 1, %s5
  %s8 = scalar_select 0, %s7, %s5
  loop: start=0, step=1, limit=4
  $region2: #{_lambda_.3} parent=0 // loop_pre_header
    _
  $region3: #{_lambda_.3} parent=0 // loop_header
    %s10 = sphi 0, %s14
    %p11 = scmp.ge.s32.totalorder %s10, 4
    %s20 = sphi 0, %s22
    %s23 = sphi 0, %s20
    %s24 = sphi 0, %s23
    %s40 = sphi 0, %s24
    %s44 = sphi 0, %s44
    %s46 = sphi 0, %s44
    %s47 = sphi 0, %s46
    %s61 = sphi 0, %s47
    %s65 = sphi 0, %s65
    %s67 = sphi 0, %s65
    %s68 = sphi 0, %s67
    %s82 = sphi 0, %s68
    %s86 = sphi 0, %s86
    %s88 = sphi 0, %s86
    %s89 = sphi 0, %s88
    %s103 = sphi 0, %s89
    %s109 = sphi 0, %s111
    %s112 = sphi 0, %s109
    %s113 = sphi 0, %s112
    %s129 = sphi 0, %s113
  $region4: #{_lambda_.3} parent=0 // loop_header_branch
    %13 = sbr.rel (%p11) target = $region8
  $region5: #{_lambda_.3} parent=0 // loop_body
    %s15 = ssub.s32 %s10, 1
    %s16 = ssub.s32 %s10, 2
    %s17 = sadd.s32 %s10, 1
    %s18 = ssub.s32 %s10, %s17
    %p19 = scmp.eq.s32.totalorder %s18, 0
    %s21 = sadd.s32 %s20, 1
    %s22 = scalar_select %p19, %s20, %s21
    %p25 = pneg %p19
    %p26 = scmp.eq.s32.totalorder %s10, 1
    %p27 = por %p25, %p26
    %p28 = scmp.ne.s32.totalorder %s20, %s23
    %p29 = scmp.eq.s32.totalorder %s10, 0
    %p30 = por %p28, %p29
    %p31 = scmp.ne.s32.totalorder %s20, %s23
    %p32 = scmp.eq.s32.totalorder %s15, 1
    %p33 = por %p31, %p32
    %p34 = scmp.ne.s32.totalorder %s23, %s24
    %p35 = scmp.eq.s32.totalorder %s15, 0
    %p36 = por %p34, %p35
    %p37 = scmp.ne.s32.totalorder %s23, %s24
    %p38 = scmp.eq.s32.totalorder %s16, 1
    %p39 = por %p37, %p38
    %p41 = scmp.ne.s32.totalorder %s24, %s40
    %p42 = scmp.eq.s32.totalorder %s16, 0
    %p43 = por %p41, %p42
    %s45 = sadd.s32 %s44, 1
    %p48 = scmp.eq.s32.totalorder %s10, 1
    %p49 = scmp.ne.s32.totalorder %s44, %s46
    %p50 = scmp.eq.s32.totalorder %s10, 0
    %p51 = por %p49, %p50
    %p52 = scmp.ne.s32.totalorder %s44, %s46
    %p53 = scmp.eq.s32.totalorder %s15, 1
    %p54 = por %p52, %p53
    %p55 = scmp.ne.s32.totalorder %s46, %s47
    %p56 = scmp.eq.s32.totalorder %s15, 0
    %p57 = por %p55, %p56
    %p58 = scmp.ne.s32.totalorder %s46, %s47
    %p59 = scmp.eq.s32.totalorder %s16, 1
    %p60 = por %p58, %p59
    %p62 = scmp.ne.s32.totalorder %s47, %s61
    %p63 = scmp.eq.s32.totalorder %s16, 0
    %p64 = por %p62, %p63
    %s66 = sadd.s32 %s65, 1
    %p69 = scmp.eq.s32.totalorder %s10, 1
    %p70 = scmp.ne.s32.totalorder %s65, %s67
    %p71 = scmp.eq.s32.totalorder %s10, 0
    %p72 = por %p70, %p71
    %p73 = scmp.ne.s32.totalorder %s65, %s67
    %p74 = scmp.eq.s32.totalorder %s15, 1
    %p75 = por %p73, %p74
    %p76 = scmp.ne.s32.totalorder %s67, %s68
    %p77 = scmp.eq.s32.totalorder %s15, 0
    %p78 = por %p76, %p77
    %p79 = scmp.ne.s32.totalorder %s67, %s68
    %p80 = scmp.eq.s32.totalorder %s16, 1
    %p81 = por %p79, %p80
    %p83 = scmp.ne.s32.totalorder %s68, %s82
    %p84 = scmp.eq.s32.totalorder %s16, 0
    %p85 = por %p83, %p84
    %s87 = sadd.s32 %s86, 1
    %p90 = scmp.eq.s32.totalorder %s10, 1
    %p91 = scmp.ne.s32.totalorder %s86, %s88
    %p92 = scmp.eq.s32.totalorder %s10, 0
    %p93 = por %p91, %p92
    %p94 = scmp.ne.s32.totalorder %s86, %s88
    %p95 = scmp.eq.s32.totalorder %s15, 1
    %p96 = por %p94, %p95
    %p97 = scmp.ne.s32.totalorder %s88, %s89
    %p98 = scmp.eq.s32.totalorder %s15, 0
    %p99 = por %p97, %p98
    %p100 = scmp.ne.s32.totalorder %s88, %s89
    %p101 = scmp.eq.s32.totalorder %s16, 1
    %p102 = por %p100, %p101
    %p104 = scmp.ne.s32.totalorder %s89, %s103
    %p105 = scmp.eq.s32.totalorder %s16, 0
    %p106 = por %p104, %p105
    %s107 = ssub.s32 %s10, %s17
    %p108 = scmp.eq.s32.totalorder %s107, 0
    %s110 = sadd.s32 %s109, 1
    %s111 = scalar_select %p108, %s109, %s110
    %p114 = pneg %p108
    %p115 = scmp.eq.s32.totalorder %s10, 1
    %p116 = por %p114, %p115
    %p117 = scmp.ne.s32.totalorder %s109, %s112
    %p118 = scmp.eq.s32.totalorder %s10, 0
    %p119 = por %p117, %p118
    %p120 = scmp.ne.s32.totalorder %s109, %s112
    %p121 = scmp.eq.s32.totalorder %s15, 1
    %p122 = por %p120, %p121
    %p123 = scmp.ne.s32.totalorder %s112, %s113
    %p124 = scmp.eq.s32.totalorder %s15, 0
    %p125 = por %p123, %p124
    %p126 = scmp.ne.s32.totalorder %s112, %s113
    %p127 = scmp.eq.s32.totalorder %s16, 1
    %p128 = por %p126, %p127
    %p130 = scmp.ne.s32.totalorder %s113, %s129
    %p131 = scmp.eq.s32.totalorder %s16, 0
    %p132 = por %p130, %p131
    %p133 = scmp.le.s32.totalorder 1, %s10
    %p134 = scmp.lt.s32.totalorder %s10, 3
    %p135 = pnand %p133, %p134
    %p136 = pneg %p135
    // Predicated region
    $region9: #{_lambda_.3} parent=5 // pred_check
      _
    $region10: #{_lambda_.3} parent=5 // pred_check_branch
      %138 = sbr.rel (%p135) target = $region12
    $region11: #{_lambda_.3} parent=5 // pred_region
      %s139 = ssub.s32 %s10, 1
      // Predicated region
      $region13: #{_lambda_.3} parent=11 // pred_check
        %p140 = pneg %p57
      $region14: #{_lambda_.3} parent=11 // pred_check_branch
        %142 = sbr.rel (%p140) target = $region16
      $region15: #{_lambda_.3} parent=11 // pred_region
        _
      $region16: #{_lambda_.3} parent=11 // pred_fallthru
        _
      // Predicated region
      $region17: #{_lambda_.3} parent=11 // pred_check
        %p143 = pneg %p78
      $region18: #{_lambda_.3} parent=11 // pred_check_branch
        %145 = sbr.rel (%p143) target = $region20
      $region19: #{_lambda_.3} parent=11 // pred_region
        _
      $region20: #{_lambda_.3} parent=11 // pred_fallthru
        _
      // Predicated region
      $region21: #{_lambda_.3} parent=11 // pred_check
        %p146 = pneg %p99
      $region22: #{_lambda_.3} parent=11 // pred_check_branch
        %148 = sbr.rel (%p146) target = $region24
      $region23: #{_lambda_.3} parent=11 // pred_region
        _
      $region24: #{_lambda_.3} parent=11 // pred_fallthru
        _
    $region12: #{_lambda_.3} parent=5 // pred_fallthru
      _
    %p149 = scmp.lt.s32.totalorder %s10, 2
    // Predicated region
    $region25: #{_lambda_.3} parent=5 // pred_check
      %p150 = pneg %p149
    $region26: #{_lambda_.3} parent=5 // pred_check_branch
      %152 = sbr.rel (%p150) target = $region28
    $region27: #{_lambda_.3} parent=5 // pred_region
      // Predicated region
      $region29: #{_lambda_.3} parent=27 // pred_check
        %p153 = pneg %p30
      $region30: #{_lambda_.3} parent=27 // pred_check_branch
        %155 = sbr.rel (%p153) target = $region32
      $region31: #{_lambda_.3} parent=27 // pred_region
        %p156 = scmp.lt.s32.totalorder %s10, 1
        %s157 = scalar_select %p156, %s10, 1
        %s158 = smul.addr %s157, 54
        %s159 = smul.addr %s158, 4
        %s160 = scalar_lea.vmem %s0, %s159
      $region32: #{_lambda_.3} parent=27 // pred_fallthru
        _
    $region28: #{_lambda_.3} parent=5 // pred_fallthru
      _
    %p161 = scmp.le.s32.totalorder 1, %s10
    %p162 = scmp.lt.s32.totalorder %s10, 3
    %p163 = pnand %p161, %p162
    %p164 = pneg %p163
    // Predicated region
    $region33: #{_lambda_.3} parent=5 // pred_check
      _
    $region34: #{_lambda_.3} parent=5 // pred_check_branch
      %166 = sbr.rel (%p163) target = $region36
    $region35: #{_lambda_.3} parent=5 // pred_region
      %s167 = ssub.s32 %s10, 1
      %p168 = scmp.lt.s32.totalorder %s15, 1
      %s169 = scalar_select %p168, %s15, 1
      %s170 = smul.addr %s169, 54
      %s171 = smul.addr %s170, 4
      %s172 = scalar_lea.vmem %s0, %s171
      %p173 = pneg %p36
      %p174 = pneg %p33
      %p175 = pneg %p57
      %p176 = pneg %p54
      %p177 = pneg %p78
      %p178 = pneg %p75
      %p179 = pneg %p99
      %p180 = pneg %p96
      %p181 = pneg %p125
      %p182 = pneg %p122
      %p183 = scmp.lt.s32.totalorder %s15, 1
      %s184 = scalar_select %p183, %s15, 1
      %s185 = smul.addr %s184, 30
      %s186 = smul.addr %s185, 4
      %s187 = scalar_lea.vmem %s4, %s186
      %p188 = scmp.lt.s32.totalorder %s15, 1
      %s189 = scalar_select %p188, %s15, 1
      %s190 = smul.addr %s189, 54
      %s191 = smul.addr %s190, 4
      %s192 = scalar_lea.vmem %s0, %s191
      %p193 = scmp.lt.s32.totalorder %s15, 1
      %s194 = scalar_select %p193, %s15, 1
      %s195 = smul.addr %s194, 30
      %s196 = smul.addr %s195, 4
      %s197 = scalar_lea.vmem %s4, %s196
      loop: start=0, step=1, limit=15
      $region37: #{_lambda_.3} parent=35 // loop_pre_header
        _
      $region38: #{_lambda_.3} parent=35 // loop_header
        %s200 = sphi 0, %s204
        %p201 = scmp.ge.s32.totalorder %s200, 15
      $region39: #{_lambda_.3} parent=35 // loop_header_branch
        %203 = sbr.rel (%p201) target = $region43
      $region40: #{_lambda_.3} parent=35 // loop_body
        %s205 = smul.u32 %s200, 3
        %s206 = smul.addr %s205, 4
        %s207 = scalar_lea.vmem %s192, %s206
        %v208 = vld [vmem:[%s207] sm:$0xf]
        %v209 = vld [vmem:[%s207 + $0x4] sm:$0xf]
        %v210 = vld [vmem:[%s207 + $0x8] sm:$0x1]
        %s211 = sadd.s32 %s200, 1
        %s212 = smul.u32 %s211, 3
        %s213 = smul.addr %s212, 4
        %s214 = scalar_lea.vmem %s192, %s213
        %v215 = vld [vmem:[%s214] sm:$0xf]
        %v216 = vld [vmem:[%s214 + $0x4] sm:$0xf]
        %v217 = vld [vmem:[%s214 + $0x8] sm:$0x1]
        %s218 = sadd.s32 %s200, 2
        %s219 = smul.u32 %s218, 3
        %s220 = smul.addr %s219, 4
        %s221 = scalar_lea.vmem %s192, %s220
        %v222 = vld [vmem:[%s221] sm:$0xf]
        %v223 = vld [vmem:[%s221 + $0x4] sm:$0xf]
        %v224 = vld [vmem:[%s221 + $0x8] sm:$0x1]
        %s225 = sadd.s32 %s200, 3
        %s226 = smul.u32 %s225, 3
        %s227 = smul.addr %s226, 4
        %s228 = scalar_lea.vmem %s192, %s227
        %v229 = vld [vmem:[%s228] sm:$0xf]
        %v230 = vld [vmem:[%s228 + $0x4] sm:$0xf]
        %v231 = vld [vmem:[%s228 + $0x8] sm:$0x1]
        %v234 = vunpack.c.l.b16 %v208
        %v235 = vunpack.c.l.b16 %v209
        %v236 = vpack.c.b16 %v235, %v234
        %v239 = vshrl.u32 %v236, 16
        %v241 = vshll.u32 %v236, 16
        %v243 = vrot.slane %v241, 1
        %v244 = vor.u32 %v239, %v243
        %v247 = vunpack.c.l.b16 %v210
        %v248 = vpack.c.b16 %v247, %v247
        %vm249 = vcmask 1046528
        %v250 = vrot.slane %v236, 1
        %v251 = vrot.slane %v248, 1
        %v252 = vsel %vm249, %v250, %v251
        %vm254 = vsmask.f32 6400
        %v255 = vrot.slane %v239, 1
        %v256 = vrot.slane %v241, 2
        %v257 = vor.u32 %v255, %v256
        %v259 = vshrl.u32 %v248, 16
        %v261 = vrot.slane %v259, 1
        %v262 = vshll.u32 %v248, 16
        %v264 = vrot.slane %v262, 2
        %v265 = vor.u32 %v261, %v264
        %v266 = vsel %vm254, %v257, %v265
        %v270 = vunpack.c.l.b16 %v215
        %v271 = vunpack.c.l.b16 %v216
        %v272 = vpack.c.b16 %v271, %v270
        %v275 = vshrl.u32 %v272, 16
        %v277 = vshll.u32 %v272, 16
        %v279 = vrot.slane %v277, 1
        %v280 = vor.u32 %v275, %v279
        %v283 = vunpack.c.l.b16 %v217
        %v284 = vpack.c.b16 %v283, %v283
        %v285 = vrot.slane %v272, 1
        %v286 = vrot.slane %v284, 1
        %v287 = vsel %vm249, %v285, %v286
        %v289 = vrot.slane %v275, 1
        %v290 = vrot.slane %v277, 2
        %v291 = vor.u32 %v289, %v290
        %v293 = vshrl.u32 %v284, 16
        %v295 = vrot.slane %v293, 1
        %v296 = vshll.u32 %v284, 16
        %v298 = vrot.slane %v296, 2
        %v299 = vor.u32 %v295, %v298
        %v300 = vsel %vm254, %v291, %v299
        %v304 = vunpack.c.l.b16 %v222
        %v305 = vunpack.c.l.b16 %v223
        %v306 = vpack.c.b16 %v305, %v304
        %v309 = vshrl.u32 %v306, 16
        %v311 = vshll.u32 %v306, 16
        %v313 = vrot.slane %v311, 1
        %v314 = vor.u32 %v309, %v313
        %v317 = vunpack.c.l.b16 %v224
        %v318 = vpack.c.b16 %v317, %v317
        %v319 = vrot.slane %v306, 1
        %v320 = vrot.slane %v318, 1
        %v321 = vsel %vm249, %v319, %v320
        %v323 = vrot.slane %v309, 1
        %v324 = vrot.slane %v311, 2
        %v325 = vor.u32 %v323, %v324
        %v327 = vshrl.u32 %v318, 16
        %v329 = vrot.slane %v327, 1
        %v330 = vshll.u32 %v318, 16
        %v332 = vrot.slane %v330, 2
        %v333 = vor.u32 %v329, %v332
        %v334 = vsel %vm254, %v325, %v333
        %v338 = vunpack.c.l.b16 %v229
        %v339 = vunpack.c.l.b16 %v230
        %v340 = vpack.c.b16 %v339, %v338
        %v343 = vshrl.u32 %v340, 16
        %v345 = vshll.u32 %v340, 16
        %v347 = vrot.slane %v345, 1
        %v348 = vor.u32 %v343, %v347
        %v351 = vunpack.c.l.b16 %v231
        %v352 = vpack.c.b16 %v351, %v351
        %v353 = vrot.slane %v340, 1
        %v354 = vrot.slane %v352, 1
        %v355 = vsel %vm249, %v353, %v354
        %v357 = vrot.slane %v343, 1
        %v358 = vrot.slane %v345, 2
        %v359 = vor.u32 %v357, %v358
        %v361 = vshrl.u32 %v352, 16
        %v363 = vrot.slane %v361, 1
        %v364 = vshll.u32 %v352, 16
        %v366 = vrot.slane %v364, 2
        %v367 = vor.u32 %v363, %v366
        %v368 = vsel %vm254, %v359, %v367
        %v370 = vld [vmem:[%s1] sm:$0xf]
        %v371 = vld [vmem:[%s1 + $0x4] sm:$0xf]
        %v372 = vld [vmem:[%s1 + $0x8] sm:$0xf]
        %v373 = vld [vmem:[%s1 + $0xc] sm:$0xf]
        %v374 = vld [vmem:[%s1 + $0x10] sm:$0xf]
        %v375 = vld [vmem:[%s1 + $0x14] sm:$0xf]
        %v376 = vld [vmem:[%s1 + $0x18] sm:$0xf]
        %v377 = vld [vmem:[%s1 + $0x1c] sm:$0xf]
        %v378 = vld [vmem:[%s1 + $0x20] sm:$0xf]
        %v379 = vld [vmem:[%s1 + $0x24] sm:$0xf]
        %v380 = vld [vmem:[%s1 + $0x28] sm:$0xf]
        %v381 = vld [vmem:[%s1 + $0x2c] sm:$0xf]
        %v382 = vld [vmem:[%s1 + $0x30] sm:$0xf]
        %v383 = vld [vmem:[%s1 + $0x34] sm:$0xf]
        %v384 = vld [vmem:[%s1 + $0x38] sm:$0xf]
        %v385 = vld [vmem:[%s1 + $0x3c] sm:$0xf]
        %v386 = vld [vmem:[%s1 + $0x40] sm:$0xf]
        %v387 = vld [vmem:[%s1 + $0x44] sm:$0xf]
        %v388 = vld [vmem:[%s1 + $0x48] sm:$0xf]
        %v389 = vld [vmem:[%s1 + $0x4c] sm:$0xf]
        %v390 = vld [vmem:[%s1 + $0x50] sm:$0xf]
        %v391 = vld [vmem:[%s1 + $0x54] sm:$0xf]
        %v392 = vld [vmem:[%s1 + $0x58] sm:$0xf]
        %v393 = vld [vmem:[%s1 + $0x5c] sm:$0xf]
        %v394 = vld [vmem:[%s1 + $0x60] sm:$0xf]
        %v395 = vld [vmem:[%s1 + $0x64] sm:$0xf]
        %v396 = vld [vmem:[%s1 + $0x68] sm:$0xf]
        %v397 = vld [vmem:[%s1 + $0x6c] sm:$0xf]
        %v398 = vld [vmem:[%s1 + $0x70] sm:$0xf]
        %v399 = vld [vmem:[%s1 + $0x74] sm:$0xf]
        %v400 = vld [vmem:[%s1 + $0x78] sm:$0xf]
        %v401 = vld [vmem:[%s1 + $0x7c] sm:$0xf]
        %v402 = vld [vmem:[%s1 + $0x80] sm:$0xf]
        %v403 = vld [vmem:[%s1 + $0x84] sm:$0xf]
        %v404 = vld [vmem:[%s1 + $0x88] sm:$0xf]
        %v405 = vld [vmem:[%s1 + $0x8c] sm:$0xf]
        %v406 = vld [vmem:[%s1 + $0x90] sm:$0xf]
        %v407 = vld [vmem:[%s1 + $0x94] sm:$0xf]
        %v408 = vld [vmem:[%s1 + $0x98] sm:$0xf]
        %v409 = vld [vmem:[%s1 + $0x9c] sm:$0xf]
        %v410 = vld [vmem:[%s1 + $0xa0] sm:$0xf]
        %v411 = vld [vmem:[%s1 + $0xa4] sm:$0xf]
        %v412 = vld [vmem:[%s1 + $0xa8] sm:$0xf]
        %v413 = vld [vmem:[%s1 + $0xac] sm:$0xf]
        %v414 = vld [vmem:[%s1 + $0xb0] sm:$0xf]
        %v415 = vld [vmem:[%s1 + $0xb4] sm:$0xf]
        %v416 = vld [vmem:[%s1 + $0xb8] sm:$0xf]
        %v417 = vld [vmem:[%s1 + $0xbc] sm:$0xf]
        %v418 = vld [vmem:[%s1 + $0xc0] sm:$0xf]
        %v419 = vld [vmem:[%s1 + $0xc4] sm:$0xf]
        %v420 = vld [vmem:[%s1 + $0xc8] sm:$0xf]
        %v421 = vld [vmem:[%s1 + $0xcc] sm:$0xf]
        %v422 = vld [vmem:[%s1 + $0xd0] sm:$0xf]
        %v423 = vld [vmem:[%s1 + $0xd4] sm:$0xf]
        %v424 = vld [vmem:[%s1 + $0xd8] sm:$0xf]
        %v425 = vld [vmem:[%s1 + $0xdc] sm:$0xf]
        %v426 = vld [vmem:[%s1 + $0xe0] sm:$0xf]
        %v427 = vld [vmem:[%s1 + $0xe4] sm:$0xf]
        %v428 = vld [vmem:[%s1 + $0xe8] sm:$0xf]
        %v429 = vld [vmem:[%s1 + $0xec] sm:$0xf]
        %v430 = vld [vmem:[%s1 + $0xf0] sm:$0xf]
        %v431 = vld [vmem:[%s1 + $0xf4] sm:$0xf]
        %v432 = vld [vmem:[%s1 + $0xf8] sm:$0xf]
        %v433 = vld [vmem:[%s1 + $0xfc] sm:$0xf]
        %v434 = vld [vmem:[%s1 + $0x100] sm:$0xf]
        %v435 = vld [vmem:[%s1 + $0x104] sm:$0xf]
        %v436 = vld [vmem:[%s1 + $0x108] sm:$0xf]
        %v437 = vld [vmem:[%s1 + $0x10c] sm:$0xf]
        %v438 = vld [vmem:[%s1 + $0x110] sm:$0xf]
        %v439 = vld [vmem:[%s1 + $0x114] sm:$0xf]
        %v440 = vld [vmem:[%s1 + $0x118] sm:$0xf]
        %v441 = vld [vmem:[%s1 + $0x11c] sm:$0xf]
        %v442 = vld [vmem:[%s1 + $0x120] sm:$0xf]
        %v443 = vld [vmem:[%s1 + $0x124] sm:$0xf]
        %v444 = vld [vmem:[%s1 + $0x128] sm:$0xf]
        %v445 = vld [vmem:[%s1 + $0x12c] sm:$0xf]
        %v446 = vld [vmem:[%s1 + $0x130] sm:$0xf]
        %v447 = vld [vmem:[%s1 + $0x134] sm:$0xf]
        %v448 = vld [vmem:[%s1 + $0x138] sm:$0xf]
        %v449 = vld [vmem:[%s1 + $0x13c] sm:$0xf]
        %v450 = vld [vmem:[%s1 + $0x140] sm:$0xf]
        %v451 = vld [vmem:[%s1 + $0x144] sm:$0xf]
        %v452 = vld [vmem:[%s1 + $0x148] sm:$0xf]
        %v453 = vld [vmem:[%s1 + $0x14c] sm:$0xf]
        %v454 = vld [vmem:[%s1 + $0x150] sm:$0xf]
        %v455 = vld [vmem:[%s1 + $0x154] sm:$0xf]
        %v456 = vld [vmem:[%s1 + $0x158] sm:$0xf]
        %v457 = vld [vmem:[%s1 + $0x15c] sm:$0xf]
        %v458 = vld [vmem:[%s1 + $0x160] sm:$0xf]
        %v459 = vld [vmem:[%s1 + $0x164] sm:$0xf]
        %v460 = vld [vmem:[%s1 + $0x168] sm:$0xf]
        %v461 = vld [vmem:[%s1 + $0x16c] sm:$0xf]
        %v462 = vld [vmem:[%s1 + $0x170] sm:$0xf]
        %v463 = vld [vmem:[%s1 + $0x174] sm:$0xf]
        %v464 = vld [vmem:[%s1 + $0x178] sm:$0xf]
        %v465 = vld [vmem:[%s1 + $0x17c] sm:$0xf]
        %v466 = vld [vmem:[%s1 + $0x180] sm:$0xf]
        %v467 = vld [vmem:[%s1 + $0x184] sm:$0xf]
        %v468 = vld [vmem:[%s1 + $0x188] sm:$0xf]
        %v469 = vld [vmem:[%s1 + $0x18c] sm:$0xf]
        %v470 = vld [vmem:[%s1 + $0x190] sm:$0xf]
        %v471 = vld [vmem:[%s1 + $0x194] sm:$0xf]
        %v472 = vld [vmem:[%s1 + $0x198] sm:$0xf]
        %v473 = vld [vmem:[%s1 + $0x19c] sm:$0xf]
        %v474 = vld [vmem:[%s1 + $0x1a0] sm:$0xf]
        %v475 = vld [vmem:[%s1 + $0x1a4] sm:$0xf]
        %v476 = vld [vmem:[%s1 + $0x1a8] sm:$0xf]
        %v477 = vld [vmem:[%s1 + $0x1ac] sm:$0xf]
        %v478 = vld [vmem:[%s1 + $0x1b0] sm:$0xf]
        %v479 = vld [vmem:[%s1 + $0x1b4] sm:$0xf]
        %v480 = vld [vmem:[%s1 + $0x1b8] sm:$0xf]
        %v481 = vld [vmem:[%s1 + $0x1bc] sm:$0xf]
        %v482 = vld [vmem:[%s1 + $0x1c0] sm:$0xf]
        %v483 = vld [vmem:[%s1 + $0x1c4] sm:$0xf]
        %v484 = vld [vmem:[%s1 + $0x1c8] sm:$0xf]
        %v485 = vld [vmem:[%s1 + $0x1cc] sm:$0xf]
        %v486 = vld [vmem:[%s1 + $0x1d0] sm:$0xf]
        %v487 = vld [vmem:[%s1 + $0x1d4] sm:$0xf]
        %v488 = vld [vmem:[%s1 + $0x1d8] sm:$0xf]
        %v489 = vld [vmem:[%s1 + $0x1dc] sm:$0xf]
        %v490 = vld [vmem:[%s1 + $0x1e0] sm:$0xf]
        %v491 = vld [vmem:[%s1 + $0x1e4] sm:$0xf]
        %v492 = vld [vmem:[%s1 + $0x1e8] sm:$0xf]
        %v493 = vld [vmem:[%s1 + $0x1ec] sm:$0xf]
        %v494 = vld [vmem:[%s1 + $0x1f0] sm:$0xf]
        %v495 = vld [vmem:[%s1 + $0x1f4] sm:$0xf]
        %v496 = vld [vmem:[%s1 + $0x1f8] sm:$0xf]
        %v497 = vld [vmem:[%s1 + $0x1fc] sm:$0xf]
        %v498 = vld [vmem:[%s1 + $0x200] sm:$0xf]
        %v499 = vld [vmem:[%s1 + $0x204] sm:$0xf]
        %v500 = vld [vmem:[%s1 + $0x208] sm:$0xf]
        %v501 = vld [vmem:[%s1 + $0x20c] sm:$0xf]
        %v502 = vld [vmem:[%s1 + $0x210] sm:$0xf]
        %v503 = vld [vmem:[%s1 + $0x214] sm:$0xf]
        %v504 = vld [vmem:[%s1 + $0x218] sm:$0xf]
        %v505 = vld [vmem:[%s1 + $0x21c] sm:$0xf]
        %v506 = vld [vmem:[%s1 + $0x220] sm:$0xf]
        %v507 = vld [vmem:[%s1 + $0x224] sm:$0xf]
        %v508 = vld [vmem:[%s1 + $0x228] sm:$0xf]
        %v509 = vld [vmem:[%s1 + $0x22c] sm:$0xf]
        %v510 = vld [vmem:[%s1 + $0x230] sm:$0xf]
        %v511 = vld [vmem:[%s1 + $0x234] sm:$0xf]
        %v512 = vld [vmem:[%s1 + $0x238] sm:$0xf]
        %v513 = vld [vmem:[%s1 + $0x23c] sm:$0xf]
        %v514 = vld [vmem:[%s1 + $0x240] sm:$0xf]
        %v515 = vld [vmem:[%s1 + $0x244] sm:$0xf]
        %v516 = vld [vmem:[%s1 + $0x248] sm:$0xf]
        %v517 = vld [vmem:[%s1 + $0x24c] sm:$0xf]
        %v518 = vld [vmem:[%s1 + $0x250] sm:$0xf]
        %v519 = vld [vmem:[%s1 + $0x254] sm:$0xf]
        %v520 = vld [vmem:[%s1 + $0x258] sm:$0xf]
        %v521 = vld [vmem:[%s1 + $0x25c] sm:$0xf]
        %v522 = vld [vmem:[%s1 + $0x260] sm:$0xf]
        %v523 = vld [vmem:[%s1 + $0x264] sm:$0xf]
        %v524 = vld [vmem:[%s1 + $0x268] sm:$0xf]
        %v525 = vld [vmem:[%s1 + $0x26c] sm:$0xf]
        %v526 = vld [vmem:[%s1 + $0x270] sm:$0xf]
        %v527 = vld [vmem:[%s1 + $0x274] sm:$0xf]
        %v528 = vld [vmem:[%s1 + $0x278] sm:$0xf]
        %v529 = vld [vmem:[%s1 + $0x27c] sm:$0xf]
        %v530 = vld [vmem:[%s1 + $0x280] sm:$0xf]
        %v531 = vld [vmem:[%s1 + $0x284] sm:$0xf]
        %v532 = vld [vmem:[%s1 + $0x288] sm:$0xf]
        %v533 = vld [vmem:[%s1 + $0x28c] sm:$0xf]
        %v534 = vld [vmem:[%s1 + $0x290] sm:$0xf]
        %v535 = vld [vmem:[%s1 + $0x294] sm:$0xf]
        %v536 = vld [vmem:[%s1 + $0x298] sm:$0xf]
        %v537 = vld [vmem:[%s1 + $0x29c] sm:$0xf]
        %v538 = vld [vmem:[%s1 + $0x2a0] sm:$0xf]
        %v539 = vld [vmem:[%s1 + $0x2a4] sm:$0xf]
        %v540 = vld [vmem:[%s1 + $0x2a8] sm:$0xf]
        %v541 = vld [vmem:[%s1 + $0x2ac] sm:$0xf]
        %v542 = vld [vmem:[%s1 + $0x2b0] sm:$0xf]
        %v543 = vld [vmem:[%s1 + $0x2b4] sm:$0xf]
        %v544 = vld [vmem:[%s1 + $0x2b8] sm:$0xf]
        %v545 = vld [vmem:[%s1 + $0x2bc] sm:$0xf]
        %v546 = vld [vmem:[%s1 + $0x2c0] sm:$0xf]
        %v547 = vld [vmem:[%s1 + $0x2c4] sm:$0xf]
        %v548 = vld [vmem:[%s1 + $0x2c8] sm:$0xf]
        %v549 = vld [vmem:[%s1 + $0x2cc] sm:$0xf]
        %v550 = vld [vmem:[%s1 + $0x2d0] sm:$0xf]
        %v551 = vld [vmem:[%s1 + $0x2d4] sm:$0xf]
        %v552 = vld [vmem:[%s1 + $0x2d8] sm:$0xf]
        %v553 = vld [vmem:[%s1 + $0x2dc] sm:$0xf]
        %v554 = vld [vmem:[%s1 + $0x2e0] sm:$0xf]
        %v555 = vld [vmem:[%s1 + $0x2e4] sm:$0xf]
        %v556 = vld [vmem:[%s1 + $0x2e8] sm:$0xf]
        %v557 = vld [vmem:[%s1 + $0x2ec] sm:$0xf]
        %v558 = vld [vmem:[%s1 + $0x2f0] sm:$0xf]
        %v559 = vld [vmem:[%s1 + $0x2f4] sm:$0xf]
        %v560 = vld [vmem:[%s1 + $0x2f8] sm:$0xf]
        %v561 = vld [vmem:[%s1 + $0x2fc] sm:$0xf]
        %v562 = vld [vmem:[%s1 + $0x300] sm:$0xf]
        %v563 = vld [vmem:[%s1 + $0x304] sm:$0xf]
        %v564 = vld [vmem:[%s1 + $0x308] sm:$0xf]
        %v565 = vld [vmem:[%s1 + $0x30c] sm:$0xf]
        %v566 = vld [vmem:[%s1 + $0x310] sm:$0xf]
        %v567 = vld [vmem:[%s1 + $0x314] sm:$0xf]
        %v568 = vld [vmem:[%s1 + $0x318] sm:$0xf]
        %v569 = vld [vmem:[%s1 + $0x31c] sm:$0xf]
        %v570 = vld [vmem:[%s1 + $0x320] sm:$0xf]
        %v571 = vld [vmem:[%s1 + $0x324] sm:$0xf]
        %v572 = vld [vmem:[%s1 + $0x328] sm:$0xf]
        %v573 = vld [vmem:[%s1 + $0x32c] sm:$0xf]
        %v574 = vld [vmem:[%s1 + $0x330] sm:$0xf]
        %v575 = vld [vmem:[%s1 + $0x334] sm:$0xf]
        %v576 = vld [vmem:[%s1 + $0x338] sm:$0xf]
        %v577 = vld [vmem:[%s1 + $0x33c] sm:$0xf]
        %v578 = vld [vmem:[%s1 + $0x340] sm:$0xf]
        %v579 = vld [vmem:[%s1 + $0x344] sm:$0xf]
        %v580 = vld [vmem:[%s1 + $0x348] sm:$0xf]
        %v581 = vld [vmem:[%s1 + $0x34c] sm:$0xf]
        %v582 = vld [vmem:[%s1 + $0x350] sm:$0xf]
        %v583 = vld [vmem:[%s1 + $0x354] sm:$0xf]
        %v584 = vld [vmem:[%s1 + $0x358] sm:$0xf]
        %v585 = vld [vmem:[%s1 + $0x35c] sm:$0xf]
        %v586 = vld [vmem:[%s1 + $0x360] sm:$0xf]
        %v587 = vld [vmem:[%s1 + $0x364] sm:$0xf]
        %v588 = vld [vmem:[%s1 + $0x368] sm:$0xf]
        %v589 = vld [vmem:[%s1 + $0x36c] sm:$0xf]
        %v590 = vld [vmem:[%s1 + $0x370] sm:$0xf]
        %v591 = vld [vmem:[%s1 + $0x374] sm:$0xf]
        %v592 = vld [vmem:[%s1 + $0x378] sm:$0xf]
        %v593 = vld [vmem:[%s1 + $0x37c] sm:$0xf]
        %v594 = vld [vmem:[%s1 + $0x380] sm:$0xf]
        %v595 = vld [vmem:[%s1 + $0x384] sm:$0xf]
        %v596 = vld [vmem:[%s1 + $0x388] sm:$0xf]
        %v597 = vld [vmem:[%s1 + $0x38c] sm:$0xf]
        %v598 = vld [vmem:[%s1 + $0x390] sm:$0xf]
        %v599 = vld [vmem:[%s1 + $0x394] sm:$0xf]
        %v600 = vld [vmem:[%s1 + $0x398] sm:$0xf]
        %v601 = vld [vmem:[%s1 + $0x39c] sm:$0xf]
        %v602 = vld [vmem:[%s1 + $0x3a0] sm:$0xf]
        %v603 = vld [vmem:[%s1 + $0x3a4] sm:$0xf]
        %v604 = vld [vmem:[%s1 + $0x3a8] sm:$0xf]
        %v605 = vld [vmem:[%s1 + $0x3ac] sm:$0xf]
        %v606 = vld [vmem:[%s1 + $0x3b0] sm:$0xf]
        %v607 = vld [vmem:[%s1 + $0x3b4] sm:$0xf]
        %v608 = vld [vmem:[%s1 + $0x3b8] sm:$0xf]
        %v609 = vld [vmem:[%s1 + $0x3bc] sm:$0xf]
        %v610 = vld [vmem:[%s1 + $0x3c0] sm:$0xf]
        %v611 = vld [vmem:[%s1 + $0x3c4] sm:$0xf]
        %v612 = vld [vmem:[%s1 + $0x3c8] sm:$0xf]
        %v613 = vld [vmem:[%s1 + $0x3cc] sm:$0xf]
        %v614 = vld [vmem:[%s1 + $0x3d0] sm:$0xf]
        %v615 = vld [vmem:[%s1 + $0x3d4] sm:$0xf]
        %v616 = vld [vmem:[%s1 + $0x3d8] sm:$0xf]
        %v617 = vld [vmem:[%s1 + $0x3dc] sm:$0xf]
        %v618 = vld [vmem:[%s1 + $0x3e0] sm:$0xf]
        %v619 = vld [vmem:[%s1 + $0x3e4] sm:$0xf]
        %v620 = vld [vmem:[%s1 + $0x3e8] sm:$0xf]
        %v621 = vld [vmem:[%s1 + $0x3ec] sm:$0xf]
        %v622 = vld [vmem:[%s1 + $0x3f0] sm:$0xf]
        %v623 = vld [vmem:[%s1 + $0x3f4] sm:$0xf]
        %v624 = vld [vmem:[%s1 + $0x3f8] sm:$0xf]
        %v625 = vld [vmem:[%s1 + $0x3fc] sm:$0xf]
        %v882 = vunpack.c.l.b16 %v370
        %v883 = vunpack.c.l.b16 %v371
        %v884 = vunpack.c.l.b16 %v372
        %v885 = vunpack.c.l.b16 %v373
        %v886 = vunpack.c.l.b16 %v374
        %v887 = vunpack.c.l.b16 %v375
        %v888 = vunpack.c.l.b16 %v376
        %v889 = vunpack.c.l.b16 %v377
        %v890 = vunpack.c.l.b16 %v378
        %v891 = vunpack.c.l.b16 %v379
        %v892 = vunpack.c.l.b16 %v380
        %v893 = vunpack.c.l.b16 %v381
        %v894 = vunpack.c.l.b16 %v382
        %v895 = vunpack.c.l.b16 %v383
        %v896 = vunpack.c.l.b16 %v384
        %v897 = vunpack.c.l.b16 %v385
        %v898 = vunpack.c.l.b16 %v386
        %v899 = vunpack.c.l.b16 %v387
        %v900 = vunpack.c.l.b16 %v388
        %v901 = vunpack.c.l.b16 %v389
        %v902 = vunpack.c.l.b16 %v390
        %v903 = vunpack.c.l.b16 %v391
        %v904 = vunpack.c.l.b16 %v392
        %v905 = vunpack.c.l.b16 %v393
        %v906 = vunpack.c.l.b16 %v394
        %v907 = vunpack.c.l.b16 %v395
        %v908 = vunpack.c.l.b16 %v396
        %v909 = vunpack.c.l.b16 %v397
        %v910 = vunpack.c.l.b16 %v398
        %v911 = vunpack.c.l.b16 %v399
        %v912 = vunpack.c.l.b16 %v400
        %v913 = vunpack.c.l.b16 %v401
        %v914 = vunpack.c.l.b16 %v402
        %v915 = vunpack.c.l.b16 %v403
        %v916 = vunpack.c.l.b16 %v404
        %v917 = vunpack.c.l.b16 %v405
        %v918 = vunpack.c.l.b16 %v406
        %v919 = vunpack.c.l.b16 %v407
        %v920 = vunpack.c.l.b16 %v408
        %v921 = vunpack.c.l.b16 %v409
        %v922 = vunpack.c.l.b16 %v410
        %v923 = vunpack.c.l.b16 %v411
        %v924 = vunpack.c.l.b16 %v412
        %v925 = vunpack.c.l.b16 %v413
        %v926 = vunpack.c.l.b16 %v414
        %v927 = vunpack.c.l.b16 %v415
        %v928 = vunpack.c.l.b16 %v416
        %v929 = vunpack.c.l.b16 %v417
        %v930 = vunpack.c.l.b16 %v418
        %v931 = vunpack.c.l.b16 %v419
        %v932 = vunpack.c.l.b16 %v420
        %v933 = vunpack.c.l.b16 %v421
        %v934 = vunpack.c.l.b16 %v422
        %v935 = vunpack.c.l.b16 %v423
        %v936 = vunpack.c.l.b16 %v424
        %v937 = vunpack.c.l.b16 %v425
        %v938 = vunpack.c.l.b16 %v426
        %v939 = vunpack.c.l.b16 %v427
        %v940 = vunpack.c.l.b16 %v428
        %v941 = vunpack.c.l.b16 %v429
        %v942 = vunpack.c.l.b16 %v430
        %v943 = vunpack.c.l.b16 %v431
        %v944 = vunpack.c.l.b16 %v432
        %v945 = vunpack.c.l.b16 %v433
        %v946 = vunpack.c.l.b16 %v434
        %v947 = vunpack.c.l.b16 %v435
        %v948 = vunpack.c.l.b16 %v436
        %v949 = vunpack.c.l.b16 %v437
        %v950 = vunpack.c.l.b16 %v438
        %v951 = vunpack.c.l.b16 %v439
        %v952 = vunpack.c.l.b16 %v440
        %v953 = vunpack.c.l.b16 %v441
        %v954 = vunpack.c.l.b16 %v442
        %v955 = vunpack.c.l.b16 %v443
        %v956 = vunpack.c.l.b16 %v444
        %v957 = vunpack.c.l.b16 %v445
        %v958 = vunpack.c.l.b16 %v446
        %v959 = vunpack.c.l.b16 %v447
        %v960 = vunpack.c.l.b16 %v448
        %v961 = vunpack.c.l.b16 %v449
        %v962 = vunpack.c.l.b16 %v450
        %v963 = vunpack.c.l.b16 %v451
        %v964 = vunpack.c.l.b16 %v452
        %v965 = vunpack.c.l.b16 %v453
        %v966 = vunpack.c.l.b16 %v454
        %v967 = vunpack.c.l.b16 %v455
        %v968 = vunpack.c.l.b16 %v456
        %v969 = vunpack.c.l.b16 %v457
        %v970 = vunpack.c.l.b16 %v458
        %v971 = vunpack.c.l.b16 %v459
        %v972 = vunpack.c.l.b16 %v460
        %v973 = vunpack.c.l.b16 %v461
        %v974 = vunpack.c.l.b16 %v462
        %v975 = vunpack.c.l.b16 %v463
        %v976 = vunpack.c.l.b16 %v464
        %v977 = vunpack.c.l.b16 %v465
        %v978 = vunpack.c.l.b16 %v466
        %v979 = vunpack.c.l.b16 %v467
        %v980 = vunpack.c.l.b16 %v468
        %v981 = vunpack.c.l.b16 %v469
        %v982 = vunpack.c.l.b16 %v470
        %v983 = vunpack.c.l.b16 %v471
        %v984 = vunpack.c.l.b16 %v472
        %v985 = vunpack.c.l.b16 %v473
        %v986 = vunpack.c.l.b16 %v474
        %v987 = vunpack.c.l.b16 %v475
        %v988 = vunpack.c.l.b16 %v476
        %v989 = vunpack.c.l.b16 %v477
        %v990 = vunpack.c.l.b16 %v478
        %v991 = vunpack.c.l.b16 %v479
        %v992 = vunpack.c.l.b16 %v480
        %v993 = vunpack.c.l.b16 %v481
        %v994 = vunpack.c.l.b16 %v482
        %v995 = vunpack.c.l.b16 %v483
        %v996 = vunpack.c.l.b16 %v484
        %v997 = vunpack.c.l.b16 %v485
        %v998 = vunpack.c.l.b16 %v486
        %v999 = vunpack.c.l.b16 %v487
        %v1000 = vunpack.c.l.b16 %v488
        %v1001 = vunpack.c.l.b16 %v489
        %v1002 = vunpack.c.l.b16 %v490
        %v1003 = vunpack.c.l.b16 %v491
        %v1004 = vunpack.c.l.b16 %v492
        %v1005 = vunpack.c.l.b16 %v493
        %v1006 = vunpack.c.l.b16 %v494
        %v1007 = vunpack.c.l.b16 %v495
        %v1008 = vunpack.c.l.b16 %v496
        %v1009 = vunpack.c.l.b16 %v497
        %v1010 = vunpack.c.l.b16 %v498
        %v1011 = vunpack.c.l.b16 %v499
        %v1012 = vunpack.c.l.b16 %v500
        %v1013 = vunpack.c.l.b16 %v501
        %v1014 = vunpack.c.l.b16 %v502
        %v1015 = vunpack.c.l.b16 %v503
        %v1016 = vunpack.c.l.b16 %v504
        %v1017 = vunpack.c.l.b16 %v505
        %v1018 = vunpack.c.l.b16 %v506
        %v1019 = vunpack.c.l.b16 %v507
        %v1020 = vunpack.c.l.b16 %v508
        %v1021 = vunpack.c.l.b16 %v509
        %v1022 = vunpack.c.l.b16 %v510
        %v1023 = vunpack.c.l.b16 %v511
        %v1024 = vunpack.c.l.b16 %v512
        %v1025 = vunpack.c.l.b16 %v513
        %v1026 = vunpack.c.l.b16 %v514
        %v1027 = vunpack.c.l.b16 %v515
        %v1028 = vunpack.c.l.b16 %v516
        %v1029 = vunpack.c.l.b16 %v517
        %v1030 = vunpack.c.l.b16 %v518
        %v1031 = vunpack.c.l.b16 %v519
        %v1032 = vunpack.c.l.b16 %v520
        %v1033 = vunpack.c.l.b16 %v521
        %v1034 = vunpack.c.l.b16 %v522
        %v1035 = vunpack.c.l.b16 %v523
        %v1036 = vunpack.c.l.b16 %v524
        %v1037 = vunpack.c.l.b16 %v525
        %v1038 = vunpack.c.l.b16 %v526
        %v1039 = vunpack.c.l.b16 %v527
        %v1040 = vunpack.c.l.b16 %v528
        %v1041 = vunpack.c.l.b16 %v529
        %v1042 = vunpack.c.l.b16 %v530
        %v1043 = vunpack.c.l.b16 %v531
        %v1044 = vunpack.c.l.b16 %v532
        %v1045 = vunpack.c.l.b16 %v533
        %v1046 = vunpack.c.l.b16 %v534
        %v1047 = vunpack.c.l.b16 %v535
        %v1048 = vunpack.c.l.b16 %v536
        %v1049 = vunpack.c.l.b16 %v537
        %v1050 = vunpack.c.l.b16 %v538
        %v1051 = vunpack.c.l.b16 %v539
        %v1052 = vunpack.c.l.b16 %v540
        %v1053 = vunpack.c.l.b16 %v541
        %v1054 = vunpack.c.l.b16 %v542
        %v1055 = vunpack.c.l.b16 %v543
        %v1056 = vunpack.c.l.b16 %v544
        %v1057 = vunpack.c.l.b16 %v545
        %v1058 = vunpack.c.l.b16 %v546
        %v1059 = vunpack.c.l.b16 %v547
        %v1060 = vunpack.c.l.b16 %v548
        %v1061 = vunpack.c.l.b16 %v549
        %v1062 = vunpack.c.l.b16 %v550
        %v1063 = vunpack.c.l.b16 %v551
        %v1064 = vunpack.c.l.b16 %v552
        %v1065 = vunpack.c.l.b16 %v553
        %v1066 = vunpack.c.l.b16 %v554
        %v1067 = vunpack.c.l.b16 %v555
        %v1068 = vunpack.c.l.b16 %v556
        %v1069 = vunpack.c.l.b16 %v557
        %v1070 = vunpack.c.l.b16 %v558
        %v1071 = vunpack.c.l.b16 %v559
        %v1072 = vunpack.c.l.b16 %v560
        %v1073 = vunpack.c.l.b16 %v561
        %v1074 = vunpack.c.l.b16 %v562
        %v1075 = vunpack.c.l.b16 %v563
        %v1076 = vunpack.c.l.b16 %v564
        %v1077 = vunpack.c.l.b16 %v565
        %v1078 = vunpack.c.l.b16 %v566
        %v1079 = vunpack.c.l.b16 %v567
        %v1080 = vunpack.c.l.b16 %v568
        %v1081 = vunpack.c.l.b16 %v569
        %v1082 = vunpack.c.l.b16 %v570
        %v1083 = vunpack.c.l.b16 %v571
        %v1084 = vunpack.c.l.b16 %v572
        %v1085 = vunpack.c.l.b16 %v573
        %v1086 = vunpack.c.l.b16 %v574
        %v1087 = vunpack.c.l.b16 %v575
        %v1088 = vunpack.c.l.b16 %v576
        %v1089 = vunpack.c.l.b16 %v577
        %v1090 = vunpack.c.l.b16 %v578
        %v1091 = vunpack.c.l.b16 %v579
        %v1092 = vunpack.c.l.b16 %v580
        %v1093 = vunpack.c.l.b16 %v581
        %v1094 = vunpack.c.l.b16 %v582
        %v1095 = vunpack.c.l.b16 %v583
        %v1096 = vunpack.c.l.b16 %v584
        %v1097 = vunpack.c.l.b16 %v585
        %v1098 = vunpack.c.l.b16 %v586
        %v1099 = vunpack.c.l.b16 %v587
        %v1100 = vunpack.c.l.b16 %v588
        %v1101 = vunpack.c.l.b16 %v589
        %v1102 = vunpack.c.l.b16 %v590
        %v1103 = vunpack.c.l.b16 %v591
        %v1104 = vunpack.c.l.b16 %v592
        %v1105 = vunpack.c.l.b16 %v593
        %v1106 = vunpack.c.l.b16 %v594
        %v1107 = vunpack.c.l.b16 %v595
        %v1108 = vunpack.c.l.b16 %v596
        %v1109 = vunpack.c.l.b16 %v597
        %v1110 = vunpack.c.l.b16 %v598
        %v1111 = vunpack.c.l.b16 %v599
        %v1112 = vunpack.c.l.b16 %v600
        %v1113 = vunpack.c.l.b16 %v601
        %v1114 = vunpack.c.l.b16 %v602
        %v1115 = vunpack.c.l.b16 %v603
        %v1116 = vunpack.c.l.b16 %v604
        %v1117 = vunpack.c.l.b16 %v605
        %v1118 = vunpack.c.l.b16 %v606
        %v1119 = vunpack.c.l.b16 %v607
        %v1120 = vunpack.c.l.b16 %v608
        %v1121 = vunpack.c.l.b16 %v609
        %v1122 = vunpack.c.l.b16 %v610
        %v1123 = vunpack.c.l.b16 %v611
        %v1124 = vunpack.c.l.b16 %v612
        %v1125 = vunpack.c.l.b16 %v613
        %v1126 = vunpack.c.l.b16 %v614
        %v1127 = vunpack.c.l.b16 %v615
        %v1128 = vunpack.c.l.b16 %v616
        %v1129 = vunpack.c.l.b16 %v617
        %v1130 = vunpack.c.l.b16 %v618
        %v1131 = vunpack.c.l.b16 %v619
        %v1132 = vunpack.c.l.b16 %v620
        %v1133 = vunpack.c.l.b16 %v621
        %v1134 = vunpack.c.l.b16 %v622
        %v1135 = vunpack.c.l.b16 %v623
        %v1136 = vunpack.c.l.b16 %v624
        %v1137 = vunpack.c.l.b16 %v625
        %v1138 = vpack.c.b16 %v883, %v882
        %v1139 = vpack.c.b16 %v885, %v884
        %v1140 = vpack.c.b16 %v887, %v886
        %v1141 = vpack.c.b16 %v889, %v888
        %v1142 = vpack.c.b16 %v891, %v890
        %v1143 = vpack.c.b16 %v893, %v892
        %v1144 = vpack.c.b16 %v895, %v894
        %v1145 = vpack.c.b16 %v897, %v896
        %v1146 = vpack.c.b16 %v899, %v898
        %v1147 = vpack.c.b16 %v901, %v900
        %v1148 = vpack.c.b16 %v903, %v902
        %v1149 = vpack.c.b16 %v905, %v904
        %v1150 = vpack.c.b16 %v907, %v906
        %v1151 = vpack.c.b16 %v909, %v908
        %v1152 = vpack.c.b16 %v911, %v910
        %v1153 = vpack.c.b16 %v913, %v912
        %v1154 = vpack.c.b16 %v915, %v914
        %v1155 = vpack.c.b16 %v917, %v916
        %v1156 = vpack.c.b16 %v919, %v918
        %v1157 = vpack.c.b16 %v921, %v920
        %v1158 = vpack.c.b16 %v923, %v922
        %v1159 = vpack.c.b16 %v925, %v924
        %v1160 = vpack.c.b16 %v927, %v926
        %v1161 = vpack.c.b16 %v929, %v928
        %v1162 = vpack.c.b16 %v931, %v930
        %v1163 = vpack.c.b16 %v933, %v932
        %v1164 = vpack.c.b16 %v935, %v934
        %v1165 = vpack.c.b16 %v937, %v936
        %v1166 = vpack.c.b16 %v939, %v938
        %v1167 = vpack.c.b16 %v941, %v940
        %v1168 = vpack.c.b16 %v943, %v942
        %v1169 = vpack.c.b16 %v945, %v944
        %v1170 = vpack.c.b16 %v947, %v946
        %v1171 = vpack.c.b16 %v949, %v948
        %v1172 = vpack.c.b16 %v951, %v950
        %v1173 = vpack.c.b16 %v953, %v952
        %v1174 = vpack.c.b16 %v955, %v954
        %v1175 = vpack.c.b16 %v957, %v956
        %v1176 = vpack.c.b16 %v959, %v958
        %v1177 = vpack.c.b16 %v961, %v960
        %v1178 = vpack.c.b16 %v963, %v962
        %v1179 = vpack.c.b16 %v965, %v964
        %v1180 = vpack.c.b16 %v967, %v966
        %v1181 = vpack.c.b16 %v969, %v968
        %v1182 = vpack.c.b16 %v971, %v970
        %v1183 = vpack.c.b16 %v973, %v972
        %v1184 = vpack.c.b16 %v975, %v974
        %v1185 = vpack.c.b16 %v977, %v976
        %v1186 = vpack.c.b16 %v979, %v978
        %v1187 = vpack.c.b16 %v981, %v980
        %v1188 = vpack.c.b16 %v983, %v982
        %v1189 = vpack.c.b16 %v985, %v984
        %v1190 = vpack.c.b16 %v987, %v986
        %v1191 = vpack.c.b16 %v989, %v988
        %v1192 = vpack.c.b16 %v991, %v990
        %v1193 = vpack.c.b16 %v993, %v992
        %v1194 = vpack.c.b16 %v995, %v994
        %v1195 = vpack.c.b16 %v997, %v996
        %v1196 = vpack.c.b16 %v999, %v998
        %v1197 = vpack.c.b16 %v1001, %v1000
        %v1198 = vpack.c.b16 %v1003, %v1002
        %v1199 = vpack.c.b16 %v1005, %v1004
        %v1200 = vpack.c.b16 %v1007, %v1006
        %v1201 = vpack.c.b16 %v1009, %v1008
        %v1202 = vpack.c.b16 %v1011, %v1010
        %v1203 = vpack.c.b16 %v1013, %v1012
        %v1204 = vpack.c.b16 %v1015, %v1014
        %v1205 = vpack.c.b16 %v1017, %v1016
        %v1206 = vpack.c.b16 %v1019, %v1018
        %v1207 = vpack.c.b16 %v1021, %v1020
        %v1208 = vpack.c.b16 %v1023, %v1022
        %v1209 = vpack.c.b16 %v1025, %v1024
        %v1210 = vpack.c.b16 %v1027, %v1026
        %v1211 = vpack.c.b16 %v1029, %v1028
        %v1212 = vpack.c.b16 %v1031, %v1030
        %v1213 = vpack.c.b16 %v1033, %v1032
        %v1214 = vpack.c.b16 %v1035, %v1034
        %v1215 = vpack.c.b16 %v1037, %v1036
        %v1216 = vpack.c.b16 %v1039, %v1038
        %v1217 = vpack.c.b16 %v1041, %v1040
        %v1218 = vpack.c.b16 %v1043, %v1042
        %v1219 = vpack.c.b16 %v1045, %v1044
        %v1220 = vpack.c.b16 %v1047, %v1046
        %v1221 = vpack.c.b16 %v1049, %v1048
        %v1222 = vpack.c.b16 %v1051, %v1050
        %v1223 = vpack.c.b16 %v1053, %v1052
        %v1224 = vpack.c.b16 %v1055, %v1054
        %v1225 = vpack.c.b16 %v1057, %v1056
        %v1226 = vpack.c.b16 %v1059, %v1058
        %v1227 = vpack.c.b16 %v1061, %v1060
        %v1228 = vpack.c.b16 %v1063, %v1062
        %v1229 = vpack.c.b16 %v1065, %v1064
        %v1230 = vpack.c.b16 %v1067, %v1066
        %v1231 = vpack.c.b16 %v1069, %v1068
        %v1232 = vpack.c.b16 %v1071, %v1070
        %v1233 = vpack.c.b16 %v1073, %v1072
        %v1234 = vpack.c.b16 %v1075, %v1074
        %v1235 = vpack.c.b16 %v1077, %v1076
        %v1236 = vpack.c.b16 %v1079, %v1078
        %v1237 = vpack.c.b16 %v1081, %v1080
        %v1238 = vpack.c.b16 %v1083, %v1082
        %v1239 = vpack.c.b16 %v1085, %v1084
        %v1240 = vpack.c.b16 %v1087, %v1086
        %v1241 = vpack.c.b16 %v1089, %v1088
        %v1242 = vpack.c.b16 %v1091, %v1090
        %v1243 = vpack.c.b16 %v1093, %v1092
        %v1244 = vpack.c.b16 %v1095, %v1094
        %v1245 = vpack.c.b16 %v1097, %v1096
        %v1246 = vpack.c.b16 %v1099, %v1098
        %v1247 = vpack.c.b16 %v1101, %v1100
        %v1248 = vpack.c.b16 %v1103, %v1102
        %v1249 = vpack.c.b16 %v1105, %v1104
        %v1250 = vpack.c.b16 %v1107, %v1106
        %v1251 = vpack.c.b16 %v1109, %v1108
        %v1252 = vpack.c.b16 %v1111, %v1110
        %v1253 = vpack.c.b16 %v1113, %v1112
        %v1254 = vpack.c.b16 %v1115, %v1114
        %v1255 = vpack.c.b16 %v1117, %v1116
        %v1256 = vpack.c.b16 %v1119, %v1118
        %v1257 = vpack.c.b16 %v1121, %v1120
        %v1258 = vpack.c.b16 %v1123, %v1122
        %v1259 = vpack.c.b16 %v1125, %v1124
        %v1260 = vpack.c.b16 %v1127, %v1126
        %v1261 = vpack.c.b16 %v1129, %v1128
        %v1262 = vpack.c.b16 %v1131, %v1130
        %v1263 = vpack.c.b16 %v1133, %v1132
        %v1264 = vpack.c.b16 %v1135, %v1134
        %v1265 = vpack.c.b16 %v1137, %v1136
        %1394 = vmatprep.subr.bf16.mxu0 0
        %1395 = vmatpush1.bf16.msra.mxu0 %v1145
        %1396 = vmatprep.subr.bf16.mxu0 0
        %1397 = vmatpush1.bf16.msra.mxu0 %v1144
        %1398 = vmatprep.subr.bf16.mxu0 0
        %1399 = vmatpush1.bf16.msra.mxu0 %v1143
        %1400 = vmatprep.subr.bf16.mxu0 0
        %1401 = vmatpush1.bf16.msra.mxu0 %v1142
        %1402 = vmatprep.subr.bf16.mxu0 0
        %1403 = vmatpush1.bf16.msra.mxu0 %v1141
        %1404 = vmatprep.subr.bf16.mxu0 0
        %1405 = vmatpush1.bf16.msra.mxu0 %v1140
        %1406 = vmatprep.subr.bf16.mxu0 0
        %1407 = vmatpush1.bf16.msra.mxu0 %v1139
        %1408 = vmatprep.subr.bf16.mxu0 0
        %1409 = vmatpush1.bf16.msra.mxu0 %v1138
        %1410 = vmatprep.subr.bf16.mxu0 0
        %1411 = vmatpush2.bf16.msra.mxu0 %v1153
        %1412 = vmatprep.subr.bf16.mxu0 0
        %1413 = vmatpush2.bf16.msra.mxu0 %v1152
        %1414 = vmatprep.subr.bf16.mxu0 0
        %1415 = vmatpush2.bf16.msra.mxu0 %v1151
        %1416 = vmatprep.subr.bf16.mxu0 0
        %1417 = vmatpush2.bf16.msra.mxu0 %v1150
        %1418 = vmatprep.subr.bf16.mxu0 0
        %1419 = vmatpush2.bf16.msra.mxu0 %v1149
        %1420 = vmatprep.subr.bf16.mxu0 0
        %1421 = vmatpush2.bf16.msra.mxu0 %v1148
        %1422 = vmatprep.subr.bf16.mxu0 0
        %1423 = vmatpush2.bf16.msra.mxu0 %v1147
        %1424 = vmatprep.subr.bf16.mxu0 0
        %1425 = vmatpush2.bf16.msra.mxu0 %v1146
        %1426 = vmatprep.mubr.bf16.mxu0 %v244
        %1427 = vmatmul.mubr.bf16.gmra.mxu0 %v236
        %v1428 = vpop.f32.mrf.mxu0
        %v1429 = vadd.f32 0.0, %v1428
        %v1430 = vpop.f32.mrf.mxu0
        %v1431 = vpop.f32.mrf.mxu0
        %v1432 = vadd.f32 0.0, %v1431
        %v1433 = vpop.f32.mrf.mxu0
        %1434 = vdwg.mxu0
        %1435 = vmatprep.subr.bf16.mxu0 0
        %1436 = vmatpush1.bf16.msra.mxu0 %v1161
        %1437 = vmatprep.subr.bf16.mxu0 0
        %1438 = vmatpush1.bf16.msra.mxu0 %v1160
        %1439 = vmatprep.subr.bf16.mxu0 0
        %1440 = vmatpush1.bf16.msra.mxu0 %v1159
        %1441 = vmatprep.subr.bf16.mxu0 0
        %1442 = vmatpush1.bf16.msra.mxu0 %v1158
        %1443 = vmatprep.subr.bf16.mxu0 0
        %1444 = vmatpush1.bf16.msra.mxu0 %v1157
        %1445 = vmatprep.subr.bf16.mxu0 0
        %1446 = vmatpush1.bf16.msra.mxu0 %v1156
        %1447 = vmatprep.subr.bf16.mxu0 0
        %1448 = vmatpush1.bf16.msra.mxu0 %v1155
        %1449 = vmatprep.subr.bf16.mxu0 0
        %1450 = vmatpush1.bf16.msra.mxu0 %v1154
        %1451 = vmatprep.subr.bf16.mxu0 0
        %1452 = vmatpush2.bf16.msra.mxu0 %v1169
        %1453 = vmatprep.subr.bf16.mxu0 0
        %1454 = vmatpush2.bf16.msra.mxu0 %v1168
        %1455 = vmatprep.subr.bf16.mxu0 0
        %1456 = vmatpush2.bf16.msra.mxu0 %v1167
        %1457 = vmatprep.subr.bf16.mxu0 0
        %1458 = vmatpush2.bf16.msra.mxu0 %v1166
        %1459 = vmatprep.subr.bf16.mxu0 0
        %1460 = vmatpush2.bf16.msra.mxu0 %v1165
        %1461 = vmatprep.subr.bf16.mxu0 0
        %1462 = vmatpush2.bf16.msra.mxu0 %v1164
        %1463 = vmatprep.subr.bf16.mxu0 0
        %1464 = vmatpush2.bf16.msra.mxu0 %v1163
        %1465 = vmatprep.subr.bf16.mxu0 0
        %1466 = vmatpush2.bf16.msra.mxu0 %v1162
        %1467 = vmatprep.mubr.bf16.mxu0 %v266
        %1468 = vmatmul.mubr.bf16.gmra.mxu0 %v252
        %v1469 = vpop.f32.mrf.mxu0
        %v1470 = vadd.f32 %v1429, %v1469
        %v1471 = vpop.f32.mrf.mxu0
        %v1472 = vpop.f32.mrf.mxu0
        %v1473 = vadd.f32 %v1432, %v1472
        %v1474 = vpop.f32.mrf.mxu0
        %1475 = vdwg.mxu0
        %1476 = vmatprep.subr.bf16.mxu0 0
        %1477 = vmatpush1.bf16.msra.mxu0 %v1177
        %1478 = vmatprep.subr.bf16.mxu0 0
        %1479 = vmatpush1.bf16.msra.mxu0 %v1176
        %1480 = vmatprep.subr.bf16.mxu0 0
        %1481 = vmatpush1.bf16.msra.mxu0 %v1175
        %1482 = vmatprep.subr.bf16.mxu0 0
        %1483 = vmatpush1.bf16.msra.mxu0 %v1174
        %1484 = vmatprep.subr.bf16.mxu0 0
        %1485 = vmatpush1.bf16.msra.mxu0 %v1173
        %1486 = vmatprep.subr.bf16.mxu0 0
        %1487 = vmatpush1.bf16.msra.mxu0 %v1172
        %1488 = vmatprep.subr.bf16.mxu0 0
        %1489 = vmatpush1.bf16.msra.mxu0 %v1171
        %1490 = vmatprep.subr.bf16.mxu0 0
        %1491 = vmatpush1.bf16.msra.mxu0 %v1170
        %1492 = vmatprep.subr.bf16.mxu0 0
        %1493 = vmatpush2.bf16.msra.mxu0 %v1185
        %1494 = vmatprep.subr.bf16.mxu0 0
        %1495 = vmatpush2.bf16.msra.mxu0 %v1184
        %1496 = vmatprep.subr.bf16.mxu0 0
        %1497 = vmatpush2.bf16.msra.mxu0 %v1183
        %1498 = vmatprep.subr.bf16.mxu0 0
        %1499 = vmatpush2.bf16.msra.mxu0 %v1182
        %1500 = vmatprep.subr.bf16.mxu0 0
        %1501 = vmatpush2.bf16.msra.mxu0 %v1181
        %1502 = vmatprep.subr.bf16.mxu0 0
        %1503 = vmatpush2.bf16.msra.mxu0 %v1180
        %1504 = vmatprep.subr.bf16.mxu0 0
        %1505 = vmatpush2.bf16.msra.mxu0 %v1179
        %1506 = vmatprep.subr.bf16.mxu0 0
        %1507 = vmatpush2.bf16.msra.mxu0 %v1178
        %1508 = vmatprep.mubr.bf16.mxu0 %v280
        %1509 = vmatmul.mubr.bf16.gmra.mxu0 %v272
        %v1510 = vpop.f32.mrf.mxu0
        %v1511 = vadd.f32 %v1470, %v1510
        %v1512 = vpop.f32.mrf.mxu0
        %v1513 = vpop.f32.mrf.mxu0
        %v1514 = vadd.f32 %v1473, %v1513
        %v1515 = vpop.f32.mrf.mxu0
        %1516 = vdwg.mxu0
        %1517 = vmatprep.subr.bf16.mxu0 0
        %1518 = vmatpush1.bf16.msra.mxu0 %v1193
        %1519 = vmatprep.subr.bf16.mxu0 0
        %1520 = vmatpush1.bf16.msra.mxu0 %v1192
        %1521 = vmatprep.subr.bf16.mxu0 0
        %1522 = vmatpush1.bf16.msra.mxu0 %v1191
        %1523 = vmatprep.subr.bf16.mxu0 0
        %1524 = vmatpush1.bf16.msra.mxu0 %v1190
        %1525 = vmatprep.subr.bf16.mxu0 0
        %1526 = vmatpush1.bf16.msra.mxu0 %v1189
        %1527 = vmatprep.subr.bf16.mxu0 0
        %1528 = vmatpush1.bf16.msra.mxu0 %v1188
        %1529 = vmatprep.subr.bf16.mxu0 0
        %1530 = vmatpush1.bf16.msra.mxu0 %v1187
        %1531 = vmatprep.subr.bf16.mxu0 0
        %1532 = vmatpush1.bf16.msra.mxu0 %v1186
        %1533 = vmatprep.subr.bf16.mxu0 0
        %1534 = vmatpush2.bf16.msra.mxu0 %v1201
        %1535 = vmatprep.subr.bf16.mxu0 0
        %1536 = vmatpush2.bf16.msra.mxu0 %v1200
        %1537 = vmatprep.subr.bf16.mxu0 0
        %1538 = vmatpush2.bf16.msra.mxu0 %v1199
        %1539 = vmatprep.subr.bf16.mxu0 0
        %1540 = vmatpush2.bf16.msra.mxu0 %v1198
        %1541 = vmatprep.subr.bf16.mxu0 0
        %1542 = vmatpush2.bf16.msra.mxu0 %v1197
        %1543 = vmatprep.subr.bf16.mxu0 0
        %1544 = vmatpush2.bf16.msra.mxu0 %v1196
        %1545 = vmatprep.subr.bf16.mxu0 0
        %1546 = vmatpush2.bf16.msra.mxu0 %v1195
        %1547 = vmatprep.subr.bf16.mxu0 0
        %1548 = vmatpush2.bf16.msra.mxu0 %v1194
        %1549 = vmatprep.mubr.bf16.mxu0 %v300
        %1550 = vmatmul.mubr.bf16.gmra.mxu0 %v287
        %v1551 = vpop.f32.mrf.mxu0
        %v1552 = vadd.f32 %v1511, %v1551
        %v1553 = vpop.f32.mrf.mxu0
        %v1554 = vpop.f32.mrf.mxu0
        %v1555 = vadd.f32 %v1514, %v1554
        %v1556 = vpop.f32.mrf.mxu0
        %1557 = vdwg.mxu0
        %1558 = vmatprep.subr.bf16.mxu0 0
        %1559 = vmatpush1.bf16.msra.mxu0 %v1209
        %1560 = vmatprep.subr.bf16.mxu0 0
        %1561 = vmatpush1.bf16.msra.mxu0 %v1208
        %1562 = vmatprep.subr.bf16.mxu0 0
        %1563 = vmatpush1.bf16.msra.mxu0 %v1207
        %1564 = vmatprep.subr.bf16.mxu0 0
        %1565 = vmatpush1.bf16.msra.mxu0 %v1206
        %1566 = vmatprep.subr.bf16.mxu0 0
        %1567 = vmatpush1.bf16.msra.mxu0 %v1205
        %1568 = vmatprep.subr.bf16.mxu0 0
        %1569 = vmatpush1.bf16.msra.mxu0 %v1204
        %1570 = vmatprep.subr.bf16.mxu0 0
        %1571 = vmatpush1.bf16.msra.mxu0 %v1203
        %1572 = vmatprep.subr.bf16.mxu0 0
        %1573 = vmatpush1.bf16.msra.mxu0 %v1202
        %1574 = vmatprep.subr.bf16.mxu0 0
        %1575 = vmatpush2.bf16.msra.mxu0 %v1217
        %1576 = vmatprep.subr.bf16.mxu0 0
        %1577 = vmatpush2.bf16.msra.mxu0 %v1216
        %1578 = vmatprep.subr.bf16.mxu0 0
        %1579 = vmatpush2.bf16.msra.mxu0 %v1215
        %1580 = vmatprep.subr.bf16.mxu0 0
        %1581 = vmatpush2.bf16.msra.mxu0 %v1214
        %1582 = vmatprep.subr.bf16.mxu0 0
        %1583 = vmatpush2.bf16.msra.mxu0 %v1213
        %1584 = vmatprep.subr.bf16.mxu0 0
        %1585 = vmatpush2.bf16.msra.mxu0 %v1212
        %1586 = vmatprep.subr.bf16.mxu0 0
        %1587 = vmatpush2.bf16.msra.mxu0 %v1211
        %1588 = vmatprep.subr.bf16.mxu0 0
        %1589 = vmatpush2.bf16.msra.mxu0 %v1210
        %1590 = vmatprep.mubr.bf16.mxu0 %v314
        %1591 = vmatmul.mubr.bf16.gmra.mxu0 %v306
        %v1592 = vpop.f32.mrf.mxu0
        %v1593 = vadd.f32 %v1552, %v1592
        %v1594 = vpop.f32.mrf.mxu0
        %v1595 = vpop.f32.mrf.mxu0
        %v1596 = vadd.f32 %v1555, %v1595
        %v1597 = vpop.f32.mrf.mxu0
        %1598 = vdwg.mxu0
        %1599 = vmatprep.subr.bf16.mxu0 0
        %1600 = vmatpush1.bf16.msra.mxu0 %v1225
        %1601 = vmatprep.subr.bf16.mxu0 0
        %1602 = vmatpush1.bf16.msra.mxu0 %v1224
        %1603 = vmatprep.subr.bf16.mxu0 0
        %1604 = vmatpush1.bf16.msra.mxu0 %v1223
        %1605 = vmatprep.subr.bf16.mxu0 0
        %1606 = vmatpush1.bf16.msra.mxu0 %v1222
        %1607 = vmatprep.subr.bf16.mxu0 0
        %1608 = vmatpush1.bf16.msra.mxu0 %v1221
        %1609 = vmatprep.subr.bf16.mxu0 0
        %1610 = vmatpush1.bf16.msra.mxu0 %v1220
        %1611 = vmatprep.subr.bf16.mxu0 0
        %1612 = vmatpush1.bf16.msra.mxu0 %v1219
        %1613 = vmatprep.subr.bf16.mxu0 0
        %1614 = vmatpush1.bf16.msra.mxu0 %v1218
        %1615 = vmatprep.subr.bf16.mxu0 0
        %1616 = vmatpush2.bf16.msra.mxu0 %v1233
        %1617 = vmatprep.subr.bf16.mxu0 0
        %1618 = vmatpush2.bf16.msra.mxu0 %v1232
        %1619 = vmatprep.subr.bf16.mxu0 0
        %1620 = vmatpush2.bf16.msra.mxu0 %v1231
        %1621 = vmatprep.subr.bf16.mxu0 0
        %1622 = vmatpush2.bf16.msra.mxu0 %v1230
        %1623 = vmatprep.subr.bf16.mxu0 0
        %1624 = vmatpush2.bf16.msra.mxu0 %v1229
        %1625 = vmatprep.subr.bf16.mxu0 0
        %1626 = vmatpush2.bf16.msra.mxu0 %v1228
        %1627 = vmatprep.subr.bf16.mxu0 0
        %1628 = vmatpush2.bf16.msra.mxu0 %v1227
        %1629 = vmatprep.subr.bf16.mxu0 0
        %1630 = vmatpush2.bf16.msra.mxu0 %v1226
        %1631 = vmatprep.mubr.bf16.mxu0 %v334
        %1632 = vmatmul.mubr.bf16.gmra.mxu0 %v321
        %v1633 = vpop.f32.mrf.mxu0
        %v1634 = vadd.f32 %v1593, %v1633
        %v1635 = vpop.f32.mrf.mxu0
        %v1636 = vpop.f32.mrf.mxu0
        %v1637 = vadd.f32 %v1596, %v1636
        %v1638 = vpop.f32.mrf.mxu0
        %1639 = vdwg.mxu0
        %1640 = vmatprep.subr.bf16.mxu0 0
        %1641 = vmatpush1.bf16.msra.mxu0 %v1241
        %1642 = vmatprep.subr.bf16.mxu0 0
        %1643 = vmatpush1.bf16.msra.mxu0 %v1240
        %1644 = vmatprep.subr.bf16.mxu0 0
        %1645 = vmatpush1.bf16.msra.mxu0 %v1239
        %1646 = vmatprep.subr.bf16.mxu0 0
        %1647 = vmatpush1.bf16.msra.mxu0 %v1238
        %1648 = vmatprep.subr.bf16.mxu0 0
        %1649 = vmatpush1.bf16.msra.mxu0 %v1237
        %1650 = vmatprep.subr.bf16.mxu0 0
        %1651 = vmatpush1.bf16.msra.mxu0 %v1236
        %1652 = vmatprep.subr.bf16.mxu0 0
        %1653 = vmatpush1.bf16.msra.mxu0 %v1235
        %1654 = vmatprep.subr.bf16.mxu0 0
        %1655 = vmatpush1.bf16.msra.mxu0 %v1234
        %1656 = vmatprep.subr.bf16.mxu0 0
        %1657 = vmatpush2.bf16.msra.mxu0 %v1249
        %1658 = vmatprep.subr.bf16.mxu0 0
        %1659 = vmatpush2.bf16.msra.mxu0 %v1248
        %1660 = vmatprep.subr.bf16.mxu0 0
        %1661 = vmatpush2.bf16.msra.mxu0 %v1247
        %1662 = vmatprep.subr.bf16.mxu0 0
        %1663 = vmatpush2.bf16.msra.mxu0 %v1246
        %1664 = vmatprep.subr.bf16.mxu0 0
        %1665 = vmatpush2.bf16.msra.mxu0 %v1245
        %1666 = vmatprep.subr.bf16.mxu0 0
        %1667 = vmatpush2.bf16.msra.mxu0 %v1244
        %1668 = vmatprep.subr.bf16.mxu0 0
        %1669 = vmatpush2.bf16.msra.mxu0 %v1243
        %1670 = vmatprep.subr.bf16.mxu0 0
        %1671 = vmatpush2.bf16.msra.mxu0 %v1242
        %1672 = vmatprep.mubr.bf16.mxu0 %v348
        %1673 = vmatmul.mubr.bf16.gmra.mxu0 %v340
        %v1674 = vpop.f32.mrf.mxu0
        %v1675 = vadd.f32 %v1634, %v1674
        %v1676 = vpop.f32.mrf.mxu0
        %v1677 = vpop.f32.mrf.mxu0
        %v1678 = vadd.f32 %v1637, %v1677
        %v1679 = vpop.f32.mrf.mxu0
        %1680 = vdwg.mxu0
        %1681 = vmatprep.subr.bf16.mxu0 0
        %1682 = vmatpush1.bf16.msra.mxu0 %v1257
        %1683 = vmatprep.subr.bf16.mxu0 0
        %1684 = vmatpush1.bf16.msra.mxu0 %v1256
        %1685 = vmatprep.subr.bf16.mxu0 0
        %1686 = vmatpush1.bf16.msra.mxu0 %v1255
        %1687 = vmatprep.subr.bf16.mxu0 0
        %1688 = vmatpush1.bf16.msra.mxu0 %v1254
        %1689 = vmatprep.subr.bf16.mxu0 0
        %1690 = vmatpush1.bf16.msra.mxu0 %v1253
        %1691 = vmatprep.subr.bf16.mxu0 0
        %1692 = vmatpush1.bf16.msra.mxu0 %v1252
        %1693 = vmatprep.subr.bf16.mxu0 0
        %1694 = vmatpush1.bf16.msra.mxu0 %v1251
        %1695 = vmatprep.subr.bf16.mxu0 0
        %1696 = vmatpush1.bf16.msra.mxu0 %v1250
        %1697 = vmatprep.subr.bf16.mxu0 0
        %1698 = vmatpush2.bf16.msra.mxu0 %v1265
        %1699 = vmatprep.subr.bf16.mxu0 0
        %1700 = vmatpush2.bf16.msra.mxu0 %v1264
        %1701 = vmatprep.subr.bf16.mxu0 0
        %1702 = vmatpush2.bf16.msra.mxu0 %v1263
        %1703 = vmatprep.subr.bf16.mxu0 0
        %1704 = vmatpush2.bf16.msra.mxu0 %v1262
        %1705 = vmatprep.subr.bf16.mxu0 0
        %1706 = vmatpush2.bf16.msra.mxu0 %v1261
        %1707 = vmatprep.subr.bf16.mxu0 0
        %1708 = vmatpush2.bf16.msra.mxu0 %v1260
        %1709 = vmatprep.subr.bf16.mxu0 0
        %1710 = vmatpush2.bf16.msra.mxu0 %v1259
        %1711 = vmatprep.subr.bf16.mxu0 0
        %1712 = vmatpush2.bf16.msra.mxu0 %v1258
        %1713 = vmatprep.mubr.bf16.mxu0 %v368
        %1714 = vmatmul.mubr.bf16.gmra.mxu0 %v355
        %v1715 = vpop.f32.mrf.mxu0
        %v1716 = vadd.f32 %v1675, %v1715
        %v1717 = vpop.f32.mrf.mxu0
        %v1718 = vpop.f32.mrf.mxu0
        %v1719 = vadd.f32 %v1678, %v1718
        %v1720 = vpop.f32.mrf.mxu0
        %1721 = vdwg.mxu0
        %v1722 = vld [vmem:[%s2] sm:$0x1]
        %v1724 = vlaneseq
        %v1725 = vshrl.u32 %v1724, 7
        %v1726 = vsub.s32 0, %v1725
        %v1727 = vrot.slane %v1722, %v1726
        %v1729 = vmul.f32 %v1716, %v1727
        %v1730 = vmul.f32 %v1719, %v1727
        %v1731 = vld [vmem:[%s3] sm:$0x1]
        %v1733 = vlaneseq
        %v1734 = vshrl.u32 %v1733, 7
        %v1735 = vsub.s32 0, %v1734
        %v1736 = vrot.slane %v1731, %v1735
        %v1738 = vadd.f32 %v1729, %v1736
        %v1739 = vadd.f32 %v1730, %v1736
        %vm1740 = vcmp.ge.f32.partialorder %v1738, 0.0
        %vm1741 = vcmp.ge.f32.partialorder %v1739, 0.0
        %v1742 = vmul.f32 %v1738, 0.2
        %v1743 = vmul.f32 %v1739, 0.2
        %v1744 = vsel %vm1740, %v1738, %v1742
        %v1745 = vsel %vm1741, %v1739, %v1743
        %v1746 = vpack.c.bf16 %v1745, %v1744
        %v1748 = vunpack.c.l.b16 %v1746
        %v1749 = vunpack.c.h.b16 %v1746
        %v1750 = vpack.c.b16 %v1748, %v1748
        %v1751 = vpack.c.b16 %v1749, %v1749
        %s1754 = smul.u32 %s200, 2
        %s1755 = smul.addr %s1754, 4
        %s1756 = scalar_lea.vmem %s197, %s1755
        %1757 = vst [vmem:[%s1756] sm:$0xf] %v1750
        %vm1758 = vcmask 1043456
        %vm1759 = vsmask.f32 3328
        %vm1760 = vmand %vm1758, %vm1759
        %v1761 = vld [vmem:[%s1756 + $0x4] sm:$0xf]
        %v1762 = vsel %vm1760, %v1751, %v1761
        %1763 = vst [vmem:[%s1756 + $0x4] sm:$0xf] %v1762
      $region41: #{_lambda_.3} parent=35 // loop_footer
        %s204 = sadd.s32 1, %s200
      $region42: #{_lambda_.3} parent=35 // loop_footer_branch
        %199 = sbr.rel target = $region38
      $region43: #{_lambda_.3} parent=35 // loop_exit
        _
      %p1764 = scmp.lt.s32.totalorder %s15, 1
      %s1765 = scalar_select %p1764, %s15, 1
      %s1766 = smul.addr %s1765, 30
      %s1767 = smul.addr %s1766, 4
      %s1768 = scalar_lea.vmem %s4, %s1767
      // Predicated region
      $region44: #{_lambda_.3} parent=35 // pred_check
        %p1769 = pneg %p122
      $region45: #{_lambda_.3} parent=35 // pred_check_branch
        %1771 = sbr.rel (%p1769) target = $region47
      $region46: #{_lambda_.3} parent=35 // pred_region
        _
      $region47: #{_lambda_.3} parent=35 // pred_fallthru
        _
    $region36: #{_lambda_.3} parent=5 // pred_fallthru
      _
    %p1772 = scmp.le.s32.totalorder 2, %s10
    // Predicated region
    $region48: #{_lambda_.3} parent=5 // pred_check
      %p1773 = pneg %p1772
    $region49: #{_lambda_.3} parent=5 // pred_check_branch
      %1775 = sbr.rel (%p1773) target = $region51
    $region50: #{_lambda_.3} parent=5 // pred_region
      %s1776 = ssub.s32 %s10, 2
      // Predicated region
      $region52: #{_lambda_.3} parent=50 // pred_check
        %p1777 = pneg %p128
      $region53: #{_lambda_.3} parent=50 // pred_check_branch
        %1779 = sbr.rel (%p1777) target = $region55
      $region54: #{_lambda_.3} parent=50 // pred_region
        %p1780 = scmp.lt.s32.totalorder %s16, 1
        %s1781 = scalar_select %p1780, %s16, 1
        %s1782 = smul.addr %s1781, 30
        %s1783 = smul.addr %s1782, 4
        %s1784 = scalar_lea.vmem %s4, %s1783
      $region55: #{_lambda_.3} parent=50 // pred_fallthru
        _
    $region51: #{_lambda_.3} parent=5 // pred_fallthru
      _
  $region6: #{_lambda_.3} parent=0 // loop_footer
    %s14 = sadd.s32 1, %s10
  $region7: #{_lambda_.3} parent=0 // loop_footer_branch
    %9 = sbr.rel target = $region3
  $region8: #{_lambda_.3} parent=0 // loop_exit
    _

// kernel: _lambda_.5
$region0: #{_lambda_.5}
  #allocation0 [shape = 'u32[]', space=smem, size = 0x4, offset = 0x4, fixed_abs, tag = 'smem constant byte address 0x4 - core index']
  #allocation1 [shape = 'u32[144,128]{1,0:T(1,128)}', space=vmem, size = 0x12000, scoped, tag = 'internal scratch']
  %s0 = inlined_call_operand.vmem [shape: bf16[2,16,16,128], index: 0, kind: input, shape index: {}]
  %s1 = inlined_call_operand.vmem [shape: bf16[2048,128], index: 1, kind: input, shape index: {}]
  %s2 = inlined_call_operand.vmem [shape: f32[1,128], index: 2, kind: input, shape index: {}]
  %s3 = inlined_call_operand.vmem [shape: f32[1,128], index: 3, kind: input, shape index: {}]
  %s4 = inlined_call_operand.vmem [shape: f32[2,13,13,128], index: 4, kind: output, shape index: {}]
  %s5 = sld [smem:[#allocation0]]
  $region56: #{_lambda_.5} parent=0
    _
  %s7 = ssub.s32 1, %s5
  %s8 = scalar_select 0, %s7, %s5
  loop: start=0, step=1, limit=4
  $region2: #{_lambda_.5} parent=0 // loop_pre_header
    _
  $region3: #{_lambda_.5} parent=0 // loop_header
    %s10 = sphi 0, %s14
    %p11 = scmp.ge.s32.totalorder %s10, 4
    %s20 = sphi 0, %s22
    %s23 = sphi 0, %s20
    %s24 = sphi 0, %s23
    %s40 = sphi 0, %s24
    %s44 = sphi 0, %s44
    %s46 = sphi 0, %s44
    %s47 = sphi 0, %s46
    %s61 = sphi 0, %s47
    %s65 = sphi 0, %s65
    %s67 = sphi 0, %s65
    %s68 = sphi 0, %s67
    %s82 = sphi 0, %s68
    %s86 = sphi 0, %s86
    %s88 = sphi 0, %s86
    %s89 = sphi 0, %s88
    %s103 = sphi 0, %s89
    %s109 = sphi 0, %s111
    %s112 = sphi 0, %s109
    %s113 = sphi 0, %s112
    %s129 = sphi 0, %s113
  $region4: #{_lambda_.5} parent=0 // loop_header_branch
    %13 = sbr.rel (%p11) target = $region8
  $region5: #{_lambda_.5} parent=0 // loop_body
    %s15 = ssub.s32 %s10, 1
    %s16 = ssub.s32 %s10, 2
    %s17 = sadd.s32 %s10, 1
    %s18 = ssub.s32 %s10, %s17
    %p19 = scmp.eq.s32.totalorder %s18, 0
    %s21 = sadd.s32 %s20, 1
    %s22 = scalar_select %p19, %s20, %s21
    %p25 = pneg %p19
    %p26 = scmp.eq.s32.totalorder %s10, 1
    %p27 = por %p25, %p26
    %p28 = scmp.ne.s32.totalorder %s20, %s23
    %p29 = scmp.eq.s32.totalorder %s10, 0
    %p30 = por %p28, %p29
    %p31 = scmp.ne.s32.totalorder %s20, %s23
    %p32 = scmp.eq.s32.totalorder %s15, 1
    %p33 = por %p31, %p32
    %p34 = scmp.ne.s32.totalorder %s23, %s24
    %p35 = scmp.eq.s32.totalorder %s15, 0
    %p36 = por %p34, %p35
    %p37 = scmp.ne.s32.totalorder %s23, %s24
    %p38 = scmp.eq.s32.totalorder %s16, 1
    %p39 = por %p37, %p38
    %p41 = scmp.ne.s32.totalorder %s24, %s40
    %p42 = scmp.eq.s32.totalorder %s16, 0
    %p43 = por %p41, %p42
    %s45 = sadd.s32 %s44, 1
    %p48 = scmp.eq.s32.totalorder %s10, 1
    %p49 = scmp.ne.s32.totalorder %s44, %s46
    %p50 = scmp.eq.s32.totalorder %s10, 0
    %p51 = por %p49, %p50
    %p52 = scmp.ne.s32.totalorder %s44, %s46
    %p53 = scmp.eq.s32.totalorder %s15, 1
    %p54 = por %p52, %p53
    %p55 = scmp.ne.s32.totalorder %s46, %s47
    %p56 = scmp.eq.s32.totalorder %s15, 0
    %p57 = por %p55, %p56
    %p58 = scmp.ne.s32.totalorder %s46, %s47
    %p59 = scmp.eq.s32.totalorder %s16, 1
    %p60 = por %p58, %p59
    %p62 = scmp.ne.s32.totalorder %s47, %s61
    %p63 = scmp.eq.s32.totalorder %s16, 0
    %p64 = por %p62, %p63
    %s66 = sadd.s32 %s65, 1
    %p69 = scmp.eq.s32.totalorder %s10, 1
    %p70 = scmp.ne.s32.totalorder %s65, %s67
    %p71 = scmp.eq.s32.totalorder %s10, 0
    %p72 = por %p70, %p71
    %p73 = scmp.ne.s32.totalorder %s65, %s67
    %p74 = scmp.eq.s32.totalorder %s15, 1
    %p75 = por %p73, %p74
    %p76 = scmp.ne.s32.totalorder %s67, %s68
    %p77 = scmp.eq.s32.totalorder %s15, 0
    %p78 = por %p76, %p77
    %p79 = scmp.ne.s32.totalorder %s67, %s68
    %p80 = scmp.eq.s32.totalorder %s16, 1
    %p81 = por %p79, %p80
    %p83 = scmp.ne.s32.totalorder %s68, %s82
    %p84 = scmp.eq.s32.totalorder %s16, 0
    %p85 = por %p83, %p84
    %s87 = sadd.s32 %s86, 1
    %p90 = scmp.eq.s32.totalorder %s10, 1
    %p91 = scmp.ne.s32.totalorder %s86, %s88
    %p92 = scmp.eq.s32.totalorder %s10, 0
    %p93 = por %p91, %p92
    %p94 = scmp.ne.s32.totalorder %s86, %s88
    %p95 = scmp.eq.s32.totalorder %s15, 1
    %p96 = por %p94, %p95
    %p97 = scmp.ne.s32.totalorder %s88, %s89
    %p98 = scmp.eq.s32.totalorder %s15, 0
    %p99 = por %p97, %p98
    %p100 = scmp.ne.s32.totalorder %s88, %s89
    %p101 = scmp.eq.s32.totalorder %s16, 1
    %p102 = por %p100, %p101
    %p104 = scmp.ne.s32.totalorder %s89, %s103
    %p105 = scmp.eq.s32.totalorder %s16, 0
    %p106 = por %p104, %p105
    %s107 = ssub.s32 %s10, %s17
    %p108 = scmp.eq.s32.totalorder %s107, 0
    %s110 = sadd.s32 %s109, 1
    %s111 = scalar_select %p108, %s109, %s110
    %p114 = pneg %p108
    %p115 = scmp.eq.s32.totalorder %s10, 1
    %p116 = por %p114, %p115
    %p117 = scmp.ne.s32.totalorder %s109, %s112
    %p118 = scmp.eq.s32.totalorder %s10, 0
    %p119 = por %p117, %p118
    %p120 = scmp.ne.s32.totalorder %s109, %s112
    %p121 = scmp.eq.s32.totalorder %s15, 1
    %p122 = por %p120, %p121
    %p123 = scmp.ne.s32.totalorder %s112, %s113
    %p124 = scmp.eq.s32.totalorder %s15, 0
    %p125 = por %p123, %p124
    %p126 = scmp.ne.s32.totalorder %s112, %s113
    %p127 = scmp.eq.s32.totalorder %s16, 1
    %p128 = por %p126, %p127
    %p130 = scmp.ne.s32.totalorder %s113, %s129
    %p131 = scmp.eq.s32.totalorder %s16, 0
    %p132 = por %p130, %p131
    %p133 = scmp.le.s32.totalorder 1, %s10
    %p134 = scmp.lt.s32.totalorder %s10, 3
    %p135 = pnand %p133, %p134
    %p136 = pneg %p135
    // Predicated region
    $region9: #{_lambda_.5} parent=5 // pred_check
      _
    $region10: #{_lambda_.5} parent=5 // pred_check_branch
      %138 = sbr.rel (%p135) target = $region12
    $region11: #{_lambda_.5} parent=5 // pred_region
      %s139 = ssub.s32 %s10, 1
      // Predicated region
      $region13: #{_lambda_.5} parent=11 // pred_check
        %p140 = pneg %p57
      $region14: #{_lambda_.5} parent=11 // pred_check_branch
        %142 = sbr.rel (%p140) target = $region16
      $region15: #{_lambda_.5} parent=11 // pred_region
        _
      $region16: #{_lambda_.5} parent=11 // pred_fallthru
        _
      // Predicated region
      $region17: #{_lambda_.5} parent=11 // pred_check
        %p143 = pneg %p78
      $region18: #{_lambda_.5} parent=11 // pred_check_branch
        %145 = sbr.rel (%p143) target = $region20
      $region19: #{_lambda_.5} parent=11 // pred_region
        _
      $region20: #{_lambda_.5} parent=11 // pred_fallthru
        _
      // Predicated region
      $region21: #{_lambda_.5} parent=11 // pred_check
        %p146 = pneg %p99
      $region22: #{_lambda_.5} parent=11 // pred_check_branch
        %148 = sbr.rel (%p146) target = $region24
      $region23: #{_lambda_.5} parent=11 // pred_region
        _
      $region24: #{_lambda_.5} parent=11 // pred_fallthru
        _
    $region12: #{_lambda_.5} parent=5 // pred_fallthru
      _
    %p149 = scmp.lt.s32.totalorder %s10, 2
    // Predicated region
    $region25: #{_lambda_.5} parent=5 // pred_check
      %p150 = pneg %p149
    $region26: #{_lambda_.5} parent=5 // pred_check_branch
      %152 = sbr.rel (%p150) target = $region28
    $region27: #{_lambda_.5} parent=5 // pred_region
      // Predicated region
      $region29: #{_lambda_.5} parent=27 // pred_check
        %p153 = pneg %p30
      $region30: #{_lambda_.5} parent=27 // pred_check_branch
        %155 = sbr.rel (%p153) target = $region32
      $region31: #{_lambda_.5} parent=27 // pred_region
        %p156 = scmp.lt.s32.totalorder %s10, 1
        %s157 = scalar_select %p156, %s10, 1
        %s158 = smul.addr %s157, 32
        %s159 = smul.addr %s158, 4
        %s160 = scalar_lea.vmem %s0, %s159
      $region32: #{_lambda_.5} parent=27 // pred_fallthru
        _
    $region28: #{_lambda_.5} parent=5 // pred_fallthru
      _
    %p161 = scmp.le.s32.totalorder 1, %s10
    %p162 = scmp.lt.s32.totalorder %s10, 3
    %p163 = pnand %p161, %p162
    %p164 = pneg %p163
    // Predicated region
    $region33: #{_lambda_.5} parent=5 // pred_check
      _
    $region34: #{_lambda_.5} parent=5 // pred_check_branch
      %166 = sbr.rel (%p163) target = $region36
    $region35: #{_lambda_.5} parent=5 // pred_region
      %s167 = ssub.s32 %s10, 1
      %p168 = scmp.lt.s32.totalorder %s15, 1
      %s169 = scalar_select %p168, %s15, 1
      %s170 = smul.addr %s169, 32
      %s171 = smul.addr %s170, 4
      %s172 = scalar_lea.vmem %s0, %s171
      %p173 = pneg %p36
      %p174 = pneg %p33
      %p175 = pneg %p57
      %p176 = pneg %p54
      %p177 = pneg %p78
      %p178 = pneg %p75
      %p179 = pneg %p99
      %p180 = pneg %p96
      %p181 = pneg %p125
      %p182 = pneg %p122
      %p183 = scmp.lt.s32.totalorder %s15, 1
      %s184 = scalar_select %p183, %s15, 1
      %s185 = smul.addr %s184, 26
      %s186 = smul.addr %s185, 8
      %s187 = scalar_lea.vmem %s4, %s186
      %p188 = scmp.lt.s32.totalorder %s15, 1
      %s189 = scalar_select %p188, %s15, 1
      %s190 = smul.addr %s189, 32
      %s191 = smul.addr %s190, 4
      %s192 = scalar_lea.vmem %s0, %s191
      %p193 = scmp.lt.s32.totalorder %s15, 1
      %s194 = scalar_select %p193, %s15, 1
      %s195 = smul.addr %s194, 26
      %s196 = smul.addr %s195, 8
      %s197 = scalar_lea.vmem %s4, %s196
      loop: start=0, step=1, limit=13
      $region37: #{_lambda_.5} parent=35 // loop_pre_header
        _
      $region38: #{_lambda_.5} parent=35 // loop_header
        %s200 = sphi 0, %s204
        %p201 = scmp.ge.s32.totalorder %s200, 13
      $region39: #{_lambda_.5} parent=35 // loop_header_branch
        %203 = sbr.rel (%p201) target = $region43
      $region40: #{_lambda_.5} parent=35 // loop_body
        %s205 = smul.u32 %s200, 2
        %s206 = smul.addr %s205, 4
        %s207 = scalar_lea.vmem %s192, %s206
        %v208 = vld [vmem:[%s207] sm:$0xf]
        %v209 = vld [vmem:[%s207 + $0x4] sm:$0xf]
        %s210 = sadd.s32 %s200, 1
        %s211 = smul.u32 %s210, 2
        %s212 = smul.addr %s211, 4
        %s213 = scalar_lea.vmem %s192, %s212
        %v214 = vld [vmem:[%s213] sm:$0xf]
        %v215 = vld [vmem:[%s213 + $0x4] sm:$0xf]
        %s216 = sadd.s32 %s200, 2
        %s217 = smul.u32 %s216, 2
        %s218 = smul.addr %s217, 4
        %s219 = scalar_lea.vmem %s192, %s218
        %v220 = vld [vmem:[%s219] sm:$0xf]
        %v221 = vld [vmem:[%s219 + $0x4] sm:$0xf]
        %s222 = sadd.s32 %s200, 3
        %s223 = smul.u32 %s222, 2
        %s224 = smul.addr %s223, 4
        %s225 = scalar_lea.vmem %s192, %s224
        %v226 = vld [vmem:[%s225] sm:$0xf]
        %v227 = vld [vmem:[%s225 + $0x4] sm:$0xf]
        %v230 = vunpack.c.l.b16 %v208
        %v231 = vunpack.c.l.b16 %v209
        %v232 = vpack.c.b16 %v231, %v230
        %v235 = vshrl.u32 %v232, 16
        %v237 = vshll.u32 %v232, 16
        %v239 = vrot.slane %v237, 1
        %v240 = vor.u32 %v235, %v239
        %v242 = vrot.slane %v232, 1
        %v244 = vrot.slane %v235, 1
        %v245 = vrot.slane %v237, 2
        %v246 = vor.u32 %v244, %v245
        %v250 = vunpack.c.l.b16 %v214
        %v251 = vunpack.c.l.b16 %v215
        %v252 = vpack.c.b16 %v251, %v250
        %v255 = vshrl.u32 %v252, 16
        %v257 = vshll.u32 %v252, 16
        %v259 = vrot.slane %v257, 1
        %v260 = vor.u32 %v255, %v259
        %v262 = vrot.slane %v252, 1
        %v264 = vrot.slane %v255, 1
        %v265 = vrot.slane %v257, 2
        %v266 = vor.u32 %v264, %v265
        %v270 = vunpack.c.l.b16 %v220
        %v271 = vunpack.c.l.b16 %v221
        %v272 = vpack.c.b16 %v271, %v270
        %v275 = vshrl.u32 %v272, 16
        %v277 = vshll.u32 %v272, 16
        %v279 = vrot.slane %v277, 1
        %v280 = vor.u32 %v275, %v279
        %v282 = vrot.slane %v272, 1
        %v284 = vrot.slane %v275, 1
        %v285 = vrot.slane %v277, 2
        %v286 = vor.u32 %v284, %v285
        %v290 = vunpack.c.l.b16 %v226
        %v291 = vunpack.c.l.b16 %v227
        %v292 = vpack.c.b16 %v291, %v290
        %v295 = vshrl.u32 %v292, 16
        %v297 = vshll.u32 %v292, 16
        %v299 = vrot.slane %v297, 1
        %v300 = vor.u32 %v295, %v299
        %v302 = vrot.slane %v292, 1
        %v304 = vrot.slane %v295, 1
        %v305 = vrot.slane %v297, 2
        %v306 = vor.u32 %v304, %v305
        %v308 = vld [vmem:[%s1] sm:$0xf]
        %v309 = vld [vmem:[%s1 + $0x4] sm:$0xf]
        %v310 = vld [vmem:[%s1 + $0x8] sm:$0xf]
        %v311 = vld [vmem:[%s1 + $0xc] sm:$0xf]
        %v312 = vld [vmem:[%s1 + $0x10] sm:$0xf]
        %v313 = vld [vmem:[%s1 + $0x14] sm:$0xf]
        %v314 = vld [vmem:[%s1 + $0x18] sm:$0xf]
        %v315 = vld [vmem:[%s1 + $0x1c] sm:$0xf]
        %v316 = vld [vmem:[%s1 + $0x20] sm:$0xf]
        %v317 = vld [vmem:[%s1 + $0x24] sm:$0xf]
        %v318 = vld [vmem:[%s1 + $0x28] sm:$0xf]
        %v319 = vld [vmem:[%s1 + $0x2c] sm:$0xf]
        %v320 = vld [vmem:[%s1 + $0x30] sm:$0xf]
        %v321 = vld [vmem:[%s1 + $0x34] sm:$0xf]
        %v322 = vld [vmem:[%s1 + $0x38] sm:$0xf]
        %v323 = vld [vmem:[%s1 + $0x3c] sm:$0xf]
        %v324 = vld [vmem:[%s1 + $0x40] sm:$0xf]
        %v325 = vld [vmem:[%s1 + $0x44] sm:$0xf]
        %v326 = vld [vmem:[%s1 + $0x48] sm:$0xf]
        %v327 = vld [vmem:[%s1 + $0x4c] sm:$0xf]
        %v328 = vld [vmem:[%s1 + $0x50] sm:$0xf]
        %v329 = vld [vmem:[%s1 + $0x54] sm:$0xf]
        %v330 = vld [vmem:[%s1 + $0x58] sm:$0xf]
        %v331 = vld [vmem:[%s1 + $0x5c] sm:$0xf]
        %v332 = vld [vmem:[%s1 + $0x60] sm:$0xf]
        %v333 = vld [vmem:[%s1 + $0x64] sm:$0xf]
        %v334 = vld [vmem:[%s1 + $0x68] sm:$0xf]
        %v335 = vld [vmem:[%s1 + $0x6c] sm:$0xf]
        %v336 = vld [vmem:[%s1 + $0x70] sm:$0xf]
        %v337 = vld [vmem:[%s1 + $0x74] sm:$0xf]
        %v338 = vld [vmem:[%s1 + $0x78] sm:$0xf]
        %v339 = vld [vmem:[%s1 + $0x7c] sm:$0xf]
        %v340 = vld [vmem:[%s1 + $0x80] sm:$0xf]
        %v341 = vld [vmem:[%s1 + $0x84] sm:$0xf]
        %v342 = vld [vmem:[%s1 + $0x88] sm:$0xf]
        %v343 = vld [vmem:[%s1 + $0x8c] sm:$0xf]
        %v344 = vld [vmem:[%s1 + $0x90] sm:$0xf]
        %v345 = vld [vmem:[%s1 + $0x94] sm:$0xf]
        %v346 = vld [vmem:[%s1 + $0x98] sm:$0xf]
        %v347 = vld [vmem:[%s1 + $0x9c] sm:$0xf]
        %v348 = vld [vmem:[%s1 + $0xa0] sm:$0xf]
        %v349 = vld [vmem:[%s1 + $0xa4] sm:$0xf]
        %v350 = vld [vmem:[%s1 + $0xa8] sm:$0xf]
        %v351 = vld [vmem:[%s1 + $0xac] sm:$0xf]
        %v352 = vld [vmem:[%s1 + $0xb0] sm:$0xf]
        %v353 = vld [vmem:[%s1 + $0xb4] sm:$0xf]
        %v354 = vld [vmem:[%s1 + $0xb8] sm:$0xf]
        %v355 = vld [vmem:[%s1 + $0xbc] sm:$0xf]
        %v356 = vld [vmem:[%s1 + $0xc0] sm:$0xf]
        %v357 = vld [vmem:[%s1 + $0xc4] sm:$0xf]
        %v358 = vld [vmem:[%s1 + $0xc8] sm:$0xf]
        %v359 = vld [vmem:[%s1 + $0xcc] sm:$0xf]
        %v360 = vld [vmem:[%s1 + $0xd0] sm:$0xf]
        %v361 = vld [vmem:[%s1 + $0xd4] sm:$0xf]
        %v362 = vld [vmem:[%s1 + $0xd8] sm:$0xf]
        %v363 = vld [vmem:[%s1 + $0xdc] sm:$0xf]
        %v364 = vld [vmem:[%s1 + $0xe0] sm:$0xf]
        %v365 = vld [vmem:[%s1 + $0xe4] sm:$0xf]
        %v366 = vld [vmem:[%s1 + $0xe8] sm:$0xf]
        %v367 = vld [vmem:[%s1 + $0xec] sm:$0xf]
        %v368 = vld [vmem:[%s1 + $0xf0] sm:$0xf]
        %v369 = vld [vmem:[%s1 + $0xf4] sm:$0xf]
        %v370 = vld [vmem:[%s1 + $0xf8] sm:$0xf]
        %v371 = vld [vmem:[%s1 + $0xfc] sm:$0xf]
        %v372 = vld [vmem:[%s1 + $0x100] sm:$0xf]
        %v373 = vld [vmem:[%s1 + $0x104] sm:$0xf]
        %v374 = vld [vmem:[%s1 + $0x108] sm:$0xf]
        %v375 = vld [vmem:[%s1 + $0x10c] sm:$0xf]
        %v376 = vld [vmem:[%s1 + $0x110] sm:$0xf]
        %v377 = vld [vmem:[%s1 + $0x114] sm:$0xf]
        %v378 = vld [vmem:[%s1 + $0x118] sm:$0xf]
        %v379 = vld [vmem:[%s1 + $0x11c] sm:$0xf]
        %v380 = vld [vmem:[%s1 + $0x120] sm:$0xf]
        %v381 = vld [vmem:[%s1 + $0x124] sm:$0xf]
        %v382 = vld [vmem:[%s1 + $0x128] sm:$0xf]
        %v383 = vld [vmem:[%s1 + $0x12c] sm:$0xf]
        %v384 = vld [vmem:[%s1 + $0x130] sm:$0xf]
        %v385 = vld [vmem:[%s1 + $0x134] sm:$0xf]
        %v386 = vld [vmem:[%s1 + $0x138] sm:$0xf]
        %v387 = vld [vmem:[%s1 + $0x13c] sm:$0xf]
        %v388 = vld [vmem:[%s1 + $0x140] sm:$0xf]
        %v389 = vld [vmem:[%s1 + $0x144] sm:$0xf]
        %v390 = vld [vmem:[%s1 + $0x148] sm:$0xf]
        %v391 = vld [vmem:[%s1 + $0x14c] sm:$0xf]
        %v392 = vld [vmem:[%s1 + $0x150] sm:$0xf]
        %v393 = vld [vmem:[%s1 + $0x154] sm:$0xf]
        %v394 = vld [vmem:[%s1 + $0x158] sm:$0xf]
        %v395 = vld [vmem:[%s1 + $0x15c] sm:$0xf]
        %v396 = vld [vmem:[%s1 + $0x160] sm:$0xf]
        %v397 = vld [vmem:[%s1 + $0x164] sm:$0xf]
        %v398 = vld [vmem:[%s1 + $0x168] sm:$0xf]
        %v399 = vld [vmem:[%s1 + $0x16c] sm:$0xf]
        %v400 = vld [vmem:[%s1 + $0x170] sm:$0xf]
        %v401 = vld [vmem:[%s1 + $0x174] sm:$0xf]
        %v402 = vld [vmem:[%s1 + $0x178] sm:$0xf]
        %v403 = vld [vmem:[%s1 + $0x17c] sm:$0xf]
        %v404 = vld [vmem:[%s1 + $0x180] sm:$0xf]
        %v405 = vld [vmem:[%s1 + $0x184] sm:$0xf]
        %v406 = vld [vmem:[%s1 + $0x188] sm:$0xf]
        %v407 = vld [vmem:[%s1 + $0x18c] sm:$0xf]
        %v408 = vld [vmem:[%s1 + $0x190] sm:$0xf]
        %v409 = vld [vmem:[%s1 + $0x194] sm:$0xf]
        %v410 = vld [vmem:[%s1 + $0x198] sm:$0xf]
        %v411 = vld [vmem:[%s1 + $0x19c] sm:$0xf]
        %v412 = vld [vmem:[%s1 + $0x1a0] sm:$0xf]
        %v413 = vld [vmem:[%s1 + $0x1a4] sm:$0xf]
        %v414 = vld [vmem:[%s1 + $0x1a8] sm:$0xf]
        %v415 = vld [vmem:[%s1 + $0x1ac] sm:$0xf]
        %v416 = vld [vmem:[%s1 + $0x1b0] sm:$0xf]
        %v417 = vld [vmem:[%s1 + $0x1b4] sm:$0xf]
        %v418 = vld [vmem:[%s1 + $0x1b8] sm:$0xf]
        %v419 = vld [vmem:[%s1 + $0x1bc] sm:$0xf]
        %v420 = vld [vmem:[%s1 + $0x1c0] sm:$0xf]
        %v421 = vld [vmem:[%s1 + $0x1c4] sm:$0xf]
        %v422 = vld [vmem:[%s1 + $0x1c8] sm:$0xf]
        %v423 = vld [vmem:[%s1 + $0x1cc] sm:$0xf]
        %v424 = vld [vmem:[%s1 + $0x1d0] sm:$0xf]
        %v425 = vld [vmem:[%s1 + $0x1d4] sm:$0xf]
        %v426 = vld [vmem:[%s1 + $0x1d8] sm:$0xf]
        %v427 = vld [vmem:[%s1 + $0x1dc] sm:$0xf]
        %v428 = vld [vmem:[%s1 + $0x1e0] sm:$0xf]
        %v429 = vld [vmem:[%s1 + $0x1e4] sm:$0xf]
        %v430 = vld [vmem:[%s1 + $0x1e8] sm:$0xf]
        %v431 = vld [vmem:[%s1 + $0x1ec] sm:$0xf]
        %v432 = vld [vmem:[%s1 + $0x1f0] sm:$0xf]
        %v433 = vld [vmem:[%s1 + $0x1f4] sm:$0xf]
        %v434 = vld [vmem:[%s1 + $0x1f8] sm:$0xf]
        %v435 = vld [vmem:[%s1 + $0x1fc] sm:$0xf]
        %v436 = vld [vmem:[%s1 + $0x200] sm:$0xf]
        %v437 = vld [vmem:[%s1 + $0x204] sm:$0xf]
        %v438 = vld [vmem:[%s1 + $0x208] sm:$0xf]
        %v439 = vld [vmem:[%s1 + $0x20c] sm:$0xf]
        %v440 = vld [vmem:[%s1 + $0x210] sm:$0xf]
        %v441 = vld [vmem:[%s1 + $0x214] sm:$0xf]
        %v442 = vld [vmem:[%s1 + $0x218] sm:$0xf]
        %v443 = vld [vmem:[%s1 + $0x21c] sm:$0xf]
        %v444 = vld [vmem:[%s1 + $0x220] sm:$0xf]
        %v445 = vld [vmem:[%s1 + $0x224] sm:$0xf]
        %v446 = vld [vmem:[%s1 + $0x228] sm:$0xf]
        %v447 = vld [vmem:[%s1 + $0x22c] sm:$0xf]
        %v448 = vld [vmem:[%s1 + $0x230] sm:$0xf]
        %v449 = vld [vmem:[%s1 + $0x234] sm:$0xf]
        %v450 = vld [vmem:[%s1 + $0x238] sm:$0xf]
        %v451 = vld [vmem:[%s1 + $0x23c] sm:$0xf]
        %v452 = vld [vmem:[%s1 + $0x240] sm:$0xf]
        %v453 = vld [vmem:[%s1 + $0x244] sm:$0xf]
        %v454 = vld [vmem:[%s1 + $0x248] sm:$0xf]
        %v455 = vld [vmem:[%s1 + $0x24c] sm:$0xf]
        %v456 = vld [vmem:[%s1 + $0x250] sm:$0xf]
        %v457 = vld [vmem:[%s1 + $0x254] sm:$0xf]
        %v458 = vld [vmem:[%s1 + $0x258] sm:$0xf]
        %v459 = vld [vmem:[%s1 + $0x25c] sm:$0xf]
        %v460 = vld [vmem:[%s1 + $0x260] sm:$0xf]
        %v461 = vld [vmem:[%s1 + $0x264] sm:$0xf]
        %v462 = vld [vmem:[%s1 + $0x268] sm:$0xf]
        %v463 = vld [vmem:[%s1 + $0x26c] sm:$0xf]
        %v464 = vld [vmem:[%s1 + $0x270] sm:$0xf]
        %v465 = vld [vmem:[%s1 + $0x274] sm:$0xf]
        %v466 = vld [vmem:[%s1 + $0x278] sm:$0xf]
        %v467 = vld [vmem:[%s1 + $0x27c] sm:$0xf]
        %v468 = vld [vmem:[%s1 + $0x280] sm:$0xf]
        %v469 = vld [vmem:[%s1 + $0x284] sm:$0xf]
        %v470 = vld [vmem:[%s1 + $0x288] sm:$0xf]
        %v471 = vld [vmem:[%s1 + $0x28c] sm:$0xf]
        %v472 = vld [vmem:[%s1 + $0x290] sm:$0xf]
        %v473 = vld [vmem:[%s1 + $0x294] sm:$0xf]
        %v474 = vld [vmem:[%s1 + $0x298] sm:$0xf]
        %v475 = vld [vmem:[%s1 + $0x29c] sm:$0xf]
        %v476 = vld [vmem:[%s1 + $0x2a0] sm:$0xf]
        %v477 = vld [vmem:[%s1 + $0x2a4] sm:$0xf]
        %v478 = vld [vmem:[%s1 + $0x2a8] sm:$0xf]
        %v479 = vld [vmem:[%s1 + $0x2ac] sm:$0xf]
        %v480 = vld [vmem:[%s1 + $0x2b0] sm:$0xf]
        %v481 = vld [vmem:[%s1 + $0x2b4] sm:$0xf]
        %v482 = vld [vmem:[%s1 + $0x2b8] sm:$0xf]
        %v483 = vld [vmem:[%s1 + $0x2bc] sm:$0xf]
        %v484 = vld [vmem:[%s1 + $0x2c0] sm:$0xf]
        %v485 = vld [vmem:[%s1 + $0x2c4] sm:$0xf]
        %v486 = vld [vmem:[%s1 + $0x2c8] sm:$0xf]
        %v487 = vld [vmem:[%s1 + $0x2cc] sm:$0xf]
        %v488 = vld [vmem:[%s1 + $0x2d0] sm:$0xf]
        %v489 = vld [vmem:[%s1 + $0x2d4] sm:$0xf]
        %v490 = vld [vmem:[%s1 + $0x2d8] sm:$0xf]
        %v491 = vld [vmem:[%s1 + $0x2dc] sm:$0xf]
        %v492 = vld [vmem:[%s1 + $0x2e0] sm:$0xf]
        %v493 = vld [vmem:[%s1 + $0x2e4] sm:$0xf]
        %v494 = vld [vmem:[%s1 + $0x2e8] sm:$0xf]
        %v495 = vld [vmem:[%s1 + $0x2ec] sm:$0xf]
        %v496 = vld [vmem:[%s1 + $0x2f0] sm:$0xf]
        %v497 = vld [vmem:[%s1 + $0x2f4] sm:$0xf]
        %v498 = vld [vmem:[%s1 + $0x2f8] sm:$0xf]
        %v499 = vld [vmem:[%s1 + $0x2fc] sm:$0xf]
        %v500 = vld [vmem:[%s1 + $0x300] sm:$0xf]
        %v501 = vld [vmem:[%s1 + $0x304] sm:$0xf]
        %v502 = vld [vmem:[%s1 + $0x308] sm:$0xf]
        %v503 = vld [vmem:[%s1 + $0x30c] sm:$0xf]
        %v504 = vld [vmem:[%s1 + $0x310] sm:$0xf]
        %v505 = vld [vmem:[%s1 + $0x314] sm:$0xf]
        %v506 = vld [vmem:[%s1 + $0x318] sm:$0xf]
        %v507 = vld [vmem:[%s1 + $0x31c] sm:$0xf]
        %v508 = vld [vmem:[%s1 + $0x320] sm:$0xf]
        %v509 = vld [vmem:[%s1 + $0x324] sm:$0xf]
        %v510 = vld [vmem:[%s1 + $0x328] sm:$0xf]
        %v511 = vld [vmem:[%s1 + $0x32c] sm:$0xf]
        %v512 = vld [vmem:[%s1 + $0x330] sm:$0xf]
        %v513 = vld [vmem:[%s1 + $0x334] sm:$0xf]
        %v514 = vld [vmem:[%s1 + $0x338] sm:$0xf]
        %v515 = vld [vmem:[%s1 + $0x33c] sm:$0xf]
        %v516 = vld [vmem:[%s1 + $0x340] sm:$0xf]
        %v517 = vld [vmem:[%s1 + $0x344] sm:$0xf]
        %v518 = vld [vmem:[%s1 + $0x348] sm:$0xf]
        %v519 = vld [vmem:[%s1 + $0x34c] sm:$0xf]
        %v520 = vld [vmem:[%s1 + $0x350] sm:$0xf]
        %v521 = vld [vmem:[%s1 + $0x354] sm:$0xf]
        %v522 = vld [vmem:[%s1 + $0x358] sm:$0xf]
        %v523 = vld [vmem:[%s1 + $0x35c] sm:$0xf]
        %v524 = vld [vmem:[%s1 + $0x360] sm:$0xf]
        %v525 = vld [vmem:[%s1 + $0x364] sm:$0xf]
        %v526 = vld [vmem:[%s1 + $0x368] sm:$0xf]
        %v527 = vld [vmem:[%s1 + $0x36c] sm:$0xf]
        %v528 = vld [vmem:[%s1 + $0x370] sm:$0xf]
        %v529 = vld [vmem:[%s1 + $0x374] sm:$0xf]
        %v530 = vld [vmem:[%s1 + $0x378] sm:$0xf]
        %v531 = vld [vmem:[%s1 + $0x37c] sm:$0xf]
        %v532 = vld [vmem:[%s1 + $0x380] sm:$0xf]
        %v533 = vld [vmem:[%s1 + $0x384] sm:$0xf]
        %v534 = vld [vmem:[%s1 + $0x388] sm:$0xf]
        %v535 = vld [vmem:[%s1 + $0x38c] sm:$0xf]
        %v536 = vld [vmem:[%s1 + $0x390] sm:$0xf]
        %v537 = vld [vmem:[%s1 + $0x394] sm:$0xf]
        %v538 = vld [vmem:[%s1 + $0x398] sm:$0xf]
        %v539 = vld [vmem:[%s1 + $0x39c] sm:$0xf]
        %v540 = vld [vmem:[%s1 + $0x3a0] sm:$0xf]
        %v541 = vld [vmem:[%s1 + $0x3a4] sm:$0xf]
        %v542 = vld [vmem:[%s1 + $0x3a8] sm:$0xf]
        %v543 = vld [vmem:[%s1 + $0x3ac] sm:$0xf]
        %v544 = vld [vmem:[%s1 + $0x3b0] sm:$0xf]
        %v545 = vld [vmem:[%s1 + $0x3b4] sm:$0xf]
        %v546 = vld [vmem:[%s1 + $0x3b8] sm:$0xf]
        %v547 = vld [vmem:[%s1 + $0x3bc] sm:$0xf]
        %v548 = vld [vmem:[%s1 + $0x3c0] sm:$0xf]
        %v549 = vld [vmem:[%s1 + $0x3c4] sm:$0xf]
        %v550 = vld [vmem:[%s1 + $0x3c8] sm:$0xf]
        %v551 = vld [vmem:[%s1 + $0x3cc] sm:$0xf]
        %v552 = vld [vmem:[%s1 + $0x3d0] sm:$0xf]
        %v553 = vld [vmem:[%s1 + $0x3d4] sm:$0xf]
        %v554 = vld [vmem:[%s1 + $0x3d8] sm:$0xf]
        %v555 = vld [vmem:[%s1 + $0x3dc] sm:$0xf]
        %v556 = vld [vmem:[%s1 + $0x3e0] sm:$0xf]
        %v557 = vld [vmem:[%s1 + $0x3e4] sm:$0xf]
        %v558 = vld [vmem:[%s1 + $0x3e8] sm:$0xf]
        %v559 = vld [vmem:[%s1 + $0x3ec] sm:$0xf]
        %v560 = vld [vmem:[%s1 + $0x3f0] sm:$0xf]
        %v561 = vld [vmem:[%s1 + $0x3f4] sm:$0xf]
        %v562 = vld [vmem:[%s1 + $0x3f8] sm:$0xf]
        %v563 = vld [vmem:[%s1 + $0x3fc] sm:$0xf]
        %v820 = vunpack.c.l.b16 %v308
        %v821 = vunpack.c.l.b16 %v309
        %v822 = vunpack.c.l.b16 %v310
        %v823 = vunpack.c.l.b16 %v311
        %v824 = vunpack.c.l.b16 %v312
        %v825 = vunpack.c.l.b16 %v313
        %v826 = vunpack.c.l.b16 %v314
        %v827 = vunpack.c.l.b16 %v315
        %v828 = vunpack.c.l.b16 %v316
        %v829 = vunpack.c.l.b16 %v317
        %v830 = vunpack.c.l.b16 %v318
        %v831 = vunpack.c.l.b16 %v319
        %v832 = vunpack.c.l.b16 %v320
        %v833 = vunpack.c.l.b16 %v321
        %v834 = vunpack.c.l.b16 %v322
        %v835 = vunpack.c.l.b16 %v323
        %v836 = vunpack.c.l.b16 %v324
        %v837 = vunpack.c.l.b16 %v325
        %v838 = vunpack.c.l.b16 %v326
        %v839 = vunpack.c.l.b16 %v327
        %v840 = vunpack.c.l.b16 %v328
        %v841 = vunpack.c.l.b16 %v329
        %v842 = vunpack.c.l.b16 %v330
        %v843 = vunpack.c.l.b16 %v331
        %v844 = vunpack.c.l.b16 %v332
        %v845 = vunpack.c.l.b16 %v333
        %v846 = vunpack.c.l.b16 %v334
        %v847 = vunpack.c.l.b16 %v335
        %v848 = vunpack.c.l.b16 %v336
        %v849 = vunpack.c.l.b16 %v337
        %v850 = vunpack.c.l.b16 %v338
        %v851 = vunpack.c.l.b16 %v339
        %v852 = vunpack.c.l.b16 %v340
        %v853 = vunpack.c.l.b16 %v341
        %v854 = vunpack.c.l.b16 %v342
        %v855 = vunpack.c.l.b16 %v343
        %v856 = vunpack.c.l.b16 %v344
        %v857 = vunpack.c.l.b16 %v345
        %v858 = vunpack.c.l.b16 %v346
        %v859 = vunpack.c.l.b16 %v347
        %v860 = vunpack.c.l.b16 %v348
        %v861 = vunpack.c.l.b16 %v349
        %v862 = vunpack.c.l.b16 %v350
        %v863 = vunpack.c.l.b16 %v351
        %v864 = vunpack.c.l.b16 %v352
        %v865 = vunpack.c.l.b16 %v353
        %v866 = vunpack.c.l.b16 %v354
        %v867 = vunpack.c.l.b16 %v355
        %v868 = vunpack.c.l.b16 %v356
        %v869 = vunpack.c.l.b16 %v357
        %v870 = vunpack.c.l.b16 %v358
        %v871 = vunpack.c.l.b16 %v359
        %v872 = vunpack.c.l.b16 %v360
        %v873 = vunpack.c.l.b16 %v361
        %v874 = vunpack.c.l.b16 %v362
        %v875 = vunpack.c.l.b16 %v363
        %v876 = vunpack.c.l.b16 %v364
        %v877 = vunpack.c.l.b16 %v365
        %v878 = vunpack.c.l.b16 %v366
        %v879 = vunpack.c.l.b16 %v367
        %v880 = vunpack.c.l.b16 %v368
        %v881 = vunpack.c.l.b16 %v369
        %v882 = vunpack.c.l.b16 %v370
        %v883 = vunpack.c.l.b16 %v371
        %v884 = vunpack.c.l.b16 %v372
        %v885 = vunpack.c.l.b16 %v373
        %v886 = vunpack.c.l.b16 %v374
        %v887 = vunpack.c.l.b16 %v375
        %v888 = vunpack.c.l.b16 %v376
        %v889 = vunpack.c.l.b16 %v377
        %v890 = vunpack.c.l.b16 %v378
        %v891 = vunpack.c.l.b16 %v379
        %v892 = vunpack.c.l.b16 %v380
        %v893 = vunpack.c.l.b16 %v381
        %v894 = vunpack.c.l.b16 %v382
        %v895 = vunpack.c.l.b16 %v383
        %v896 = vunpack.c.l.b16 %v384
        %v897 = vunpack.c.l.b16 %v385
        %v898 = vunpack.c.l.b16 %v386
        %v899 = vunpack.c.l.b16 %v387
        %v900 = vunpack.c.l.b16 %v388
        %v901 = vunpack.c.l.b16 %v389
        %v902 = vunpack.c.l.b16 %v390
        %v903 = vunpack.c.l.b16 %v391
        %v904 = vunpack.c.l.b16 %v392
        %v905 = vunpack.c.l.b16 %v393
        %v906 = vunpack.c.l.b16 %v394
        %v907 = vunpack.c.l.b16 %v395
        %v908 = vunpack.c.l.b16 %v396
        %v909 = vunpack.c.l.b16 %v397
        %v910 = vunpack.c.l.b16 %v398
        %v911 = vunpack.c.l.b16 %v399
        %v912 = vunpack.c.l.b16 %v400
        %v913 = vunpack.c.l.b16 %v401
        %v914 = vunpack.c.l.b16 %v402
        %v915 = vunpack.c.l.b16 %v403
        %v916 = vunpack.c.l.b16 %v404
        %v917 = vunpack.c.l.b16 %v405
        %v918 = vunpack.c.l.b16 %v406
        %v919 = vunpack.c.l.b16 %v407
        %v920 = vunpack.c.l.b16 %v408
        %v921 = vunpack.c.l.b16 %v409
        %v922 = vunpack.c.l.b16 %v410
        %v923 = vunpack.c.l.b16 %v411
        %v924 = vunpack.c.l.b16 %v412
        %v925 = vunpack.c.l.b16 %v413
        %v926 = vunpack.c.l.b16 %v414
        %v927 = vunpack.c.l.b16 %v415
        %v928 = vunpack.c.l.b16 %v416
        %v929 = vunpack.c.l.b16 %v417
        %v930 = vunpack.c.l.b16 %v418
        %v931 = vunpack.c.l.b16 %v419
        %v932 = vunpack.c.l.b16 %v420
        %v933 = vunpack.c.l.b16 %v421
        %v934 = vunpack.c.l.b16 %v422
        %v935 = vunpack.c.l.b16 %v423
        %v936 = vunpack.c.l.b16 %v424
        %v937 = vunpack.c.l.b16 %v425
        %v938 = vunpack.c.l.b16 %v426
        %v939 = vunpack.c.l.b16 %v427
        %v940 = vunpack.c.l.b16 %v428
        %v941 = vunpack.c.l.b16 %v429
        %v942 = vunpack.c.l.b16 %v430
        %v943 = vunpack.c.l.b16 %v431
        %v944 = vunpack.c.l.b16 %v432
        %v945 = vunpack.c.l.b16 %v433
        %v946 = vunpack.c.l.b16 %v434
        %v947 = vunpack.c.l.b16 %v435
        %v948 = vunpack.c.l.b16 %v436
        %v949 = vunpack.c.l.b16 %v437
        %v950 = vunpack.c.l.b16 %v438
        %v951 = vunpack.c.l.b16 %v439
        %v952 = vunpack.c.l.b16 %v440
        %v953 = vunpack.c.l.b16 %v441
        %v954 = vunpack.c.l.b16 %v442
        %v955 = vunpack.c.l.b16 %v443
        %v956 = vunpack.c.l.b16 %v444
        %v957 = vunpack.c.l.b16 %v445
        %v958 = vunpack.c.l.b16 %v446
        %v959 = vunpack.c.l.b16 %v447
        %v960 = vunpack.c.l.b16 %v448
        %v961 = vunpack.c.l.b16 %v449
        %v962 = vunpack.c.l.b16 %v450
        %v963 = vunpack.c.l.b16 %v451
        %v964 = vunpack.c.l.b16 %v452
        %v965 = vunpack.c.l.b16 %v453
        %v966 = vunpack.c.l.b16 %v454
        %v967 = vunpack.c.l.b16 %v455
        %v968 = vunpack.c.l.b16 %v456
        %v969 = vunpack.c.l.b16 %v457
        %v970 = vunpack.c.l.b16 %v458
        %v971 = vunpack.c.l.b16 %v459
        %v972 = vunpack.c.l.b16 %v460
        %v973 = vunpack.c.l.b16 %v461
        %v974 = vunpack.c.l.b16 %v462
        %v975 = vunpack.c.l.b16 %v463
        %v976 = vunpack.c.l.b16 %v464
        %v977 = vunpack.c.l.b16 %v465
        %v978 = vunpack.c.l.b16 %v466
        %v979 = vunpack.c.l.b16 %v467
        %v980 = vunpack.c.l.b16 %v468
        %v981 = vunpack.c.l.b16 %v469
        %v982 = vunpack.c.l.b16 %v470
        %v983 = vunpack.c.l.b16 %v471
        %v984 = vunpack.c.l.b16 %v472
        %v985 = vunpack.c.l.b16 %v473
        %v986 = vunpack.c.l.b16 %v474
        %v987 = vunpack.c.l.b16 %v475
        %v988 = vunpack.c.l.b16 %v476
        %v989 = vunpack.c.l.b16 %v477
        %v990 = vunpack.c.l.b16 %v478
        %v991 = vunpack.c.l.b16 %v479
        %v992 = vunpack.c.l.b16 %v480
        %v993 = vunpack.c.l.b16 %v481
        %v994 = vunpack.c.l.b16 %v482
        %v995 = vunpack.c.l.b16 %v483
        %v996 = vunpack.c.l.b16 %v484
        %v997 = vunpack.c.l.b16 %v485
        %v998 = vunpack.c.l.b16 %v486
        %v999 = vunpack.c.l.b16 %v487
        %v1000 = vunpack.c.l.b16 %v488
        %v1001 = vunpack.c.l.b16 %v489
        %v1002 = vunpack.c.l.b16 %v490
        %v1003 = vunpack.c.l.b16 %v491
        %v1004 = vunpack.c.l.b16 %v492
        %v1005 = vunpack.c.l.b16 %v493
        %v1006 = vunpack.c.l.b16 %v494
        %v1007 = vunpack.c.l.b16 %v495
        %v1008 = vunpack.c.l.b16 %v496
        %v1009 = vunpack.c.l.b16 %v497
        %v1010 = vunpack.c.l.b16 %v498
        %v1011 = vunpack.c.l.b16 %v499
        %v1012 = vunpack.c.l.b16 %v500
        %v1013 = vunpack.c.l.b16 %v501
        %v1014 = vunpack.c.l.b16 %v502
        %v1015 = vunpack.c.l.b16 %v503
        %v1016 = vunpack.c.l.b16 %v504
        %v1017 = vunpack.c.l.b16 %v505
        %v1018 = vunpack.c.l.b16 %v506
        %v1019 = vunpack.c.l.b16 %v507
        %v1020 = vunpack.c.l.b16 %v508
        %v1021 = vunpack.c.l.b16 %v509
        %v1022 = vunpack.c.l.b16 %v510
        %v1023 = vunpack.c.l.b16 %v511
        %v1024 = vunpack.c.l.b16 %v512
        %v1025 = vunpack.c.l.b16 %v513
        %v1026 = vunpack.c.l.b16 %v514
        %v1027 = vunpack.c.l.b16 %v515
        %v1028 = vunpack.c.l.b16 %v516
        %v1029 = vunpack.c.l.b16 %v517
        %v1030 = vunpack.c.l.b16 %v518
        %v1031 = vunpack.c.l.b16 %v519
        %v1032 = vunpack.c.l.b16 %v520
        %v1033 = vunpack.c.l.b16 %v521
        %v1034 = vunpack.c.l.b16 %v522
        %v1035 = vunpack.c.l.b16 %v523
        %v1036 = vunpack.c.l.b16 %v524
        %v1037 = vunpack.c.l.b16 %v525
        %v1038 = vunpack.c.l.b16 %v526
        %v1039 = vunpack.c.l.b16 %v527
        %v1040 = vunpack.c.l.b16 %v528
        %v1041 = vunpack.c.l.b16 %v529
        %v1042 = vunpack.c.l.b16 %v530
        %v1043 = vunpack.c.l.b16 %v531
        %v1044 = vunpack.c.l.b16 %v532
        %v1045 = vunpack.c.l.b16 %v533
        %v1046 = vunpack.c.l.b16 %v534
        %v1047 = vunpack.c.l.b16 %v535
        %v1048 = vunpack.c.l.b16 %v536
        %v1049 = vunpack.c.l.b16 %v537
        %v1050 = vunpack.c.l.b16 %v538
        %v1051 = vunpack.c.l.b16 %v539
        %v1052 = vunpack.c.l.b16 %v540
        %v1053 = vunpack.c.l.b16 %v541
        %v1054 = vunpack.c.l.b16 %v542
        %v1055 = vunpack.c.l.b16 %v543
        %v1056 = vunpack.c.l.b16 %v544
        %v1057 = vunpack.c.l.b16 %v545
        %v1058 = vunpack.c.l.b16 %v546
        %v1059 = vunpack.c.l.b16 %v547
        %v1060 = vunpack.c.l.b16 %v548
        %v1061 = vunpack.c.l.b16 %v549
        %v1062 = vunpack.c.l.b16 %v550
        %v1063 = vunpack.c.l.b16 %v551
        %v1064 = vunpack.c.l.b16 %v552
        %v1065 = vunpack.c.l.b16 %v553
        %v1066 = vunpack.c.l.b16 %v554
        %v1067 = vunpack.c.l.b16 %v555
        %v1068 = vunpack.c.l.b16 %v556
        %v1069 = vunpack.c.l.b16 %v557
        %v1070 = vunpack.c.l.b16 %v558
        %v1071 = vunpack.c.l.b16 %v559
        %v1072 = vunpack.c.l.b16 %v560
        %v1073 = vunpack.c.l.b16 %v561
        %v1074 = vunpack.c.l.b16 %v562
        %v1075 = vunpack.c.l.b16 %v563
        %v1076 = vpack.c.b16 %v821, %v820
        %v1077 = vpack.c.b16 %v823, %v822
        %v1078 = vpack.c.b16 %v825, %v824
        %v1079 = vpack.c.b16 %v827, %v826
        %v1080 = vpack.c.b16 %v829, %v828
        %v1081 = vpack.c.b16 %v831, %v830
        %v1082 = vpack.c.b16 %v833, %v832
        %v1083 = vpack.c.b16 %v835, %v834
        %v1084 = vpack.c.b16 %v837, %v836
        %v1085 = vpack.c.b16 %v839, %v838
        %v1086 = vpack.c.b16 %v841, %v840
        %v1087 = vpack.c.b16 %v843, %v842
        %v1088 = vpack.c.b16 %v845, %v844
        %v1089 = vpack.c.b16 %v847, %v846
        %v1090 = vpack.c.b16 %v849, %v848
        %v1091 = vpack.c.b16 %v851, %v850
        %v1092 = vpack.c.b16 %v853, %v852
        %v1093 = vpack.c.b16 %v855, %v854
        %v1094 = vpack.c.b16 %v857, %v856
        %v1095 = vpack.c.b16 %v859, %v858
        %v1096 = vpack.c.b16 %v861, %v860
        %v1097 = vpack.c.b16 %v863, %v862
        %v1098 = vpack.c.b16 %v865, %v864
        %v1099 = vpack.c.b16 %v867, %v866
        %v1100 = vpack.c.b16 %v869, %v868
        %v1101 = vpack.c.b16 %v871, %v870
        %v1102 = vpack.c.b16 %v873, %v872
        %v1103 = vpack.c.b16 %v875, %v874
        %v1104 = vpack.c.b16 %v877, %v876
        %v1105 = vpack.c.b16 %v879, %v878
        %v1106 = vpack.c.b16 %v881, %v880
        %v1107 = vpack.c.b16 %v883, %v882
        %v1108 = vpack.c.b16 %v885, %v884
        %v1109 = vpack.c.b16 %v887, %v886
        %v1110 = vpack.c.b16 %v889, %v888
        %v1111 = vpack.c.b16 %v891, %v890
        %v1112 = vpack.c.b16 %v893, %v892
        %v1113 = vpack.c.b16 %v895, %v894
        %v1114 = vpack.c.b16 %v897, %v896
        %v1115 = vpack.c.b16 %v899, %v898
        %v1116 = vpack.c.b16 %v901, %v900
        %v1117 = vpack.c.b16 %v903, %v902
        %v1118 = vpack.c.b16 %v905, %v904
        %v1119 = vpack.c.b16 %v907, %v906
        %v1120 = vpack.c.b16 %v909, %v908
        %v1121 = vpack.c.b16 %v911, %v910
        %v1122 = vpack.c.b16 %v913, %v912
        %v1123 = vpack.c.b16 %v915, %v914
        %v1124 = vpack.c.b16 %v917, %v916
        %v1125 = vpack.c.b16 %v919, %v918
        %v1126 = vpack.c.b16 %v921, %v920
        %v1127 = vpack.c.b16 %v923, %v922
        %v1128 = vpack.c.b16 %v925, %v924
        %v1129 = vpack.c.b16 %v927, %v926
        %v1130 = vpack.c.b16 %v929, %v928
        %v1131 = vpack.c.b16 %v931, %v930
        %v1132 = vpack.c.b16 %v933, %v932
        %v1133 = vpack.c.b16 %v935, %v934
        %v1134 = vpack.c.b16 %v937, %v936
        %v1135 = vpack.c.b16 %v939, %v938
        %v1136 = vpack.c.b16 %v941, %v940
        %v1137 = vpack.c.b16 %v943, %v942
        %v1138 = vpack.c.b16 %v945, %v944
        %v1139 = vpack.c.b16 %v947, %v946
        %v1140 = vpack.c.b16 %v949, %v948
        %v1141 = vpack.c.b16 %v951, %v950
        %v1142 = vpack.c.b16 %v953, %v952
        %v1143 = vpack.c.b16 %v955, %v954
        %v1144 = vpack.c.b16 %v957, %v956
        %v1145 = vpack.c.b16 %v959, %v958
        %v1146 = vpack.c.b16 %v961, %v960
        %v1147 = vpack.c.b16 %v963, %v962
        %v1148 = vpack.c.b16 %v965, %v964
        %v1149 = vpack.c.b16 %v967, %v966
        %v1150 = vpack.c.b16 %v969, %v968
        %v1151 = vpack.c.b16 %v971, %v970
        %v1152 = vpack.c.b16 %v973, %v972
        %v1153 = vpack.c.b16 %v975, %v974
        %v1154 = vpack.c.b16 %v977, %v976
        %v1155 = vpack.c.b16 %v979, %v978
        %v1156 = vpack.c.b16 %v981, %v980
        %v1157 = vpack.c.b16 %v983, %v982
        %v1158 = vpack.c.b16 %v985, %v984
        %v1159 = vpack.c.b16 %v987, %v986
        %v1160 = vpack.c.b16 %v989, %v988
        %v1161 = vpack.c.b16 %v991, %v990
        %v1162 = vpack.c.b16 %v993, %v992
        %v1163 = vpack.c.b16 %v995, %v994
        %v1164 = vpack.c.b16 %v997, %v996
        %v1165 = vpack.c.b16 %v999, %v998
        %v1166 = vpack.c.b16 %v1001, %v1000
        %v1167 = vpack.c.b16 %v1003, %v1002
        %v1168 = vpack.c.b16 %v1005, %v1004
        %v1169 = vpack.c.b16 %v1007, %v1006
        %v1170 = vpack.c.b16 %v1009, %v1008
        %v1171 = vpack.c.b16 %v1011, %v1010
        %v1172 = vpack.c.b16 %v1013, %v1012
        %v1173 = vpack.c.b16 %v1015, %v1014
        %v1174 = vpack.c.b16 %v1017, %v1016
        %v1175 = vpack.c.b16 %v1019, %v1018
        %v1176 = vpack.c.b16 %v1021, %v1020
        %v1177 = vpack.c.b16 %v1023, %v1022
        %v1178 = vpack.c.b16 %v1025, %v1024
        %v1179 = vpack.c.b16 %v1027, %v1026
        %v1180 = vpack.c.b16 %v1029, %v1028
        %v1181 = vpack.c.b16 %v1031, %v1030
        %v1182 = vpack.c.b16 %v1033, %v1032
        %v1183 = vpack.c.b16 %v1035, %v1034
        %v1184 = vpack.c.b16 %v1037, %v1036
        %v1185 = vpack.c.b16 %v1039, %v1038
        %v1186 = vpack.c.b16 %v1041, %v1040
        %v1187 = vpack.c.b16 %v1043, %v1042
        %v1188 = vpack.c.b16 %v1045, %v1044
        %v1189 = vpack.c.b16 %v1047, %v1046
        %v1190 = vpack.c.b16 %v1049, %v1048
        %v1191 = vpack.c.b16 %v1051, %v1050
        %v1192 = vpack.c.b16 %v1053, %v1052
        %v1193 = vpack.c.b16 %v1055, %v1054
        %v1194 = vpack.c.b16 %v1057, %v1056
        %v1195 = vpack.c.b16 %v1059, %v1058
        %v1196 = vpack.c.b16 %v1061, %v1060
        %v1197 = vpack.c.b16 %v1063, %v1062
        %v1198 = vpack.c.b16 %v1065, %v1064
        %v1199 = vpack.c.b16 %v1067, %v1066
        %v1200 = vpack.c.b16 %v1069, %v1068
        %v1201 = vpack.c.b16 %v1071, %v1070
        %v1202 = vpack.c.b16 %v1073, %v1072
        %v1203 = vpack.c.b16 %v1075, %v1074
        %1332 = vmatprep.subr.bf16.mxu0 0
        %1333 = vmatpush1.bf16.msra.mxu0 %v1083
        %1334 = vmatprep.subr.bf16.mxu0 0
        %1335 = vmatpush1.bf16.msra.mxu0 %v1082
        %1336 = vmatprep.subr.bf16.mxu0 0
        %1337 = vmatpush1.bf16.msra.mxu0 %v1081
        %1338 = vmatprep.subr.bf16.mxu0 0
        %1339 = vmatpush1.bf16.msra.mxu0 %v1080
        %1340 = vmatprep.subr.bf16.mxu0 0
        %1341 = vmatpush1.bf16.msra.mxu0 %v1079
        %1342 = vmatprep.subr.bf16.mxu0 0
        %1343 = vmatpush1.bf16.msra.mxu0 %v1078
        %1344 = vmatprep.subr.bf16.mxu0 0
        %1345 = vmatpush1.bf16.msra.mxu0 %v1077
        %1346 = vmatprep.subr.bf16.mxu0 0
        %1347 = vmatpush1.bf16.msra.mxu0 %v1076
        %1348 = vmatprep.subr.bf16.mxu0 0
        %1349 = vmatpush2.bf16.msra.mxu0 %v1091
        %1350 = vmatprep.subr.bf16.mxu0 0
        %1351 = vmatpush2.bf16.msra.mxu0 %v1090
        %1352 = vmatprep.subr.bf16.mxu0 0
        %1353 = vmatpush2.bf16.msra.mxu0 %v1089
        %1354 = vmatprep.subr.bf16.mxu0 0
        %1355 = vmatpush2.bf16.msra.mxu0 %v1088
        %1356 = vmatprep.subr.bf16.mxu0 0
        %1357 = vmatpush2.bf16.msra.mxu0 %v1087
        %1358 = vmatprep.subr.bf16.mxu0 0
        %1359 = vmatpush2.bf16.msra.mxu0 %v1086
        %1360 = vmatprep.subr.bf16.mxu0 0
        %1361 = vmatpush2.bf16.msra.mxu0 %v1085
        %1362 = vmatprep.subr.bf16.mxu0 0
        %1363 = vmatpush2.bf16.msra.mxu0 %v1084
        %1364 = vmatprep.mubr.bf16.mxu0 %v240
        %1365 = vmatmul.mubr.bf16.gmra.mxu0 %v232
        %v1366 = vpop.f32.mrf.mxu0
        %v1367 = vadd.f32 0.0, %v1366
        %v1368 = vpop.f32.mrf.mxu0
        %v1369 = vpop.f32.mrf.mxu0
        %v1370 = vadd.f32 0.0, %v1369
        %v1371 = vpop.f32.mrf.mxu0
        %1372 = vdwg.mxu0
        %1373 = vmatprep.subr.bf16.mxu0 0
        %1374 = vmatpush1.bf16.msra.mxu0 %v1099
        %1375 = vmatprep.subr.bf16.mxu0 0
        %1376 = vmatpush1.bf16.msra.mxu0 %v1098
        %1377 = vmatprep.subr.bf16.mxu0 0
        %1378 = vmatpush1.bf16.msra.mxu0 %v1097
        %1379 = vmatprep.subr.bf16.mxu0 0
        %1380 = vmatpush1.bf16.msra.mxu0 %v1096
        %1381 = vmatprep.subr.bf16.mxu0 0
        %1382 = vmatpush1.bf16.msra.mxu0 %v1095
        %1383 = vmatprep.subr.bf16.mxu0 0
        %1384 = vmatpush1.bf16.msra.mxu0 %v1094
        %1385 = vmatprep.subr.bf16.mxu0 0
        %1386 = vmatpush1.bf16.msra.mxu0 %v1093
        %1387 = vmatprep.subr.bf16.mxu0 0
        %1388 = vmatpush1.bf16.msra.mxu0 %v1092
        %1389 = vmatprep.subr.bf16.mxu0 0
        %1390 = vmatpush2.bf16.msra.mxu0 %v1107
        %1391 = vmatprep.subr.bf16.mxu0 0
        %1392 = vmatpush2.bf16.msra.mxu0 %v1106
        %1393 = vmatprep.subr.bf16.mxu0 0
        %1394 = vmatpush2.bf16.msra.mxu0 %v1105
        %1395 = vmatprep.subr.bf16.mxu0 0
        %1396 = vmatpush2.bf16.msra.mxu0 %v1104
        %1397 = vmatprep.subr.bf16.mxu0 0
        %1398 = vmatpush2.bf16.msra.mxu0 %v1103
        %1399 = vmatprep.subr.bf16.mxu0 0
        %1400 = vmatpush2.bf16.msra.mxu0 %v1102
        %1401 = vmatprep.subr.bf16.mxu0 0
        %1402 = vmatpush2.bf16.msra.mxu0 %v1101
        %1403 = vmatprep.subr.bf16.mxu0 0
        %1404 = vmatpush2.bf16.msra.mxu0 %v1100
        %1405 = vmatprep.mubr.bf16.mxu0 %v246
        %1406 = vmatmul.mubr.bf16.gmra.mxu0 %v242
        %v1407 = vpop.f32.mrf.mxu0
        %v1408 = vadd.f32 %v1367, %v1407
        %v1409 = vpop.f32.mrf.mxu0
        %v1410 = vpop.f32.mrf.mxu0
        %v1411 = vadd.f32 %v1370, %v1410
        %v1412 = vpop.f32.mrf.mxu0
        %1413 = vdwg.mxu0
        %1414 = vmatprep.subr.bf16.mxu0 0
        %1415 = vmatpush1.bf16.msra.mxu0 %v1115
        %1416 = vmatprep.subr.bf16.mxu0 0
        %1417 = vmatpush1.bf16.msra.mxu0 %v1114
        %1418 = vmatprep.subr.bf16.mxu0 0
        %1419 = vmatpush1.bf16.msra.mxu0 %v1113
        %1420 = vmatprep.subr.bf16.mxu0 0
        %1421 = vmatpush1.bf16.msra.mxu0 %v1112
        %1422 = vmatprep.subr.bf16.mxu0 0
        %1423 = vmatpush1.bf16.msra.mxu0 %v1111
        %1424 = vmatprep.subr.bf16.mxu0 0
        %1425 = vmatpush1.bf16.msra.mxu0 %v1110
        %1426 = vmatprep.subr.bf16.mxu0 0
        %1427 = vmatpush1.bf16.msra.mxu0 %v1109
        %1428 = vmatprep.subr.bf16.mxu0 0
        %1429 = vmatpush1.bf16.msra.mxu0 %v1108
        %1430 = vmatprep.subr.bf16.mxu0 0
        %1431 = vmatpush2.bf16.msra.mxu0 %v1123
        %1432 = vmatprep.subr.bf16.mxu0 0
        %1433 = vmatpush2.bf16.msra.mxu0 %v1122
        %1434 = vmatprep.subr.bf16.mxu0 0
        %1435 = vmatpush2.bf16.msra.mxu0 %v1121
        %1436 = vmatprep.subr.bf16.mxu0 0
        %1437 = vmatpush2.bf16.msra.mxu0 %v1120
        %1438 = vmatprep.subr.bf16.mxu0 0
        %1439 = vmatpush2.bf16.msra.mxu0 %v1119
        %1440 = vmatprep.subr.bf16.mxu0 0
        %1441 = vmatpush2.bf16.msra.mxu0 %v1118
        %1442 = vmatprep.subr.bf16.mxu0 0
        %1443 = vmatpush2.bf16.msra.mxu0 %v1117
        %1444 = vmatprep.subr.bf16.mxu0 0
        %1445 = vmatpush2.bf16.msra.mxu0 %v1116
        %1446 = vmatprep.mubr.bf16.mxu0 %v260
        %1447 = vmatmul.mubr.bf16.gmra.mxu0 %v252
        %v1448 = vpop.f32.mrf.mxu0
        %v1449 = vadd.f32 %v1408, %v1448
        %v1450 = vpop.f32.mrf.mxu0
        %v1451 = vpop.f32.mrf.mxu0
        %v1452 = vadd.f32 %v1411, %v1451
        %v1453 = vpop.f32.mrf.mxu0
        %1454 = vdwg.mxu0
        %1455 = vmatprep.subr.bf16.mxu0 0
        %1456 = vmatpush1.bf16.msra.mxu0 %v1131
        %1457 = vmatprep.subr.bf16.mxu0 0
        %1458 = vmatpush1.bf16.msra.mxu0 %v1130
        %1459 = vmatprep.subr.bf16.mxu0 0
        %1460 = vmatpush1.bf16.msra.mxu0 %v1129
        %1461 = vmatprep.subr.bf16.mxu0 0
        %1462 = vmatpush1.bf16.msra.mxu0 %v1128
        %1463 = vmatprep.subr.bf16.mxu0 0
        %1464 = vmatpush1.bf16.msra.mxu0 %v1127
        %1465 = vmatprep.subr.bf16.mxu0 0
        %1466 = vmatpush1.bf16.msra.mxu0 %v1126
        %1467 = vmatprep.subr.bf16.mxu0 0
        %1468 = vmatpush1.bf16.msra.mxu0 %v1125
        %1469 = vmatprep.subr.bf16.mxu0 0
        %1470 = vmatpush1.bf16.msra.mxu0 %v1124
        %1471 = vmatprep.subr.bf16.mxu0 0
        %1472 = vmatpush2.bf16.msra.mxu0 %v1139
        %1473 = vmatprep.subr.bf16.mxu0 0
        %1474 = vmatpush2.bf16.msra.mxu0 %v1138
        %1475 = vmatprep.subr.bf16.mxu0 0
        %1476 = vmatpush2.bf16.msra.mxu0 %v1137
        %1477 = vmatprep.subr.bf16.mxu0 0
        %1478 = vmatpush2.bf16.msra.mxu0 %v1136
        %1479 = vmatprep.subr.bf16.mxu0 0
        %1480 = vmatpush2.bf16.msra.mxu0 %v1135
        %1481 = vmatprep.subr.bf16.mxu0 0
        %1482 = vmatpush2.bf16.msra.mxu0 %v1134
        %1483 = vmatprep.subr.bf16.mxu0 0
        %1484 = vmatpush2.bf16.msra.mxu0 %v1133
        %1485 = vmatprep.subr.bf16.mxu0 0
        %1486 = vmatpush2.bf16.msra.mxu0 %v1132
        %1487 = vmatprep.mubr.bf16.mxu0 %v266
        %1488 = vmatmul.mubr.bf16.gmra.mxu0 %v262
        %v1489 = vpop.f32.mrf.mxu0
        %v1490 = vadd.f32 %v1449, %v1489
        %v1491 = vpop.f32.mrf.mxu0
        %v1492 = vpop.f32.mrf.mxu0
        %v1493 = vadd.f32 %v1452, %v1492
        %v1494 = vpop.f32.mrf.mxu0
        %1495 = vdwg.mxu0
        %1496 = vmatprep.subr.bf16.mxu0 0
        %1497 = vmatpush1.bf16.msra.mxu0 %v1147
        %1498 = vmatprep.subr.bf16.mxu0 0
        %1499 = vmatpush1.bf16.msra.mxu0 %v1146
        %1500 = vmatprep.subr.bf16.mxu0 0
        %1501 = vmatpush1.bf16.msra.mxu0 %v1145
        %1502 = vmatprep.subr.bf16.mxu0 0
        %1503 = vmatpush1.bf16.msra.mxu0 %v1144
        %1504 = vmatprep.subr.bf16.mxu0 0
        %1505 = vmatpush1.bf16.msra.mxu0 %v1143
        %1506 = vmatprep.subr.bf16.mxu0 0
        %1507 = vmatpush1.bf16.msra.mxu0 %v1142
        %1508 = vmatprep.subr.bf16.mxu0 0
        %1509 = vmatpush1.bf16.msra.mxu0 %v1141
        %1510 = vmatprep.subr.bf16.mxu0 0
        %1511 = vmatpush1.bf16.msra.mxu0 %v1140
        %1512 = vmatprep.subr.bf16.mxu0 0
        %1513 = vmatpush2.bf16.msra.mxu0 %v1155
        %1514 = vmatprep.subr.bf16.mxu0 0
        %1515 = vmatpush2.bf16.msra.mxu0 %v1154
        %1516 = vmatprep.subr.bf16.mxu0 0
        %1517 = vmatpush2.bf16.msra.mxu0 %v1153
        %1518 = vmatprep.subr.bf16.mxu0 0
        %1519 = vmatpush2.bf16.msra.mxu0 %v1152
        %1520 = vmatprep.subr.bf16.mxu0 0
        %1521 = vmatpush2.bf16.msra.mxu0 %v1151
        %1522 = vmatprep.subr.bf16.mxu0 0
        %1523 = vmatpush2.bf16.msra.mxu0 %v1150
        %1524 = vmatprep.subr.bf16.mxu0 0
        %1525 = vmatpush2.bf16.msra.mxu0 %v1149
        %1526 = vmatprep.subr.bf16.mxu0 0
        %1527 = vmatpush2.bf16.msra.mxu0 %v1148
        %1528 = vmatprep.mubr.bf16.mxu0 %v280
        %1529 = vmatmul.mubr.bf16.gmra.mxu0 %v272
        %v1530 = vpop.f32.mrf.mxu0
        %v1531 = vadd.f32 %v1490, %v1530
        %v1532 = vpop.f32.mrf.mxu0
        %v1533 = vpop.f32.mrf.mxu0
        %v1534 = vadd.f32 %v1493, %v1533
        %v1535 = vpop.f32.mrf.mxu0
        %1536 = vdwg.mxu0
        %1537 = vmatprep.subr.bf16.mxu0 0
        %1538 = vmatpush1.bf16.msra.mxu0 %v1163
        %1539 = vmatprep.subr.bf16.mxu0 0
        %1540 = vmatpush1.bf16.msra.mxu0 %v1162
        %1541 = vmatprep.subr.bf16.mxu0 0
        %1542 = vmatpush1.bf16.msra.mxu0 %v1161
        %1543 = vmatprep.subr.bf16.mxu0 0
        %1544 = vmatpush1.bf16.msra.mxu0 %v1160
        %1545 = vmatprep.subr.bf16.mxu0 0
        %1546 = vmatpush1.bf16.msra.mxu0 %v1159
        %1547 = vmatprep.subr.bf16.mxu0 0
        %1548 = vmatpush1.bf16.msra.mxu0 %v1158
        %1549 = vmatprep.subr.bf16.mxu0 0
        %1550 = vmatpush1.bf16.msra.mxu0 %v1157
        %1551 = vmatprep.subr.bf16.mxu0 0
        %1552 = vmatpush1.bf16.msra.mxu0 %v1156
        %1553 = vmatprep.subr.bf16.mxu0 0
        %1554 = vmatpush2.bf16.msra.mxu0 %v1171
        %1555 = vmatprep.subr.bf16.mxu0 0
        %1556 = vmatpush2.bf16.msra.mxu0 %v1170
        %1557 = vmatprep.subr.bf16.mxu0 0
        %1558 = vmatpush2.bf16.msra.mxu0 %v1169
        %1559 = vmatprep.subr.bf16.mxu0 0
        %1560 = vmatpush2.bf16.msra.mxu0 %v1168
        %1561 = vmatprep.subr.bf16.mxu0 0
        %1562 = vmatpush2.bf16.msra.mxu0 %v1167
        %1563 = vmatprep.subr.bf16.mxu0 0
        %1564 = vmatpush2.bf16.msra.mxu0 %v1166
        %1565 = vmatprep.subr.bf16.mxu0 0
        %1566 = vmatpush2.bf16.msra.mxu0 %v1165
        %1567 = vmatprep.subr.bf16.mxu0 0
        %1568 = vmatpush2.bf16.msra.mxu0 %v1164
        %1569 = vmatprep.mubr.bf16.mxu0 %v286
        %1570 = vmatmul.mubr.bf16.gmra.mxu0 %v282
        %v1571 = vpop.f32.mrf.mxu0
        %v1572 = vadd.f32 %v1531, %v1571
        %v1573 = vpop.f32.mrf.mxu0
        %v1574 = vpop.f32.mrf.mxu0
        %v1575 = vadd.f32 %v1534, %v1574
        %v1576 = vpop.f32.mrf.mxu0
        %1577 = vdwg.mxu0
        %1578 = vmatprep.subr.bf16.mxu0 0
        %1579 = vmatpush1.bf16.msra.mxu0 %v1179
        %1580 = vmatprep.subr.bf16.mxu0 0
        %1581 = vmatpush1.bf16.msra.mxu0 %v1178
        %1582 = vmatprep.subr.bf16.mxu0 0
        %1583 = vmatpush1.bf16.msra.mxu0 %v1177
        %1584 = vmatprep.subr.bf16.mxu0 0
        %1585 = vmatpush1.bf16.msra.mxu0 %v1176
        %1586 = vmatprep.subr.bf16.mxu0 0
        %1587 = vmatpush1.bf16.msra.mxu0 %v1175
        %1588 = vmatprep.subr.bf16.mxu0 0
        %1589 = vmatpush1.bf16.msra.mxu0 %v1174
        %1590 = vmatprep.subr.bf16.mxu0 0
        %1591 = vmatpush1.bf16.msra.mxu0 %v1173
        %1592 = vmatprep.subr.bf16.mxu0 0
        %1593 = vmatpush1.bf16.msra.mxu0 %v1172
        %1594 = vmatprep.subr.bf16.mxu0 0
        %1595 = vmatpush2.bf16.msra.mxu0 %v1187
        %1596 = vmatprep.subr.bf16.mxu0 0
        %1597 = vmatpush2.bf16.msra.mxu0 %v1186
        %1598 = vmatprep.subr.bf16.mxu0 0
        %1599 = vmatpush2.bf16.msra.mxu0 %v1185
        %1600 = vmatprep.subr.bf16.mxu0 0
        %1601 = vmatpush2.bf16.msra.mxu0 %v1184
        %1602 = vmatprep.subr.bf16.mxu0 0
        %1603 = vmatpush2.bf16.msra.mxu0 %v1183
        %1604 = vmatprep.subr.bf16.mxu0 0
        %1605 = vmatpush2.bf16.msra.mxu0 %v1182
        %1606 = vmatprep.subr.bf16.mxu0 0
        %1607 = vmatpush2.bf16.msra.mxu0 %v1181
        %1608 = vmatprep.subr.bf16.mxu0 0
        %1609 = vmatpush2.bf16.msra.mxu0 %v1180
        %1610 = vmatprep.mubr.bf16.mxu0 %v300
        %1611 = vmatmul.mubr.bf16.gmra.mxu0 %v292
        %v1612 = vpop.f32.mrf.mxu0
        %v1613 = vadd.f32 %v1572, %v1612
        %v1614 = vpop.f32.mrf.mxu0
        %v1615 = vpop.f32.mrf.mxu0
        %v1616 = vadd.f32 %v1575, %v1615
        %v1617 = vpop.f32.mrf.mxu0
        %1618 = vdwg.mxu0
        %1619 = vmatprep.subr.bf16.mxu0 0
        %1620 = vmatpush1.bf16.msra.mxu0 %v1195
        %1621 = vmatprep.subr.bf16.mxu0 0
        %1622 = vmatpush1.bf16.msra.mxu0 %v1194
        %1623 = vmatprep.subr.bf16.mxu0 0
        %1624 = vmatpush1.bf16.msra.mxu0 %v1193
        %1625 = vmatprep.subr.bf16.mxu0 0
        %1626 = vmatpush1.bf16.msra.mxu0 %v1192
        %1627 = vmatprep.subr.bf16.mxu0 0
        %1628 = vmatpush1.bf16.msra.mxu0 %v1191
        %1629 = vmatprep.subr.bf16.mxu0 0
        %1630 = vmatpush1.bf16.msra.mxu0 %v1190
        %1631 = vmatprep.subr.bf16.mxu0 0
        %1632 = vmatpush1.bf16.msra.mxu0 %v1189
        %1633 = vmatprep.subr.bf16.mxu0 0
        %1634 = vmatpush1.bf16.msra.mxu0 %v1188
        %1635 = vmatprep.subr.bf16.mxu0 0
        %1636 = vmatpush2.bf16.msra.mxu0 %v1203
        %1637 = vmatprep.subr.bf16.mxu0 0
        %1638 = vmatpush2.bf16.msra.mxu0 %v1202
        %1639 = vmatprep.subr.bf16.mxu0 0
        %1640 = vmatpush2.bf16.msra.mxu0 %v1201
        %1641 = vmatprep.subr.bf16.mxu0 0
        %1642 = vmatpush2.bf16.msra.mxu0 %v1200
        %1643 = vmatprep.subr.bf16.mxu0 0
        %1644 = vmatpush2.bf16.msra.mxu0 %v1199
        %1645 = vmatprep.subr.bf16.mxu0 0
        %1646 = vmatpush2.bf16.msra.mxu0 %v1198
        %1647 = vmatprep.subr.bf16.mxu0 0
        %1648 = vmatpush2.bf16.msra.mxu0 %v1197
        %1649 = vmatprep.subr.bf16.mxu0 0
        %1650 = vmatpush2.bf16.msra.mxu0 %v1196
        %1651 = vmatprep.mubr.bf16.mxu0 %v306
        %1652 = vmatmul.mubr.bf16.gmra.mxu0 %v302
        %v1653 = vpop.f32.mrf.mxu0
        %v1654 = vadd.f32 %v1613, %v1653
        %v1655 = vpop.f32.mrf.mxu0
        %v1656 = vpop.f32.mrf.mxu0
        %v1657 = vadd.f32 %v1616, %v1656
        %v1658 = vpop.f32.mrf.mxu0
        %1659 = vdwg.mxu0
        %v1660 = vld [vmem:[%s2] sm:$0x1]
        %v1662 = vlaneseq
        %v1663 = vshrl.u32 %v1662, 7
        %v1664 = vsub.s32 0, %v1663
        %v1665 = vrot.slane %v1660, %v1664
        %v1667 = vmul.f32 %v1654, %v1665
        %v1668 = vmul.f32 %v1657, %v1665
        %v1669 = vld [vmem:[%s3] sm:$0x1]
        %v1671 = vlaneseq
        %v1672 = vshrl.u32 %v1671, 7
        %v1673 = vsub.s32 0, %v1672
        %v1674 = vrot.slane %v1669, %v1673
        %v1676 = vadd.f32 %v1667, %v1674
        %v1677 = vadd.f32 %v1668, %v1674
        %s1678 = smul.u32 %s200, 16
        %s1679 = scalar_lea.vmem %s197, %s1678
        %1680 = vst [vmem:[%s1679] sm:$0xff] %v1676
        %1681 = vst [vmem:[%s1679 + $0x8] sm:$0x1f] %v1677
      $region41: #{_lambda_.5} parent=35 // loop_footer
        %s204 = sadd.s32 1, %s200
      $region42: #{_lambda_.5} parent=35 // loop_footer_branch
        %199 = sbr.rel target = $region38
      $region43: #{_lambda_.5} parent=35 // loop_exit
        _
      %p1682 = scmp.lt.s32.totalorder %s15, 1
      %s1683 = scalar_select %p1682, %s15, 1
      %s1684 = smul.addr %s1683, 26
      %s1685 = smul.addr %s1684, 8
      %s1686 = scalar_lea.vmem %s4, %s1685
      // Predicated region
      $region44: #{_lambda_.5} parent=35 // pred_check
        %p1687 = pneg %p122
      $region45: #{_lambda_.5} parent=35 // pred_check_branch
        %1689 = sbr.rel (%p1687) target = $region47
      $region46: #{_lambda_.5} parent=35 // pred_region
        _
      $region47: #{_lambda_.5} parent=35 // pred_fallthru
        _
    $region36: #{_lambda_.5} parent=5 // pred_fallthru
      _
    %p1690 = scmp.le.s32.totalorder 2, %s10
    // Predicated region
    $region48: #{_lambda_.5} parent=5 // pred_check
      %p1691 = pneg %p1690
    $region49: #{_lambda_.5} parent=5 // pred_check_branch
      %1693 = sbr.rel (%p1691) target = $region51
    $region50: #{_lambda_.5} parent=5 // pred_region
      %s1694 = ssub.s32 %s10, 2
      // Predicated region
      $region52: #{_lambda_.5} parent=50 // pred_check
        %p1695 = pneg %p128
      $region53: #{_lambda_.5} parent=50 // pred_check_branch
        %1697 = sbr.rel (%p1695) target = $region55
      $region54: #{_lambda_.5} parent=50 // pred_region
        %p1698 = scmp.lt.s32.totalorder %s16, 1
        %s1699 = scalar_select %p1698, %s16, 1
        %s1700 = smul.addr %s1699, 26
        %s1701 = smul.addr %s1700, 8
        %s1702 = scalar_lea.vmem %s4, %s1701
      $region55: #{_lambda_.5} parent=50 // pred_fallthru
        _
    $region51: #{_lambda_.5} parent=5 // pred_fallthru
      _
  $region6: #{_lambda_.5} parent=0 // loop_footer
    %s14 = sadd.s32 1, %s10
  $region7: #{_lambda_.5} parent=0 // loop_footer_branch
    %9 = sbr.rel target = $region3
  $region8: #{_lambda_.5} parent=0 // loop_exit
    _

</llo_original>
